<compile_context>
chip_gen: v7x
topology: tpu7x:2x2x1
jax: 0.10.0
libtpu: 0.0.40
codegen_flags: <defaults>
</compile_context>

<pallas_src>
import functools

import numpy as np
import jax
import jax.numpy as jnp
from jax.experimental import pallas as pl
from jax.experimental.pallas import tpu as pltpu


# --------------------------------------------------------------------------
# Fused conv1(3x3,pad1)+ReLU + conv2(3x3,pad1)+ReLU, one image per grid step.
# Output layout: (B, Cout2, H*W)  == PyTorch (C, H, W) flatten order.
# --------------------------------------------------------------------------
def _fused_conv_kernel(x_ref, w1_ref, b1_ref, w2_ref, b2_ref, o_ref,
                       xp1_ref, xp2_ref, *, H, W, C0, C1, C2):
    def im2col(xp):
        # xp: (H+2, W+2, C) padded activation -> (H*W, 9*C) patch matrix
        cols = [xp[dy:dy + H, dx:dx + W, :].reshape(H * W, xp.shape[-1])
                for dy in range(3) for dx in range(3)]
        return jnp.concatenate(cols, axis=1)

    # ---- conv1 + relu: single (H*W, 9*C0) x (9*C0, C1) matmul ----
    xp1_ref[...] = jnp.zeros_like(xp1_ref)                 # zero padding border
    xp1_ref[pl.ds(1, H), pl.ds(1, W), :] = x_ref[0]        # in-kernel padding
    y1 = jnp.dot(im2col(xp1_ref[...]), w1_ref[...],
                 preferred_element_type=jnp.float32)
    y1 = jnp.maximum(y1 + b1_ref[...], 0.0)                # (H*W, C1)

    # ---- conv2 + relu: conv1 activation stays in VMEM ----
    xp2_ref[...] = jnp.zeros_like(xp2_ref)
    xp2_ref[pl.ds(1, H), pl.ds(1, W), :] = y1.reshape(H, W, C1)
    y2 = jnp.dot(im2col(xp2_ref[...]), w2_ref[...],
                 preferred_element_type=jnp.float32)
    y2 = jnp.maximum(y2 + b2_ref[...], 0.0)                # (H*W, C2)

    # lane-dense store (H*W=256 on the lane axis); (C2, H*W) == (C,H,W) flatten
    o_ref[0] = y2.T.astype(o_ref.dtype)                    # (C2, H*W)


def fused_conv_relu(x_nhwc, w1m, b1, w2m, b2, *, out_dtype=jnp.bfloat16):
    B, H, W, C0 = x_nhwc.shape
    C1 = w1m.shape[1]
    C2 = w2m.shape[1]
    kernel = functools.partial(_fused_conv_kernel, H=H, W=W, C0=C0, C1=C1, C2=C2)
    return pl.pallas_call(
        kernel,
        out_shape=jax.ShapeDtypeStruct((B, C2, H * W), out_dtype),
        grid_spec=pltpu.PrefetchScalarGridSpec(
            num_scalar_prefetch=0,
            grid=(B,),
            in_specs=[
                pl.BlockSpec((1, H, W, C0), lambda b: (b, 0, 0, 0)),
                pl.BlockSpec((9 * C0, C1), lambda b: (0, 0)),
                pl.BlockSpec((1, C1), lambda b: (0, 0)),
                pl.BlockSpec((9 * C1, C2), lambda b: (0, 0)),
                pl.BlockSpec((1, C2), lambda b: (0, 0)),
            ],
            out_specs=pl.BlockSpec((1, C2, H * W), lambda b: (b, 0, 0)),
            scratch_shapes=[
                pltpu.VMEM((H + 2, W + 2, C0), jnp.float32),
                pltpu.VMEM((H + 2, W + 2, C1), jnp.float32),
            ],
        ),
        compiler_params=pltpu.CompilerParams(dimension_semantics=("parallel",)),
    )(x_nhwc, w1m, b1.reshape(1, C1), w2m, b2.reshape(1, C2))


# --------------------------------------------------------------------------
# Fused fc1 (+ReLU) + fc2.  grid = (N-blocks of fc1 columns, K tiles).
# The N axis is "parallel" (v7x megacore shares the bf16 weight stream), the
# K axis is "arbitrary" and accumulated into a VMEM scratch.  fc2 is computed
# per N-block in the finalize; partial fc2 results are summed in the wrapper.
# --------------------------------------------------------------------------
def _fc_fused_kernel(x_ref, w1_ref, b1_ref, w2_ref, o_ref, acc_ref):
    k = pl.program_id(1)

    @pl.when(k == 0)
    def _():
        acc_ref[...] = jnp.zeros_like(acc_ref)

    acc_ref[...] += jnp.dot(x_ref[...], w1_ref[...],
                            preferred_element_type=jnp.float32)

    @pl.when(k == pl.num_programs(1) - 1)
    def _():
        h = jnp.maximum(acc_ref[...] + b1_ref[...], 0.0)          # (B, Nblk)
        o_ref[0] = jnp.dot(h, w2_ref[...],
                           preferred_element_type=jnp.float32)    # (B, n_out)


def fused_fc(x, w_fc1, b_fc1, w_fc2, *, n_blocks=2, tk=2048):
    Bdim, K = x.shape
    K2, N1 = w_fc1.shape
    N1b, n_out = w_fc2.shape
    assert K == K2 and N1 == N1b and N1 % n_blocks == 0
    nblk = N1 // n_blocks
    tk = min(tk, K)
    assert K % tk == 0, "K must be divisible by the K-tile"
    return pl.pallas_call(
        _fc_fused_kernel,
        out_shape=jax.ShapeDtypeStruct((n_blocks, Bdim, n_out), jnp.float32),
        grid_spec=pltpu.PrefetchScalarGridSpec(
            num_scalar_prefetch=0,
            grid=(n_blocks, K // tk),
            in_specs=[
                pl.BlockSpec((Bdim, tk), lambda n, k: (0, k)),
                pl.BlockSpec((tk, nblk), lambda n, k: (k, n)),
                pl.BlockSpec((1, nblk), lambda n, k: (0, n)),
                pl.BlockSpec((nblk, n_out), lambda n, k: (n, 0)),
            ],
            out_specs=pl.BlockSpec((1, Bdim, n_out), lambda n, k: (n, 0, 0)),
            scratch_shapes=[pltpu.VMEM((Bdim, nblk), jnp.float32)],
        ),
        compiler_params=pltpu.CompilerParams(
            dimension_semantics=("parallel", "arbitrary")),
    )(x, w_fc1, b_fc1.reshape(1, N1), w_fc2)


# --------------------------------------------------------------------------
# Forward pass (jitted once; output_shape is static).
# --------------------------------------------------------------------------
def _forward(params, state_nchw, *, output_shape):
    B = state_nchw.shape[0]
    x = jnp.transpose(state_nchw, (0, 2, 3, 1))                    # NCHW->NHWC
    conv = fused_conv_relu(x, params["w1m"], params["b1"],
                           params["w2m"], params["b2"])            # (B,32,H*W) bf16
    x_flat = conv.reshape(B, -1)                                   # (C,H,W) flatten order
    partials = fused_fc(x_flat, params["w_fc1_bf16"], params["b_fc1"],
                        params["w_fc2"])                           # (2, B, n_out)
    q = partials.sum(axis=0) + params["b_fc2"].reshape(1, -1)
    return q.reshape((-1,) + tuple(output_shape))


class CropQNetworkPallas:
    def __init__(self, input_shape, output_shape, key):
        Cin, H, W = input_shape
        self.output_shape = tuple(output_shape)
        n_out = int(np.prod(output_shape))
        conv_out = 32 * H * W
        keys = jax.random.split(key, 8)

        def init(k, shape, fan_in):
            bound = 1.0 / float(np.sqrt(fan_in))
            return jax.random.uniform(k, shape, jnp.float32, -bound, bound)

        # conv weights in HWIO; reshaped to (9*Cin, Cout) for the im2col matmul
        self.w1 = init(keys[0], (3, 3, Cin, 16), Cin * 9)
        self.b1 = init(keys[1], (16,), Cin * 9)
        self.w2 = init(keys[2], (3, 3, 16, 32), 16 * 9)
        self.b2 = init(keys[3], (32,), 16 * 9)
        self.w_fc1 = init(keys[4], (conv_out, 512), conv_out)
        self.b_fc1 = init(keys[5], (512,), conv_out)
        self.w_fc2 = init(keys[6], (512, n_out), 512)
        self.b_fc2 = init(keys[7], (n_out,), 512)

        self.params = dict(
            w1m=self.w1.reshape(9 * Cin, 16), b1=self.b1,
            w2m=self.w2.reshape(9 * 16, 32), b2=self.b2,
            # fc1 is memory-bound: stream its weight in bf16 (accum stays f32)
            w_fc1_bf16=self.w_fc1.astype(jnp.bfloat16),
            b_fc1=self.b_fc1, w_fc2=self.w_fc2, b_fc2=self.b_fc2,
        )
        self._fwd = jax.jit(functools.partial(_forward,
                                              output_shape=self.output_shape))

    def __call__(self, state_nchw):
        return self._fwd(self.params, state_nchw)


# --------------------------------------------------------------------------
# Pure-JAX reference (mirrors the kernel's bf16 quantization of fc1 inputs).
# --------------------------------------------------------------------------
def reference_forward(net, state_nchw):
    def conv(x, w_hwio, b):
        w_oihw = jnp.transpose(w_hwio, (3, 2, 0, 1))
        y = jax.lax.conv_general_dilated(
            x, w_oihw, window_strides=(1, 1), padding=((1, 1), (1, 1)),
            dimension_numbers=("NCHW", "OIHW", "NCHW"),
            precision=jax.lax.Precision.HIGHEST)
        return jax.nn.relu(y + b.reshape(1, -1, 1, 1))

    x = conv(state_nchw, net.w1, net.b1)
    x = conv(x, net.w2, net.b2)
    x = x.reshape(x.shape[0], -1)
    x = x.astype(jnp.bfloat16).astype(jnp.float32)
    w1 = net.w_fc1.astype(jnp.bfloat16).astype(jnp.float32)
    x = jax.nn.relu(jnp.dot(x, w1, precision=jax.lax.Precision.HIGHEST)
                    + net.b_fc1)
    x = jnp.dot(x, net.w_fc2, precision=jax.lax.Precision.HIGHEST) + net.b_fc2
    return x.reshape((-1,) + net.output_shape)


if __name__ == "__main__":
    key = jax.random.PRNGKey(0)
    k_param, k_x = jax.random.split(key)

    input_shape = (4, 16, 16)          # (C, H, W)
    output_shape = (6,)
    batch = 2

    net = CropQNetworkPallas(input_shape, output_shape, k_param)
    x = jax.random.normal(k_x, (batch,) + input_shape, jnp.float32)

    out = jax.block_until_ready(net(x))
    ref = jax.block_until_ready(reference_forward(net, x))

    assert out.shape == (batch,) + output_shape, out.shape
    np.testing.assert_allclose(np.asarray(out, dtype=np.float32),
                               np.asarray(ref, dtype=np.float32),
                               rtol=2e-2, atol=2e-2)

    print("KERNEL_OK")
</pallas_src>

<mosaic_0001>
module attributes {stable_mosaic.version = 11 : i64} {
  func.func @_fused_conv_kernel(%arg0: i32, %arg1: memref<1x16x16x4xf32, #tpu.memory_space<vmem>>, %arg2: memref<36x16xf32, #tpu.memory_space<vmem>>, %arg3: memref<1x16xf32, #tpu.memory_space<vmem>>, %arg4: memref<144x32xf32, #tpu.memory_space<vmem>>, %arg5: memref<1x32xf32, #tpu.memory_space<vmem>>, %arg6: memref<1x32x256xbf16, #tpu.memory_space<vmem>>, %arg7: memref<18x18x4xf32, #tpu.memory_space<vmem>>, %arg8: memref<18x18x16xf32, #tpu.memory_space<vmem>>) attributes {dimension_semantics = [#tpu.dimension_semantics<parallel>], iteration_bounds = array<i64: 2>, scalar_prefetch = 0 : i64, scratch_operands = 2 : i64, tpu.core_type = #tpu.core_type<tc>, window_params = [{transform_indices = @transform_0, window_bounds = array<i64: 1, 16, 16, 4>}, {pipeline_mode = #tpu.pipeline_mode<synchronous>, transform_indices = @transform_1, window_bounds = array<i64: 36, 16>}, {pipeline_mode = #tpu.pipeline_mode<synchronous>, transform_indices = @transform_2, window_bounds = array<i64: 1, 16>}, {pipeline_mode = #tpu.pipeline_mode<synchronous>, transform_indices = @transform_3, window_bounds = array<i64: 144, 32>}, {pipeline_mode = #tpu.pipeline_mode<synchronous>, transform_indices = @transform_4, window_bounds = array<i64: 1, 32>}, {transform_indices = @transform_5, window_bounds = array<i64: 1, 32, 256>}]} {
    %cst = arith.constant 0.000000e+00 : f32
    %0 = vector.broadcast %cst : f32 to vector<18x18x4xf32>
    %c0 = arith.constant 0 : index
    %c0_0 = arith.constant 0 : index
    %c0_1 = arith.constant 0 : index
    %1 = vector.load %arg7[%c0, %c0_0, %c0_1] : memref<18x18x4xf32, #tpu.memory_space<vmem>>, vector<18x18x4xf32>
    tpu.vector_store %arg7[%c0, %c0_0, %c0_1], %0 {strides = array<i32>} : memref<18x18x4xf32, #tpu.memory_space<vmem>>, vector<18x18x4xf32>,
    %c0_2 = arith.constant 0 : index
    %c0_3 = arith.constant 0 : index
    %c0_4 = arith.constant 0 : index
    %c0_5 = arith.constant 0 : index
    %2 = vector.load %arg1[%c0_2, %c0_3, %c0_4, %c0_5] : memref<1x16x16x4xf32, #tpu.memory_space<vmem>>, vector<1x16x16x4xf32>
    %3 = vector.shape_cast %2 : vector<1x16x16x4xf32> to vector<16x16x4xf32>
    %c1 = arith.constant 1 : index
    %c1_6 = arith.constant 1 : index
    %c0_7 = arith.constant 0 : index
    %4 = vector.load %arg7[%c1, %c1_6, %c0_7] : memref<18x18x4xf32, #tpu.memory_space<vmem>>, vector<16x16x4xf32>
    tpu.vector_store %arg7[%c1, %c1_6, %c0_7], %3 {strides = array<i32>} : memref<18x18x4xf32, #tpu.memory_space<vmem>>, vector<16x16x4xf32>,
    %c0_8 = arith.constant 0 : index
    %c0_9 = arith.constant 0 : index
    %c0_10 = arith.constant 0 : index
    %5 = vector.load %arg7[%c0_8, %c0_9, %c0_10] : memref<18x18x4xf32, #tpu.memory_space<vmem>>, vector<18x18x4xf32>
    %6 = vector.extract_strided_slice %5 {offsets = [0, 0, 0], sizes = [16, 16, 4], strides = [1, 1, 1]} : vector<18x18x4xf32> to vector<16x16x4xf32>
    %7 = vector.shape_cast %6 : vector<16x16x4xf32> to vector<256x4xf32>
    %8 = vector.extract_strided_slice %5 {offsets = [0, 1, 0], sizes = [16, 16, 4], strides = [1, 1, 1]} : vector<18x18x4xf32> to vector<16x16x4xf32>
    %9 = vector.shape_cast %8 : vector<16x16x4xf32> to vector<256x4xf32>
    %10 = vector.extract_strided_slice %5 {offsets = [0, 2, 0], sizes = [16, 16, 4], strides = [1, 1, 1]} : vector<18x18x4xf32> to vector<16x16x4xf32>
    %11 = vector.shape_cast %10 : vector<16x16x4xf32> to vector<256x4xf32>
    %12 = vector.extract_strided_slice %5 {offsets = [1, 0, 0], sizes = [16, 16, 4], strides = [1, 1, 1]} : vector<18x18x4xf32> to vector<16x16x4xf32>
    %13 = vector.shape_cast %12 : vector<16x16x4xf32> to vector<256x4xf32>
    %14 = vector.extract_strided_slice %5 {offsets = [1, 1, 0], sizes = [16, 16, 4], strides = [1, 1, 1]} : vector<18x18x4xf32> to vector<16x16x4xf32>
    %15 = vector.shape_cast %14 : vector<16x16x4xf32> to vector<256x4xf32>
    %16 = vector.extract_strided_slice %5 {offsets = [1, 2, 0], sizes = [16, 16, 4], strides = [1, 1, 1]} : vector<18x18x4xf32> to vector<16x16x4xf32>
    %17 = vector.shape_cast %16 : vector<16x16x4xf32> to vector<256x4xf32>
    %18 = vector.extract_strided_slice %5 {offsets = [2, 0, 0], sizes = [16, 16, 4], strides = [1, 1, 1]} : vector<18x18x4xf32> to vector<16x16x4xf32>
    %19 = vector.shape_cast %18 : vector<16x16x4xf32> to vector<256x4xf32>
    %20 = vector.extract_strided_slice %5 {offsets = [2, 1, 0], sizes = [16, 16, 4], strides = [1, 1, 1]} : vector<18x18x4xf32> to vector<16x16x4xf32>
    %21 = vector.shape_cast %20 : vector<16x16x4xf32> to vector<256x4xf32>
    %22 = vector.extract_strided_slice %5 {offsets = [2, 2, 0], sizes = [16, 16, 4], strides = [1, 1, 1]} : vector<18x18x4xf32> to vector<16x16x4xf32>
    %23 = vector.shape_cast %22 : vector<16x16x4xf32> to vector<256x4xf32>
    %24 = tpu.concatenate %7, %9, %11, %13, %15, %17, %19, %21, %23 in 1 : vector<256x4xf32>, vector<256x4xf32>, vector<256x4xf32>, vector<256x4xf32>, vector<256x4xf32>, vector<256x4xf32>, vector<256x4xf32>, vector<256x4xf32>, vector<256x4xf32> -> vector<256x36xf32>
    %c0_11 = arith.constant 0 : index
    %c0_12 = arith.constant 0 : index
    %25 = vector.load %arg2[%c0_11, %c0_12] : memref<36x16xf32, #tpu.memory_space<vmem>>, vector<36x16xf32>
    %cst_13 = arith.constant dense<0.000000e+00> : vector<256x16xf32>
    %26 = tpu.matmul %24, %25, %cst_13 {dimension_numbers = #tpu.dot_dimension_numbers<[1], [0], [0], [1], [0, 0, 1, 1], [], []>} : vector<256x36xf32>, vector<36x16xf32>, vector<256x16xf32> -> vector<256x16xf32>
    %c0_14 = arith.constant 0 : index
    %c0_15 = arith.constant 0 : index
    %27 = vector.load %arg3[%c0_14, %c0_15] : memref<1x16xf32, #tpu.memory_space<vmem>>, vector<1x16xf32>
    %28 = vector.broadcast %27 : vector<1x16xf32> to vector<256x16xf32>
    %29 = arith.addf %26, %28 : vector<256x16xf32>
    %cst_16 = arith.constant 0.000000e+00 : f32
    %30 = vector.broadcast %cst_16 : f32 to vector<256x16xf32>
    %31 = arith.maximumf %29, %30 : vector<256x16xf32>
    %cst_17 = arith.constant 0.000000e+00 : f32
    %32 = vector.broadcast %cst_17 : f32 to vector<18x18x16xf32>
    %c0_18 = arith.constant 0 : index
    %c0_19 = arith.constant 0 : index
    %c0_20 = arith.constant 0 : index
    %33 = vector.load %arg8[%c0_18, %c0_19, %c0_20] : memref<18x18x16xf32, #tpu.memory_space<vmem>>, vector<18x18x16xf32>
    tpu.vector_store %arg8[%c0_18, %c0_19, %c0_20], %32 {strides = array<i32>} : memref<18x18x16xf32, #tpu.memory_space<vmem>>, vector<18x18x16xf32>,
    %34 = vector.shape_cast %31 : vector<256x16xf32> to vector<16x16x16xf32>
    %c1_21 = arith.constant 1 : index
    %c1_22 = arith.constant 1 : index
    %c0_23 = arith.constant 0 : index
    %35 = vector.load %arg8[%c1_21, %c1_22, %c0_23] : memref<18x18x16xf32, #tpu.memory_space<vmem>>, vector<16x16x16xf32>
    tpu.vector_store %arg8[%c1_21, %c1_22, %c0_23], %34 {strides = array<i32>} : memref<18x18x16xf32, #tpu.memory_space<vmem>>, vector<16x16x16xf32>,
    %c0_24 = arith.constant 0 : index
    %c0_25 = arith.constant 0 : index
    %c0_26 = arith.constant 0 : index
    %36 = vector.load %arg8[%c0_24, %c0_25, %c0_26] : memref<18x18x16xf32, #tpu.memory_space<vmem>>, vector<18x18x16xf32>
    %37 = vector.extract_strided_slice %36 {offsets = [0, 0, 0], sizes = [16, 16, 16], strides = [1, 1, 1]} : vector<18x18x16xf32> to vector<16x16x16xf32>
    %38 = vector.shape_cast %37 : vector<16x16x16xf32> to vector<256x16xf32>
    %39 = vector.extract_strided_slice %36 {offsets = [0, 1, 0], sizes = [16, 16, 16], strides = [1, 1, 1]} : vector<18x18x16xf32> to vector<16x16x16xf32>
    %40 = vector.shape_cast %39 : vector<16x16x16xf32> to vector<256x16xf32>
    %41 = vector.extract_strided_slice %36 {offsets = [0, 2, 0], sizes = [16, 16, 16], strides = [1, 1, 1]} : vector<18x18x16xf32> to vector<16x16x16xf32>
    %42 = vector.shape_cast %41 : vector<16x16x16xf32> to vector<256x16xf32>
    %43 = vector.extract_strided_slice %36 {offsets = [1, 0, 0], sizes = [16, 16, 16], strides = [1, 1, 1]} : vector<18x18x16xf32> to vector<16x16x16xf32>
    %44 = vector.shape_cast %43 : vector<16x16x16xf32> to vector<256x16xf32>
    %45 = vector.extract_strided_slice %36 {offsets = [1, 1, 0], sizes = [16, 16, 16], strides = [1, 1, 1]} : vector<18x18x16xf32> to vector<16x16x16xf32>
    %46 = vector.shape_cast %45 : vector<16x16x16xf32> to vector<256x16xf32>
    %47 = vector.extract_strided_slice %36 {offsets = [1, 2, 0], sizes = [16, 16, 16], strides = [1, 1, 1]} : vector<18x18x16xf32> to vector<16x16x16xf32>
    %48 = vector.shape_cast %47 : vector<16x16x16xf32> to vector<256x16xf32>
    %49 = vector.extract_strided_slice %36 {offsets = [2, 0, 0], sizes = [16, 16, 16], strides = [1, 1, 1]} : vector<18x18x16xf32> to vector<16x16x16xf32>
    %50 = vector.shape_cast %49 : vector<16x16x16xf32> to vector<256x16xf32>
    %51 = vector.extract_strided_slice %36 {offsets = [2, 1, 0], sizes = [16, 16, 16], strides = [1, 1, 1]} : vector<18x18x16xf32> to vector<16x16x16xf32>
    %52 = vector.shape_cast %51 : vector<16x16x16xf32> to vector<256x16xf32>
    %53 = vector.extract_strided_slice %36 {offsets = [2, 2, 0], sizes = [16, 16, 16], strides = [1, 1, 1]} : vector<18x18x16xf32> to vector<16x16x16xf32>
    %54 = vector.shape_cast %53 : vector<16x16x16xf32> to vector<256x16xf32>
    %55 = tpu.concatenate %38, %40, %42, %44, %46, %48, %50, %52, %54 in 1 : vector<256x16xf32>, vector<256x16xf32>, vector<256x16xf32>, vector<256x16xf32>, vector<256x16xf32>, vector<256x16xf32>, vector<256x16xf32>, vector<256x16xf32>, vector<256x16xf32> -> vector<256x144xf32>
    %c0_27 = arith.constant 0 : index
    %c0_28 = arith.constant 0 : index
    %56 = vector.load %arg4[%c0_27, %c0_28] : memref<144x32xf32, #tpu.memory_space<vmem>>, vector<144x32xf32>
    %cst_29 = arith.constant dense<0.000000e+00> : vector<256x32xf32>
    %57 = tpu.matmul %55, %56, %cst_29 {dimension_numbers = #tpu.dot_dimension_numbers<[1], [0], [0], [1], [0, 0, 1, 1], [], []>} : vector<256x144xf32>, vector<144x32xf32>, vector<256x32xf32> -> vector<256x32xf32>
    %c0_30 = arith.constant 0 : index
    %c0_31 = arith.constant 0 : index
    %58 = vector.load %arg5[%c0_30, %c0_31] : memref<1x32xf32, #tpu.memory_space<vmem>>, vector<1x32xf32>
    %59 = vector.broadcast %58 : vector<1x32xf32> to vector<256x32xf32>
    %60 = arith.addf %57, %59 : vector<256x32xf32>
    %cst_32 = arith.constant 0.000000e+00 : f32
    %61 = vector.broadcast %cst_32 : f32 to vector<256x32xf32>
    %62 = arith.maximumf %60, %61 : vector<256x32xf32>
    %63 = tpu.transpose %62, [1, 0] : vector<256x32xf32> -> vector<32x256xf32>
    %64 = arith.truncf %63 : vector<32x256xf32> to vector<32x256xbf16>
    %c0_33 = arith.constant 0 : index
    %c0_34 = arith.constant 0 : index
    %c0_35 = arith.constant 0 : index
    %65 = vector.load %arg6[%c0_33, %c0_34, %c0_35] : memref<1x32x256xbf16, #tpu.memory_space<vmem>>, vector<1x32x256xbf16>
    %66 = vector.shape_cast %65 : vector<1x32x256xbf16> to vector<32x256xbf16>
    %67 = vector.shape_cast %64 : vector<32x256xbf16> to vector<1x32x256xbf16>
    tpu.vector_store %arg6[%c0_33, %c0_34, %c0_35], %67 {strides = array<i32>} : memref<1x32x256xbf16, #tpu.memory_space<vmem>>, vector<1x32x256xbf16>,
    return
  }
  func.func @transform_0(%arg0: i32) -> (i32, i32, i32, i32) {
    %c0_i32 = arith.constant 0 : i32
    %c0_i32_0 = arith.constant 0 : i32
    %c0_i32_1 = arith.constant 0 : i32
    %c0_i32_2 = arith.constant 0 : i32
    return %arg0, %c0_i32, %c0_i32_0, %c0_i32_1 : i32, i32, i32, i32
  }
  func.func @transform_1(%arg0: i32) -> (i32, i32) {
    %c0_i32 = arith.constant 0 : i32
    %c0_i32_0 = arith.constant 0 : i32
    %c0_i32_1 = arith.constant 0 : i32
    return %c0_i32, %c0_i32_0 : i32, i32
  }
  func.func @transform_2(%arg0: i32) -> (i32, i32) {
    %c0_i32 = arith.constant 0 : i32
    %c0_i32_0 = arith.constant 0 : i32
    %c0_i32_1 = arith.constant 0 : i32
    return %c0_i32, %c0_i32_0 : i32, i32
  }
  func.func @transform_3(%arg0: i32) -> (i32, i32) {
    %c0_i32 = arith.constant 0 : i32
    %c0_i32_0 = arith.constant 0 : i32
    %c0_i32_1 = arith.constant 0 : i32
    return %c0_i32, %c0_i32_0 : i32, i32
  }
  func.func @transform_4(%arg0: i32) -> (i32, i32) {
    %c0_i32 = arith.constant 0 : i32
    %c0_i32_0 = arith.constant 0 : i32
    %c0_i32_1 = arith.constant 0 : i32
    return %c0_i32, %c0_i32_0 : i32, i32
  }
  func.func @transform_5(%arg0: i32) -> (i32, i32, i32) {
    %c0_i32 = arith.constant 0 : i32
    %c0_i32_0 = arith.constant 0 : i32
    %c0_i32_1 = arith.constant 0 : i32
    return %arg0, %c0_i32, %c0_i32_0 : i32, i32, i32
  }
}

module attributes {stable_mosaic.version = 11 : i64} {
  func.func @_fc_fused_kernel(%arg0: i32, %arg1: i32, %arg2: memref<2x2048xbf16, #tpu.memory_space<vmem>>, %arg3: memref<2048x256xbf16, #tpu.memory_space<vmem>>, %arg4: memref<1x256xf32, #tpu.memory_space<vmem>>, %arg5: memref<256x6xf32, #tpu.memory_space<vmem>>, %arg6: memref<1x2x6xf32, #tpu.memory_space<vmem>>, %arg7: memref<2x256xf32, #tpu.memory_space<vmem>>) attributes {dimension_semantics = [#tpu.dimension_semantics<parallel>, #tpu.dimension_semantics<arbitrary>], iteration_bounds = array<i64: 2, 4>, scalar_prefetch = 0 : i64, scratch_operands = 1 : i64, tpu.core_type = #tpu.core_type<tc>, window_params = [{transform_indices = @transform_0, window_bounds = array<i64: 2, 2048>}, {transform_indices = @transform_1, window_bounds = array<i64: 2048, 256>}, {transform_indices = @transform_2, window_bounds = array<i64: 1, 256>}, {transform_indices = @transform_3, window_bounds = array<i64: 256, 6>}, {transform_indices = @transform_4, window_bounds = array<i64: 1, 2, 6>}]} {
    %c0_i32 = arith.constant 0 : i32
    %0 = arith.cmpi eq, %arg1, %c0_i32 : i32
    %1 = arith.extui %0 : i1 to i32
    %c0_i32_0 = arith.constant 0 : i32
    %2 = arith.cmpi ne, %1, %c0_i32_0 : i32
    scf.if %2 {
      %cst_9 = arith.constant 0.000000e+00 : f32
      %12 = vector.broadcast %cst_9 : f32 to vector<2x256xf32>
      %c0_10 = arith.constant 0 : index
      %c0_11 = arith.constant 0 : index
      %13 = vector.load %arg7[%c0_10, %c0_11] : memref<2x256xf32, #tpu.memory_space<vmem>>, vector<2x256xf32>
      tpu.vector_store %arg7[%c0_10, %c0_11], %12 {strides = array<i32>} : memref<2x256xf32, #tpu.memory_space<vmem>>, vector<2x256xf32>,
    } else {
    }
    %c0 = arith.constant 0 : index
    %c0_1 = arith.constant 0 : index
    %3 = vector.load %arg7[%c0, %c0_1] : memref<2x256xf32, #tpu.memory_space<vmem>>, vector<2x256xf32>
    %c0_2 = arith.constant 0 : index
    %c0_3 = arith.constant 0 : index
    %4 = vector.load %arg2[%c0_2, %c0_3] : memref<2x2048xbf16, #tpu.memory_space<vmem>>, vector<2x2048xbf16>
    %c0_4 = arith.constant 0 : index
    %c0_5 = arith.constant 0 : index
    %5 = vector.load %arg3[%c0_4, %c0_5] : memref<2048x256xbf16, #tpu.memory_space<vmem>>, vector<2048x256xbf16>
    %cst = arith.constant dense<0.000000e+00> : vector<2x256xf32>
    %6 = tpu.matmul %4, %5, %cst {dimension_numbers = #tpu.dot_dimension_numbers<[1], [0], [0], [1], [0, 0, 1, 1], [], []>} : vector<2x2048xbf16>, vector<2048x256xbf16>, vector<2x256xf32> -> vector<2x256xf32>
    %7 = arith.addf %3, %6 : vector<2x256xf32>
    %c0_6 = arith.constant 0 : index
    %c0_7 = arith.constant 0 : index
    %8 = vector.load %arg7[%c0_6, %c0_7] : memref<2x256xf32, #tpu.memory_space<vmem>>, vector<2x256xf32>
    tpu.vector_store %arg7[%c0_6, %c0_7], %7 {strides = array<i32>} : memref<2x256xf32, #tpu.memory_space<vmem>>, vector<2x256xf32>,
    %c3_i32 = arith.constant 3 : i32
    %9 = arith.cmpi eq, %arg1, %c3_i32 : i32
    %10 = arith.extui %9 : i1 to i32
    %c0_i32_8 = arith.constant 0 : i32
    %11 = arith.cmpi ne, %10, %c0_i32_8 : i32
    scf.if %11 {
      %c0_9 = arith.constant 0 : index
      %c0_10 = arith.constant 0 : index
      %12 = vector.load %arg7[%c0_9, %c0_10] : memref<2x256xf32, #tpu.memory_space<vmem>>, vector<2x256xf32>
      %c0_11 = arith.constant 0 : index
      %c0_12 = arith.constant 0 : index
      %13 = vector.load %arg4[%c0_11, %c0_12] : memref<1x256xf32, #tpu.memory_space<vmem>>, vector<1x256xf32>
      %14 = vector.broadcast %13 : vector<1x256xf32> to vector<2x256xf32>
      %15 = arith.addf %12, %14 : vector<2x256xf32>
      %cst_13 = arith.constant 0.000000e+00 : f32
      %16 = vector.broadcast %cst_13 : f32 to vector<2x256xf32>
      %17 = arith.maximumf %15, %16 : vector<2x256xf32>
      %c0_14 = arith.constant 0 : index
      %c0_15 = arith.constant 0 : index
      %18 = vector.load %arg5[%c0_14, %c0_15] : memref<256x6xf32, #tpu.memory_space<vmem>>, vector<256x6xf32>
      %cst_16 = arith.constant dense<0.000000e+00> : vector<2x6xf32>
      %19 = tpu.matmul %17, %18, %cst_16 {dimension_numbers = #tpu.dot_dimension_numbers<[1], [0], [0], [1], [0, 0, 1, 1], [], []>} : vector<2x256xf32>, vector<256x6xf32>, vector<2x6xf32> -> vector<2x6xf32>
      %c0_17 = arith.constant 0 : index
      %c0_18 = arith.constant 0 : index
      %c0_19 = arith.constant 0 : index
      %20 = vector.load %arg6[%c0_17, %c0_18, %c0_19] : memref<1x2x6xf32, #tpu.memory_space<vmem>>, vector<1x2x6xf32>
      %21 = vector.shape_cast %20 : vector<1x2x6xf32> to vector<2x6xf32>
      %22 = vector.shape_cast %19 : vector<2x6xf32> to vector<1x2x6xf32>
      tpu.vector_store %arg6[%c0_17, %c0_18, %c0_19], %22 {strides = array<i32>} : memref<1x2x6xf32, #tpu.memory_space<vmem>>, vector<1x2x6xf32>,
    } else {
    }
    return
  }
  func.func @transform_0(%arg0: i32, %arg1: i32) -> (i32, i32) {
    %c0_i32 = arith.constant 0 : i32
    %c0_i32_0 = arith.constant 0 : i32
    return %c0_i32, %arg1 : i32, i32
  }
  func.func @transform_1(%arg0: i32, %arg1: i32) -> (i32, i32) {
    %c0_i32 = arith.constant 0 : i32
    return %arg1, %arg0 : i32, i32
  }
  func.func @transform_2(%arg0: i32, %arg1: i32) -> (i32, i32) {
    %c0_i32 = arith.constant 0 : i32
    %c0_i32_0 = arith.constant 0 : i32
    return %c0_i32, %arg0 : i32, i32
  }
  func.func @transform_3(%arg0: i32, %arg1: i32) -> (i32, i32) {
    %c0_i32 = arith.constant 0 : i32
    %c0_i32_0 = arith.constant 0 : i32
    return %arg0, %c0_i32 : i32, i32
  }
  func.func @transform_4(%arg0: i32, %arg1: i32) -> (i32, i32, i32) {
    %c0_i32 = arith.constant 0 : i32
    %c0_i32_0 = arith.constant 0 : i32
    %c0_i32_1 = arith.constant 0 : i32
    return %arg0, %c0_i32, %c0_i32_0 : i32, i32, i32
  }
}

</mosaic_0001>

<llo_original>
// kernel: _forward.3
$region0: #{_forward.3}
  #allocation0 [shape = 'u32[]', space=smem, size = 0x4, offset = 0x4, fixed_abs, tag = 'smem constant byte address 0x4 - core index']
  #allocation1 [shape = 'u32[144,128]{1,0:T(1,128)}', space=vmem, size = 0x12000, scoped, tag = 'internal scratch']
  #allocation2 [shape = 'f32[2,256]{1,0:T(2,128)}', space=vmem, size = 0x800, scoped, tag = 'scratch operand']
  %s0 = inlined_call_operand.vmem [shape: bf16[2,8192], index: 0, kind: input, shape index: {}]
  %s1 = inlined_call_operand.hbm [shape: bf16[8192,512], index: 1, kind: input, shape index: {}]
  %s2 = inlined_call_operand.hbm [shape: f32[1,512], index: 2, kind: input, shape index: {}]
  %s3 = inlined_call_operand.vmem [shape: f32[512,6], index: 3, kind: input, shape index: {}]
  %s4 = inlined_call_operand.vmem [shape: f32[2,2,6], index: 4, kind: output, shape index: {}]
  %s5 = sld [smem:[#allocation0]]
  $region65: #{_forward.3} parent=0
    _
  %s7 = ssub.s32 1, %s5
  %s8 = scalar_select 0, %s7, %s5
  $region1: #{_forward.3} parent=0
    #allocation3 [shape = 'u8[2097152]{0}', space=vmem, size = 0x200000, scoped, tag = 'input window, operand 1']
    #allocation4 [shape = 's32[2]{0}', space=sflag, size = 0x8, scoped, tag = 'scoped memory for _forward.3']
    #allocation5 [shape = 'u8[2048]{0}', space=vmem, size = 0x800, scoped, tag = 'input window, operand 2']
    #allocation6 [shape = 's32[2]{0}', space=sflag, size = 0x8, scoped, tag = 'scoped memory for _forward.3']
    %9 = vsyncpa [#allocation4], 0
    %s10 = scalar_lea.sflag [#allocation4], 1
    %11 = vsyncpa %s10, 0
    %12 = vsyncpa [#allocation6], 0
    %s13 = scalar_lea.sflag [#allocation6], 1
    %14 = vsyncpa %s13, 0
    loop: start=0, step=1, limit=10
    $region2: #{_forward.3} parent=1 // loop_pre_header
      _
    $region3: #{_forward.3} parent=1 // loop_header
      %s16 = sphi 0, %s20
      %p17 = scmp.ge.s32.totalorder %s16, 10
      %s23 = sphi 0, %s35
      %s24 = sphi 0, %s31
      %s25 = sphi 0, %s23
      %s26 = sphi 0, %s24
      %s27 = sphi 0, %s25
      %s28 = sphi 0, %s26
      %s38 = sphi 0, %s40
      %s41 = sphi 0, %s38
      %s42 = sphi 0, %s41
      %s58 = sphi 0, %s42
      %s66 = sphi 0, %s68
      %s69 = sphi 0, %s66
      %s70 = sphi 0, %s69
      %s86 = sphi 0, %s70
      %s92 = sphi 0, %s94
      %s95 = sphi 0, %s92
      %s96 = sphi 0, %s95
      %s112 = sphi 0, %s96
      %s118 = sphi 0, %s120
      %s121 = sphi 0, %s118
      %s122 = sphi 0, %s121
      %s138 = sphi 0, %s122
      %s144 = sphi 0, %s146
      %s147 = sphi 0, %s144
      %s148 = sphi 0, %s147
      %s164 = sphi 0, %s148
    $region4: #{_forward.3} parent=1 // loop_header_branch
      %19 = sbr.rel (%p17) target = $region8
    $region5: #{_forward.3} parent=1 // loop_body
      %s21 = ssub.s32 %s16, 1
      %s22 = ssub.s32 %s16, 2
      %s29 = sadd.s32 1, %s24
      %p30 = scmp.ge.s32.totalorder %s29, 4
      %s31 = scalar_select %p30, 0, %s29
      %s32 = sadd.s32 1, %s23
      %s33 = scalar_select %p30, %s32, %s23
      %p34 = scmp.ge.s32.totalorder %s33, 2
      %s35 = scalar_select %p34, 0, %s33
      %s36 = ssub.s32 %s24, %s31
      %p37 = scmp.eq.s32.totalorder %s36, 0
      %s39 = sadd.s32 %s38, 1
      %s40 = scalar_select %p37, %s38, %s39
      %p43 = pneg %p37
      %p44 = scmp.eq.s32.totalorder %s16, 7
      %p45 = por %p43, %p44
      %p46 = scmp.ne.s32.totalorder %s38, %s41
      %p47 = scmp.eq.s32.totalorder %s16, 0
      %p48 = por %p46, %p47
      %p49 = scmp.ne.s32.totalorder %s38, %s41
      %p50 = scmp.eq.s32.totalorder %s21, 7
      %p51 = por %p49, %p50
      %p52 = scmp.ne.s32.totalorder %s41, %s42
      %p53 = scmp.eq.s32.totalorder %s21, 0
      %p54 = por %p52, %p53
      %p55 = scmp.ne.s32.totalorder %s41, %s42
      %p56 = scmp.eq.s32.totalorder %s22, 7
      %p57 = por %p55, %p56
      %p59 = scmp.ne.s32.totalorder %s42, %s58
      %p60 = scmp.eq.s32.totalorder %s22, 0
      %p61 = por %p59, %p60
      %s62 = ssub.s32 %s24, %s31
      %s63 = ssub.s32 %s23, %s35
      %s64 = sor.u32 %s62, %s63
      %p65 = scmp.eq.s32.totalorder %s64, 0
      %s67 = sadd.s32 %s66, 1
      %s68 = scalar_select %p65, %s66, %s67
      %p71 = pneg %p65
      %p72 = scmp.eq.s32.totalorder %s16, 7
      %p73 = por %p71, %p72
      %p74 = scmp.ne.s32.totalorder %s66, %s69
      %p75 = scmp.eq.s32.totalorder %s16, 0
      %p76 = por %p74, %p75
      %p77 = scmp.ne.s32.totalorder %s66, %s69
      %p78 = scmp.eq.s32.totalorder %s21, 7
      %p79 = por %p77, %p78
      %p80 = scmp.ne.s32.totalorder %s69, %s70
      %p81 = scmp.eq.s32.totalorder %s21, 0
      %p82 = por %p80, %p81
      %p83 = scmp.ne.s32.totalorder %s69, %s70
      %p84 = scmp.eq.s32.totalorder %s22, 7
      %p85 = por %p83, %p84
      %p87 = scmp.ne.s32.totalorder %s70, %s86
      %p88 = scmp.eq.s32.totalorder %s22, 0
      %p89 = por %p87, %p88
      %s90 = ssub.s32 %s23, %s35
      %p91 = scmp.eq.s32.totalorder %s90, 0
      %s93 = sadd.s32 %s92, 1
      %s94 = scalar_select %p91, %s92, %s93
      %p97 = pneg %p91
      %p98 = scmp.eq.s32.totalorder %s16, 7
      %p99 = por %p97, %p98
      %p100 = scmp.ne.s32.totalorder %s92, %s95
      %p101 = scmp.eq.s32.totalorder %s16, 0
      %p102 = por %p100, %p101
      %p103 = scmp.ne.s32.totalorder %s92, %s95
      %p104 = scmp.eq.s32.totalorder %s21, 7
      %p105 = por %p103, %p104
      %p106 = scmp.ne.s32.totalorder %s95, %s96
      %p107 = scmp.eq.s32.totalorder %s21, 0
      %p108 = por %p106, %p107
      %p109 = scmp.ne.s32.totalorder %s95, %s96
      %p110 = scmp.eq.s32.totalorder %s22, 7
      %p111 = por %p109, %p110
      %p113 = scmp.ne.s32.totalorder %s96, %s112
      %p114 = scmp.eq.s32.totalorder %s22, 0
      %p115 = por %p113, %p114
      %s116 = ssub.s32 %s23, %s35
      %p117 = scmp.eq.s32.totalorder %s116, 0
      %s119 = sadd.s32 %s118, 1
      %s120 = scalar_select %p117, %s118, %s119
      %p123 = pneg %p117
      %p124 = scmp.eq.s32.totalorder %s16, 7
      %p125 = por %p123, %p124
      %p126 = scmp.ne.s32.totalorder %s118, %s121
      %p127 = scmp.eq.s32.totalorder %s16, 0
      %p128 = por %p126, %p127
      %p129 = scmp.ne.s32.totalorder %s118, %s121
      %p130 = scmp.eq.s32.totalorder %s21, 7
      %p131 = por %p129, %p130
      %p132 = scmp.ne.s32.totalorder %s121, %s122
      %p133 = scmp.eq.s32.totalorder %s21, 0
      %p134 = por %p132, %p133
      %p135 = scmp.ne.s32.totalorder %s121, %s122
      %p136 = scmp.eq.s32.totalorder %s22, 7
      %p137 = por %p135, %p136
      %p139 = scmp.ne.s32.totalorder %s122, %s138
      %p140 = scmp.eq.s32.totalorder %s22, 0
      %p141 = por %p139, %p140
      %s142 = ssub.s32 %s23, %s35
      %p143 = scmp.eq.s32.totalorder %s142, 0
      %s145 = sadd.s32 %s144, 1
      %s146 = scalar_select %p143, %s144, %s145
      %p149 = pneg %p143
      %p150 = scmp.eq.s32.totalorder %s16, 7
      %p151 = por %p149, %p150
      %p152 = scmp.ne.s32.totalorder %s144, %s147
      %p153 = scmp.eq.s32.totalorder %s16, 0
      %p154 = por %p152, %p153
      %p155 = scmp.ne.s32.totalorder %s144, %s147
      %p156 = scmp.eq.s32.totalorder %s21, 7
      %p157 = por %p155, %p156
      %p158 = scmp.ne.s32.totalorder %s147, %s148
      %p159 = scmp.eq.s32.totalorder %s21, 0
      %p160 = por %p158, %p159
      %p161 = scmp.ne.s32.totalorder %s147, %s148
      %p162 = scmp.eq.s32.totalorder %s22, 7
      %p163 = por %p161, %p162
      %p165 = scmp.ne.s32.totalorder %s148, %s164
      %p166 = scmp.eq.s32.totalorder %s22, 0
      %p167 = por %p165, %p166
      %p168 = scmp.le.s32.totalorder 1, %s16
      %p169 = scmp.lt.s32.totalorder %s16, 9
      %p170 = pnand %p168, %p169
      %p171 = pneg %p170
      // Predicated region
      $region9: #{_forward.3} parent=5 // pred_check
        _
      $region10: #{_forward.3} parent=5 // pred_check_branch
        %173 = sbr.rel (%p170) target = $region12
      $region11: #{_forward.3} parent=5 // pred_region
        %s174 = ssub.s32 %s16, 1
      $region12: #{_forward.3} parent=5 // pred_fallthru
        _
      %p175 = scmp.lt.s32.totalorder %s16, 8
      // Predicated region
      $region13: #{_forward.3} parent=5 // pred_check
        %p176 = pneg %p175
      $region14: #{_forward.3} parent=5 // pred_check_branch
        %178 = sbr.rel (%p176) target = $region16
      $region15: #{_forward.3} parent=5 // pred_region
        // Predicated region
        $region17: #{_forward.3} parent=15 // pred_check
          %p179 = pneg %p48
        $region18: #{_forward.3} parent=15 // pred_check_branch
          %181 = sbr.rel (%p179) target = $region20
        $region19: #{_forward.3} parent=15 // pred_region
          %s182 = smul.u32 16, %s24
          %p183 = scmp.lt.s32.totalorder %s182, 63
          %s184 = scalar_select %p183, %s182, 63
          %s185 = scalar_lea.vmem %s0, %s184
          %s186 = smul.u32 16, %s24
        $region20: #{_forward.3} parent=15 // pred_fallthru
          _
        // Predicated region
        $region21: #{_forward.3} parent=15 // pred_check
          %p187 = pneg %p76
        $region22: #{_forward.3} parent=15 // pred_check_branch
          %189 = sbr.rel (%p187) target = $region24
        $region23: #{_forward.3} parent=15 // pred_region
          %s190 = sand.u32 %s66, 1
          %s191 = scalar_lea.sflag [#allocation4], %s190
          %s192 = sand.u32 %s66, 1
          %s193 = smul.addr %s192, 2048
          %s194 = scalar_lea.vmem [#allocation3], %s193
          %s195 = smul.u32 256, %s24
          %s196 = smul.u32 2, %s23
          %s198 = ssub.s32 32768, 32768
          %199 = vsyncadd %s191, %s198
          %s200 = smul.addr %s195, 4
          %s201 = sadd.s32 %s196, %s200
          %s202 = smul.addr %s201, 64
          %s203 = scalar_lea.hbm %s1, %s202
          %s204 = sshll.u32 %s194, 4
          %s205 = int_to_ptr.vmem [resolvable:$true] %s204
          %210 = dma.hbm_to_vmem [thread:$0]  %s203, 32768, %s205, %s191, 256, 128, 8
        $region24: #{_forward.3} parent=15 // pred_fallthru
          _
        // Predicated region
        $region25: #{_forward.3} parent=15 // pred_check
          %p211 = pneg %p102
        $region26: #{_forward.3} parent=15 // pred_check_branch
          %213 = sbr.rel (%p211) target = $region28
        $region27: #{_forward.3} parent=15 // pred_region
          %s214 = sand.u32 %s92, 1
          %s215 = scalar_lea.sflag [#allocation6], %s214
          %s216 = sand.u32 %s92, 1
          %s217 = smul.addr %s216, 2
          %s218 = scalar_lea.vmem [#allocation5], %s217
          %s219 = smul.u32 2, %s23
          %s221 = ssub.s32 32, 32
          %222 = vsyncadd %s215, %s221
          %s223 = smul.addr %s219, 16
          %s224 = scalar_lea.hbm %s2, %s223
          %s226 = sshll.u32 %s218, 4
          %s227 = int_to_ptr.vmem [resolvable:$true] %s226
          %229 = dma.hbm_to_vmem [thread:$0]  %s224, 32, %s227, %s215
        $region28: #{_forward.3} parent=15 // pred_fallthru
          _
        // Predicated region
        $region29: #{_forward.3} parent=15 // pred_check
          %p230 = pneg %p128
        $region30: #{_forward.3} parent=15 // pred_check_branch
          %232 = sbr.rel (%p230) target = $region32
        $region31: #{_forward.3} parent=15 // pred_region
          %s233 = smul.u32 32, %s23
          %p234 = scmp.lt.s32.totalorder %s233, 63
          %s235 = scalar_select %p234, %s233, 63
          %s236 = smul.addr %s235, 8
          %s237 = scalar_lea.vmem %s3, %s236
          %s238 = smul.u32 32, %s23
        $region32: #{_forward.3} parent=15 // pred_fallthru
          _
      $region16: #{_forward.3} parent=5 // pred_fallthru
        _
      %p239 = scmp.le.s32.totalorder 1, %s16
      %p240 = scmp.lt.s32.totalorder %s16, 9
      %p241 = pnand %p239, %p240
      %p242 = pneg %p241
      // Predicated region
      $region33: #{_forward.3} parent=5 // pred_check
        _
      $region34: #{_forward.3} parent=5 // pred_check_branch
        %244 = sbr.rel (%p241) target = $region36
      $region35: #{_forward.3} parent=5 // pred_region
        %s245 = ssub.s32 %s16, 1
        %s246 = sand.u32 %s69, 1
        %s247 = scalar_lea.sflag [#allocation4], %s246
        %s248 = sand.u32 %s69, 1
        %s249 = smul.addr %s248, 2048
        %s250 = scalar_lea.vmem [#allocation3], %s249
        // Predicated region
        $region37: #{_forward.3} parent=35 // pred_check
          %p251 = pneg %p82
        $region38: #{_forward.3} parent=35 // pred_check_branch
          %253 = sbr.rel (%p251) target = $region40
        $region39: #{_forward.3} parent=35 // pred_region
          %254 = dma.done %s247, 32768
        $region40: #{_forward.3} parent=35 // pred_fallthru
          _
        %s255 = sand.u32 %s95, 1
        %s256 = scalar_lea.sflag [#allocation6], %s255
        %s257 = sand.u32 %s95, 1
        %s258 = smul.addr %s257, 2
        %s259 = scalar_lea.vmem [#allocation5], %s258
        // Predicated region
        $region41: #{_forward.3} parent=35 // pred_check
          %p260 = pneg %p108
        $region42: #{_forward.3} parent=35 // pred_check_branch
          %262 = sbr.rel (%p260) target = $region44
        $region43: #{_forward.3} parent=35 // pred_region
          %263 = dma.done %s256, 32
        $region44: #{_forward.3} parent=35 // pred_fallthru
          _
        %s264 = smul.u32 16, %s26
        %p265 = scmp.lt.s32.totalorder %s264, 63
        %s266 = scalar_select %p265, %s264, 63
        %s267 = scalar_lea.vmem %s0, %s266
        %p268 = pneg %p54
        %p269 = pneg %p51
        %s270 = sand.u32 %s69, 1
        %s271 = scalar_lea.sflag [#allocation4], %s270
        %s272 = sand.u32 %s69, 1
        %s273 = smul.addr %s272, 2048
        %s274 = scalar_lea.vmem [#allocation3], %s273
        %p275 = pneg %p82
        %p276 = pneg %p79
        %s277 = sand.u32 %s95, 1
        %s278 = scalar_lea.sflag [#allocation6], %s277
        %s279 = sand.u32 %s95, 1
        %s280 = smul.addr %s279, 2
        %s281 = scalar_lea.vmem [#allocation5], %s280
        %p282 = pneg %p108
        %p283 = pneg %p105
        %s284 = smul.u32 32, %s25
        %p285 = scmp.lt.s32.totalorder %s284, 63
        %s286 = scalar_select %p285, %s284, 63
        %s287 = smul.addr %s286, 8
        %s288 = scalar_lea.vmem %s3, %s287
        %p289 = pneg %p134
        %p290 = pneg %p131
        %p291 = pneg %p160
        %p292 = pneg %p157
        %p293 = scmp.lt.s32.totalorder %s25, 1
        %s294 = scalar_select %p293, %s25, 1
        %s295 = smul.addr %s294, 2
        %s296 = scalar_lea.vmem %s4, %s295
        %s297 = smul.u32 16, %s26
        %p298 = scmp.lt.s32.totalorder %s297, 63
        %s299 = scalar_select %p298, %s297, 63
        %s300 = scalar_lea.vmem %s0, %s299
        %s301 = smul.u32 16, %s26
        %s302 = smul.u32 256, %s26
        %s303 = smul.u32 2, %s25
        %s304 = smul.u32 2, %s25
        %s305 = smul.u32 32, %s25
        %p306 = scmp.lt.s32.totalorder %s305, 63
        %s307 = scalar_select %p306, %s305, 63
        %s308 = smul.addr %s307, 8
        %s309 = scalar_lea.vmem %s3, %s308
        %s310 = smul.u32 32, %s25
        %p311 = scmp.lt.s32.totalorder %s25, 1
        %s312 = scalar_select %p311, %s25, 1
        %s313 = smul.addr %s312, 2
        %s314 = scalar_lea.vmem %s4, %s313
        %p315 = scmp.eq.s32.totalorder %s26, 0
        // Predicated region
        $region45: #{_forward.3} parent=35 // pred_check
          %p316 = pneg %p315
        $region46: #{_forward.3} parent=35 // pred_check_branch
          %318 = sbr.rel (%p316) target = $region48
        $region47: #{_forward.3} parent=35 // pred_region
          %319 = vst [vmem:[#allocation2] sm:$0xf] 0.0
        $region48: #{_forward.3} parent=35 // pred_fallthru
          _
        %v320 = vld [vmem:[#allocation2] sm:$0xf]
        %v321 = vld [vmem:[%s300] sm:$0xff]
        %v322 = vld [vmem:[%s300 + $0x8] sm:$0xff]
        %v323 = vld [vmem:[%s250] sm:$0xff]
        %v324 = vld [vmem:[%s250 + $0x8] sm:$0xff]
        %v325 = vld [vmem:[%s250 + $0x10] sm:$0xff]
        %v326 = vld [vmem:[%s250 + $0x18] sm:$0xff]
        %v327 = vld [vmem:[%s250 + $0x20] sm:$0xff]
        %v328 = vld [vmem:[%s250 + $0x28] sm:$0xff]
        %v329 = vld [vmem:[%s250 + $0x30] sm:$0xff]
        %v330 = vld [vmem:[%s250 + $0x38] sm:$0xff]
        %v331 = vld [vmem:[%s250 + $0x40] sm:$0xff]
        %v332 = vld [vmem:[%s250 + $0x48] sm:$0xff]
        %v333 = vld [vmem:[%s250 + $0x50] sm:$0xff]
        %v334 = vld [vmem:[%s250 + $0x58] sm:$0xff]
        %v335 = vld [vmem:[%s250 + $0x60] sm:$0xff]
        %v336 = vld [vmem:[%s250 + $0x68] sm:$0xff]
        %v337 = vld [vmem:[%s250 + $0x70] sm:$0xff]
        %v338 = vld [vmem:[%s250 + $0x78] sm:$0xff]
        %v339 = vld [vmem:[%s250 + $0x80] sm:$0xff]
        %v340 = vld [vmem:[%s250 + $0x88] sm:$0xff]
        %v341 = vld [vmem:[%s250 + $0x90] sm:$0xff]
        %v342 = vld [vmem:[%s250 + $0x98] sm:$0xff]
        %v343 = vld [vmem:[%s250 + $0xa0] sm:$0xff]
        %v344 = vld [vmem:[%s250 + $0xa8] sm:$0xff]
        %v345 = vld [vmem:[%s250 + $0xb0] sm:$0xff]
        %v346 = vld [vmem:[%s250 + $0xb8] sm:$0xff]
        %v347 = vld [vmem:[%s250 + $0xc0] sm:$0xff]
        %v348 = vld [vmem:[%s250 + $0xc8] sm:$0xff]
        %v349 = vld [vmem:[%s250 + $0xd0] sm:$0xff]
        %v350 = vld [vmem:[%s250 + $0xd8] sm:$0xff]
        %v351 = vld [vmem:[%s250 + $0xe0] sm:$0xff]
        %v352 = vld [vmem:[%s250 + $0xe8] sm:$0xff]
        %v353 = vld [vmem:[%s250 + $0xf0] sm:$0xff]
        %v354 = vld [vmem:[%s250 + $0xf8] sm:$0xff]
        %v355 = vld [vmem:[%s250 + $0x100] sm:$0xff]
        %v356 = vld [vmem:[%s250 + $0x108] sm:$0xff]
        %v357 = vld [vmem:[%s250 + $0x110] sm:$0xff]
        %v358 = vld [vmem:[%s250 + $0x118] sm:$0xff]
        %v359 = vld [vmem:[%s250 + $0x120] sm:$0xff]
        %v360 = vld [vmem:[%s250 + $0x128] sm:$0xff]
        %v361 = vld [vmem:[%s250 + $0x130] sm:$0xff]
        %v362 = vld [vmem:[%s250 + $0x138] sm:$0xff]
        %v363 = vld [vmem:[%s250 + $0x140] sm:$0xff]
        %v364 = vld [vmem:[%s250 + $0x148] sm:$0xff]
        %v365 = vld [vmem:[%s250 + $0x150] sm:$0xff]
        %v366 = vld [vmem:[%s250 + $0x158] sm:$0xff]
        %v367 = vld [vmem:[%s250 + $0x160] sm:$0xff]
        %v368 = vld [vmem:[%s250 + $0x168] sm:$0xff]
        %v369 = vld [vmem:[%s250 + $0x170] sm:$0xff]
        %v370 = vld [vmem:[%s250 + $0x178] sm:$0xff]
        %v371 = vld [vmem:[%s250 + $0x180] sm:$0xff]
        %v372 = vld [vmem:[%s250 + $0x188] sm:$0xff]
        %v373 = vld [vmem:[%s250 + $0x190] sm:$0xff]
        %v374 = vld [vmem:[%s250 + $0x198] sm:$0xff]
        %v375 = vld [vmem:[%s250 + $0x1a0] sm:$0xff]
        %v376 = vld [vmem:[%s250 + $0x1a8] sm:$0xff]
        %v377 = vld [vmem:[%s250 + $0x1b0] sm:$0xff]
        %v378 = vld [vmem:[%s250 + $0x1b8] sm:$0xff]
        %v379 = vld [vmem:[%s250 + $0x1c0] sm:$0xff]
        %v380 = vld [vmem:[%s250 + $0x1c8] sm:$0xff]
        %v381 = vld [vmem:[%s250 + $0x1d0] sm:$0xff]
        %v382 = vld [vmem:[%s250 + $0x1d8] sm:$0xff]
        %v383 = vld [vmem:[%s250 + $0x1e0] sm:$0xff]
        %v384 = vld [vmem:[%s250 + $0x1e8] sm:$0xff]
        %v385 = vld [vmem:[%s250 + $0x1f0] sm:$0xff]
        %v386 = vld [vmem:[%s250 + $0x1f8] sm:$0xff]
        %v387 = vld [vmem:[%s250 + $0x200] sm:$0xff]
        %v388 = vld [vmem:[%s250 + $0x208] sm:$0xff]
        %v389 = vld [vmem:[%s250 + $0x210] sm:$0xff]
        %v390 = vld [vmem:[%s250 + $0x218] sm:$0xff]
        %v391 = vld [vmem:[%s250 + $0x220] sm:$0xff]
        %v392 = vld [vmem:[%s250 + $0x228] sm:$0xff]
        %v393 = vld [vmem:[%s250 + $0x230] sm:$0xff]
        %v394 = vld [vmem:[%s250 + $0x238] sm:$0xff]
        %v395 = vld [vmem:[%s250 + $0x240] sm:$0xff]
        %v396 = vld [vmem:[%s250 + $0x248] sm:$0xff]
        %v397 = vld [vmem:[%s250 + $0x250] sm:$0xff]
        %v398 = vld [vmem:[%s250 + $0x258] sm:$0xff]
        %v399 = vld [vmem:[%s250 + $0x260] sm:$0xff]
        %v400 = vld [vmem:[%s250 + $0x268] sm:$0xff]
        %v401 = vld [vmem:[%s250 + $0x270] sm:$0xff]
        %v402 = vld [vmem:[%s250 + $0x278] sm:$0xff]
        %v403 = vld [vmem:[%s250 + $0x280] sm:$0xff]
        %v404 = vld [vmem:[%s250 + $0x288] sm:$0xff]
        %v405 = vld [vmem:[%s250 + $0x290] sm:$0xff]
        %v406 = vld [vmem:[%s250 + $0x298] sm:$0xff]
        %v407 = vld [vmem:[%s250 + $0x2a0] sm:$0xff]
        %v408 = vld [vmem:[%s250 + $0x2a8] sm:$0xff]
        %v409 = vld [vmem:[%s250 + $0x2b0] sm:$0xff]
        %v410 = vld [vmem:[%s250 + $0x2b8] sm:$0xff]
        %v411 = vld [vmem:[%s250 + $0x2c0] sm:$0xff]
        %v412 = vld [vmem:[%s250 + $0x2c8] sm:$0xff]
        %v413 = vld [vmem:[%s250 + $0x2d0] sm:$0xff]
        %v414 = vld [vmem:[%s250 + $0x2d8] sm:$0xff]
        %v415 = vld [vmem:[%s250 + $0x2e0] sm:$0xff]
        %v416 = vld [vmem:[%s250 + $0x2e8] sm:$0xff]
        %v417 = vld [vmem:[%s250 + $0x2f0] sm:$0xff]
        %v418 = vld [vmem:[%s250 + $0x2f8] sm:$0xff]
        %v419 = vld [vmem:[%s250 + $0x300] sm:$0xff]
        %v420 = vld [vmem:[%s250 + $0x308] sm:$0xff]
        %v421 = vld [vmem:[%s250 + $0x310] sm:$0xff]
        %v422 = vld [vmem:[%s250 + $0x318] sm:$0xff]
        %v423 = vld [vmem:[%s250 + $0x320] sm:$0xff]
        %v424 = vld [vmem:[%s250 + $0x328] sm:$0xff]
        %v425 = vld [vmem:[%s250 + $0x330] sm:$0xff]
        %v426 = vld [vmem:[%s250 + $0x338] sm:$0xff]
        %v427 = vld [vmem:[%s250 + $0x340] sm:$0xff]
        %v428 = vld [vmem:[%s250 + $0x348] sm:$0xff]
        %v429 = vld [vmem:[%s250 + $0x350] sm:$0xff]
        %v430 = vld [vmem:[%s250 + $0x358] sm:$0xff]
        %v431 = vld [vmem:[%s250 + $0x360] sm:$0xff]
        %v432 = vld [vmem:[%s250 + $0x368] sm:$0xff]
        %v433 = vld [vmem:[%s250 + $0x370] sm:$0xff]
        %v434 = vld [vmem:[%s250 + $0x378] sm:$0xff]
        %v435 = vld [vmem:[%s250 + $0x380] sm:$0xff]
        %v436 = vld [vmem:[%s250 + $0x388] sm:$0xff]
        %v437 = vld [vmem:[%s250 + $0x390] sm:$0xff]
        %v438 = vld [vmem:[%s250 + $0x398] sm:$0xff]
        %v439 = vld [vmem:[%s250 + $0x3a0] sm:$0xff]
        %v440 = vld [vmem:[%s250 + $0x3a8] sm:$0xff]
        %v441 = vld [vmem:[%s250 + $0x3b0] sm:$0xff]
        %v442 = vld [vmem:[%s250 + $0x3b8] sm:$0xff]
        %v443 = vld [vmem:[%s250 + $0x3c0] sm:$0xff]
        %v444 = vld [vmem:[%s250 + $0x3c8] sm:$0xff]
        %v445 = vld [vmem:[%s250 + $0x3d0] sm:$0xff]
        %v446 = vld [vmem:[%s250 + $0x3d8] sm:$0xff]
        %v447 = vld [vmem:[%s250 + $0x3e0] sm:$0xff]
        %v448 = vld [vmem:[%s250 + $0x3e8] sm:$0xff]
        %v449 = vld [vmem:[%s250 + $0x3f0] sm:$0xff]
        %v450 = vld [vmem:[%s250 + $0x3f8] sm:$0xff]
        %v451 = vld [vmem:[%s250 + $0x400] sm:$0xff]
        %v452 = vld [vmem:[%s250 + $0x408] sm:$0xff]
        %v453 = vld [vmem:[%s250 + $0x410] sm:$0xff]
        %v454 = vld [vmem:[%s250 + $0x418] sm:$0xff]
        %v455 = vld [vmem:[%s250 + $0x420] sm:$0xff]
        %v456 = vld [vmem:[%s250 + $0x428] sm:$0xff]
        %v457 = vld [vmem:[%s250 + $0x430] sm:$0xff]
        %v458 = vld [vmem:[%s250 + $0x438] sm:$0xff]
        %v459 = vld [vmem:[%s250 + $0x440] sm:$0xff]
        %v460 = vld [vmem:[%s250 + $0x448] sm:$0xff]
        %v461 = vld [vmem:[%s250 + $0x450] sm:$0xff]
        %v462 = vld [vmem:[%s250 + $0x458] sm:$0xff]
        %v463 = vld [vmem:[%s250 + $0x460] sm:$0xff]
        %v464 = vld [vmem:[%s250 + $0x468] sm:$0xff]
        %v465 = vld [vmem:[%s250 + $0x470] sm:$0xff]
        %v466 = vld [vmem:[%s250 + $0x478] sm:$0xff]
        %v467 = vld [vmem:[%s250 + $0x480] sm:$0xff]
        %v468 = vld [vmem:[%s250 + $0x488] sm:$0xff]
        %v469 = vld [vmem:[%s250 + $0x490] sm:$0xff]
        %v470 = vld [vmem:[%s250 + $0x498] sm:$0xff]
        %v471 = vld [vmem:[%s250 + $0x4a0] sm:$0xff]
        %v472 = vld [vmem:[%s250 + $0x4a8] sm:$0xff]
        %v473 = vld [vmem:[%s250 + $0x4b0] sm:$0xff]
        %v474 = vld [vmem:[%s250 + $0x4b8] sm:$0xff]
        %v475 = vld [vmem:[%s250 + $0x4c0] sm:$0xff]
        %v476 = vld [vmem:[%s250 + $0x4c8] sm:$0xff]
        %v477 = vld [vmem:[%s250 + $0x4d0] sm:$0xff]
        %v478 = vld [vmem:[%s250 + $0x4d8] sm:$0xff]
        %v479 = vld [vmem:[%s250 + $0x4e0] sm:$0xff]
        %v480 = vld [vmem:[%s250 + $0x4e8] sm:$0xff]
        %v481 = vld [vmem:[%s250 + $0x4f0] sm:$0xff]
        %v482 = vld [vmem:[%s250 + $0x4f8] sm:$0xff]
        %v483 = vld [vmem:[%s250 + $0x500] sm:$0xff]
        %v484 = vld [vmem:[%s250 + $0x508] sm:$0xff]
        %v485 = vld [vmem:[%s250 + $0x510] sm:$0xff]
        %v486 = vld [vmem:[%s250 + $0x518] sm:$0xff]
        %v487 = vld [vmem:[%s250 + $0x520] sm:$0xff]
        %v488 = vld [vmem:[%s250 + $0x528] sm:$0xff]
        %v489 = vld [vmem:[%s250 + $0x530] sm:$0xff]
        %v490 = vld [vmem:[%s250 + $0x538] sm:$0xff]
        %v491 = vld [vmem:[%s250 + $0x540] sm:$0xff]
        %v492 = vld [vmem:[%s250 + $0x548] sm:$0xff]
        %v493 = vld [vmem:[%s250 + $0x550] sm:$0xff]
        %v494 = vld [vmem:[%s250 + $0x558] sm:$0xff]
        %v495 = vld [vmem:[%s250 + $0x560] sm:$0xff]
        %v496 = vld [vmem:[%s250 + $0x568] sm:$0xff]
        %v497 = vld [vmem:[%s250 + $0x570] sm:$0xff]
        %v498 = vld [vmem:[%s250 + $0x578] sm:$0xff]
        %v499 = vld [vmem:[%s250 + $0x580] sm:$0xff]
        %v500 = vld [vmem:[%s250 + $0x588] sm:$0xff]
        %v501 = vld [vmem:[%s250 + $0x590] sm:$0xff]
        %v502 = vld [vmem:[%s250 + $0x598] sm:$0xff]
        %v503 = vld [vmem:[%s250 + $0x5a0] sm:$0xff]
        %v504 = vld [vmem:[%s250 + $0x5a8] sm:$0xff]
        %v505 = vld [vmem:[%s250 + $0x5b0] sm:$0xff]
        %v506 = vld [vmem:[%s250 + $0x5b8] sm:$0xff]
        %v507 = vld [vmem:[%s250 + $0x5c0] sm:$0xff]
        %v508 = vld [vmem:[%s250 + $0x5c8] sm:$0xff]
        %v509 = vld [vmem:[%s250 + $0x5d0] sm:$0xff]
        %v510 = vld [vmem:[%s250 + $0x5d8] sm:$0xff]
        %v511 = vld [vmem:[%s250 + $0x5e0] sm:$0xff]
        %v512 = vld [vmem:[%s250 + $0x5e8] sm:$0xff]
        %v513 = vld [vmem:[%s250 + $0x5f0] sm:$0xff]
        %v514 = vld [vmem:[%s250 + $0x5f8] sm:$0xff]
        %v515 = vld [vmem:[%s250 + $0x600] sm:$0xff]
        %v516 = vld [vmem:[%s250 + $0x608] sm:$0xff]
        %v517 = vld [vmem:[%s250 + $0x610] sm:$0xff]
        %v518 = vld [vmem:[%s250 + $0x618] sm:$0xff]
        %v519 = vld [vmem:[%s250 + $0x620] sm:$0xff]
        %v520 = vld [vmem:[%s250 + $0x628] sm:$0xff]
        %v521 = vld [vmem:[%s250 + $0x630] sm:$0xff]
        %v522 = vld [vmem:[%s250 + $0x638] sm:$0xff]
        %v523 = vld [vmem:[%s250 + $0x640] sm:$0xff]
        %v524 = vld [vmem:[%s250 + $0x648] sm:$0xff]
        %v525 = vld [vmem:[%s250 + $0x650] sm:$0xff]
        %v526 = vld [vmem:[%s250 + $0x658] sm:$0xff]
        %v527 = vld [vmem:[%s250 + $0x660] sm:$0xff]
        %v528 = vld [vmem:[%s250 + $0x668] sm:$0xff]
        %v529 = vld [vmem:[%s250 + $0x670] sm:$0xff]
        %v530 = vld [vmem:[%s250 + $0x678] sm:$0xff]
        %v531 = vld [vmem:[%s250 + $0x680] sm:$0xff]
        %v532 = vld [vmem:[%s250 + $0x688] sm:$0xff]
        %v533 = vld [vmem:[%s250 + $0x690] sm:$0xff]
        %v534 = vld [vmem:[%s250 + $0x698] sm:$0xff]
        %v535 = vld [vmem:[%s250 + $0x6a0] sm:$0xff]
        %v536 = vld [vmem:[%s250 + $0x6a8] sm:$0xff]
        %v537 = vld [vmem:[%s250 + $0x6b0] sm:$0xff]
        %v538 = vld [vmem:[%s250 + $0x6b8] sm:$0xff]
        %v539 = vld [vmem:[%s250 + $0x6c0] sm:$0xff]
        %v540 = vld [vmem:[%s250 + $0x6c8] sm:$0xff]
        %v541 = vld [vmem:[%s250 + $0x6d0] sm:$0xff]
        %v542 = vld [vmem:[%s250 + $0x6d8] sm:$0xff]
        %v543 = vld [vmem:[%s250 + $0x6e0] sm:$0xff]
        %v544 = vld [vmem:[%s250 + $0x6e8] sm:$0xff]
        %v545 = vld [vmem:[%s250 + $0x6f0] sm:$0xff]
        %v546 = vld [vmem:[%s250 + $0x6f8] sm:$0xff]
        %v547 = vld [vmem:[%s250 + $0x700] sm:$0xff]
        %v548 = vld [vmem:[%s250 + $0x708] sm:$0xff]
        %v549 = vld [vmem:[%s250 + $0x710] sm:$0xff]
        %v550 = vld [vmem:[%s250 + $0x718] sm:$0xff]
        %v551 = vld [vmem:[%s250 + $0x720] sm:$0xff]
        %v552 = vld [vmem:[%s250 + $0x728] sm:$0xff]
        %v553 = vld [vmem:[%s250 + $0x730] sm:$0xff]
        %v554 = vld [vmem:[%s250 + $0x738] sm:$0xff]
        %v555 = vld [vmem:[%s250 + $0x740] sm:$0xff]
        %v556 = vld [vmem:[%s250 + $0x748] sm:$0xff]
        %v557 = vld [vmem:[%s250 + $0x750] sm:$0xff]
        %v558 = vld [vmem:[%s250 + $0x758] sm:$0xff]
        %v559 = vld [vmem:[%s250 + $0x760] sm:$0xff]
        %v560 = vld [vmem:[%s250 + $0x768] sm:$0xff]
        %v561 = vld [vmem:[%s250 + $0x770] sm:$0xff]
        %v562 = vld [vmem:[%s250 + $0x778] sm:$0xff]
        %v563 = vld [vmem:[%s250 + $0x780] sm:$0xff]
        %v564 = vld [vmem:[%s250 + $0x788] sm:$0xff]
        %v565 = vld [vmem:[%s250 + $0x790] sm:$0xff]
        %v566 = vld [vmem:[%s250 + $0x798] sm:$0xff]
        %v567 = vld [vmem:[%s250 + $0x7a0] sm:$0xff]
        %v568 = vld [vmem:[%s250 + $0x7a8] sm:$0xff]
        %v569 = vld [vmem:[%s250 + $0x7b0] sm:$0xff]
        %v570 = vld [vmem:[%s250 + $0x7b8] sm:$0xff]
        %v571 = vld [vmem:[%s250 + $0x7c0] sm:$0xff]
        %v572 = vld [vmem:[%s250 + $0x7c8] sm:$0xff]
        %v573 = vld [vmem:[%s250 + $0x7d0] sm:$0xff]
        %v574 = vld [vmem:[%s250 + $0x7d8] sm:$0xff]
        %v575 = vld [vmem:[%s250 + $0x7e0] sm:$0xff]
        %v576 = vld [vmem:[%s250 + $0x7e8] sm:$0xff]
        %v577 = vld [vmem:[%s250 + $0x7f0] sm:$0xff]
        %v578 = vld [vmem:[%s250 + $0x7f8] sm:$0xff]
        %v581 = vcombine.high %v321, %v321
        %v583 = vunpack.c.l.s4 1966171168
        %v584 = vunpack.c.0.s8 %v583
        %v585 = vlaneseq
        %v586 = vshrl.u32 %v585, 7
        %v587 = vsub.s32 %v584, %v586
        %v588 = vrot.slane %v321, %v587
        %v590 = vunpack.c.l.s4 1966171168
        %v591 = vunpack.c.0.s8 %v590
        %v592 = vlaneseq
        %v593 = vshrl.u32 %v592, 7
        %v594 = vsub.s32 %v591, %v593
        %v595 = vrot.slane %v581, %v594
        %v596 = vcombine.high %v588, %v588
        %v597 = vcombine.high %v595, %v595
        %v599 = vunpack.c.l.s4 1966171168
        %v600 = vunpack.c.0.s8 %v599
        %v601 = vlaneseq
        %v602 = vshrl.u32 %v601, 7
        %v603 = vsub.s32 %v600, %v602
        %v604 = vrot.slane %v588, %v603
        %v606 = vunpack.c.l.s4 1966171168
        %v607 = vunpack.c.0.s8 %v606
        %v608 = vlaneseq
        %v609 = vshrl.u32 %v608, 7
        %v610 = vsub.s32 %v607, %v609
        %v611 = vrot.slane %v595, %v610
        %v613 = vunpack.c.l.s4 1966171168
        %v614 = vunpack.c.0.s8 %v613
        %v615 = vlaneseq
        %v616 = vshrl.u32 %v615, 7
        %v617 = vsub.s32 %v614, %v616
        %v618 = vrot.slane %v596, %v617
        %v620 = vunpack.c.l.s4 1966171168
        %v621 = vunpack.c.0.s8 %v620
        %v622 = vlaneseq
        %v623 = vshrl.u32 %v622, 7
        %v624 = vsub.s32 %v621, %v623
        %v625 = vrot.slane %v597, %v624
        %v626 = vcombine.high %v604, %v604
        %v627 = vcombine.high %v611, %v611
        %v628 = vcombine.high %v618, %v618
        %v629 = vcombine.high %v625, %v625
        %v630 = vcombine.high %v322, %v322
        %v632 = vunpack.c.l.s4 1966171168
        %v633 = vunpack.c.0.s8 %v632
        %v634 = vlaneseq
        %v635 = vshrl.u32 %v634, 7
        %v636 = vsub.s32 %v633, %v635
        %v637 = vrot.slane %v322, %v636
        %v639 = vunpack.c.l.s4 1966171168
        %v640 = vunpack.c.0.s8 %v639
        %v641 = vlaneseq
        %v642 = vshrl.u32 %v641, 7
        %v643 = vsub.s32 %v640, %v642
        %v644 = vrot.slane %v630, %v643
        %v645 = vcombine.high %v637, %v637
        %v646 = vcombine.high %v644, %v644
        %v648 = vunpack.c.l.s4 1966171168
        %v649 = vunpack.c.0.s8 %v648
        %v650 = vlaneseq
        %v651 = vshrl.u32 %v650, 7
        %v652 = vsub.s32 %v649, %v651
        %v653 = vrot.slane %v637, %v652
        %v655 = vunpack.c.l.s4 1966171168
        %v656 = vunpack.c.0.s8 %v655
        %v657 = vlaneseq
        %v658 = vshrl.u32 %v657, 7
        %v659 = vsub.s32 %v656, %v658
        %v660 = vrot.slane %v644, %v659
        %v662 = vunpack.c.l.s4 1966171168
        %v663 = vunpack.c.0.s8 %v662
        %v664 = vlaneseq
        %v665 = vshrl.u32 %v664, 7
        %v666 = vsub.s32 %v663, %v665
        %v667 = vrot.slane %v645, %v666
        %v669 = vunpack.c.l.s4 1966171168
        %v670 = vunpack.c.0.s8 %v669
        %v671 = vlaneseq
        %v672 = vshrl.u32 %v671, 7
        %v673 = vsub.s32 %v670, %v672
        %v674 = vrot.slane %v646, %v673
        %v675 = vcombine.high %v653, %v653
        %v676 = vcombine.high %v660, %v660
        %v677 = vcombine.high %v667, %v667
        %v678 = vcombine.high %v674, %v674
        %v951 = vunpack.c.l.b16 %v323
        %v952 = vunpack.c.h.b16 %v323
        %v953 = vunpack.c.l.b16 %v324
        %v954 = vunpack.c.h.b16 %v324
        %v955 = vunpack.c.l.b16 %v325
        %v956 = vunpack.c.h.b16 %v325
        %v957 = vunpack.c.l.b16 %v326
        %v958 = vunpack.c.h.b16 %v326
        %v959 = vunpack.c.l.b16 %v327
        %v960 = vunpack.c.h.b16 %v327
        %v961 = vunpack.c.l.b16 %v328
        %v962 = vunpack.c.h.b16 %v328
        %v963 = vunpack.c.l.b16 %v329
        %v964 = vunpack.c.h.b16 %v329
        %v965 = vunpack.c.l.b16 %v330
        %v966 = vunpack.c.h.b16 %v330
        %v967 = vunpack.c.l.b16 %v331
        %v968 = vunpack.c.h.b16 %v331
        %v969 = vunpack.c.l.b16 %v332
        %v970 = vunpack.c.h.b16 %v332
        %v971 = vunpack.c.l.b16 %v333
        %v972 = vunpack.c.h.b16 %v333
        %v973 = vunpack.c.l.b16 %v334
        %v974 = vunpack.c.h.b16 %v334
        %v975 = vunpack.c.l.b16 %v335
        %v976 = vunpack.c.h.b16 %v335
        %v977 = vunpack.c.l.b16 %v336
        %v978 = vunpack.c.h.b16 %v336
        %v979 = vunpack.c.l.b16 %v337
        %v980 = vunpack.c.h.b16 %v337
        %v981 = vunpack.c.l.b16 %v338
        %v982 = vunpack.c.h.b16 %v338
        %v983 = vunpack.c.l.b16 %v339
        %v984 = vunpack.c.h.b16 %v339
        %v985 = vunpack.c.l.b16 %v340
        %v986 = vunpack.c.h.b16 %v340
        %v987 = vunpack.c.l.b16 %v341
        %v988 = vunpack.c.h.b16 %v341
        %v989 = vunpack.c.l.b16 %v342
        %v990 = vunpack.c.h.b16 %v342
        %v991 = vunpack.c.l.b16 %v343
        %v992 = vunpack.c.h.b16 %v343
        %v993 = vunpack.c.l.b16 %v344
        %v994 = vunpack.c.h.b16 %v344
        %v995 = vunpack.c.l.b16 %v345
        %v996 = vunpack.c.h.b16 %v345
        %v997 = vunpack.c.l.b16 %v346
        %v998 = vunpack.c.h.b16 %v346
        %v999 = vunpack.c.l.b16 %v347
        %v1000 = vunpack.c.h.b16 %v347
        %v1001 = vunpack.c.l.b16 %v348
        %v1002 = vunpack.c.h.b16 %v348
        %v1003 = vunpack.c.l.b16 %v349
        %v1004 = vunpack.c.h.b16 %v349
        %v1005 = vunpack.c.l.b16 %v350
        %v1006 = vunpack.c.h.b16 %v350
        %v1007 = vunpack.c.l.b16 %v351
        %v1008 = vunpack.c.h.b16 %v351
        %v1009 = vunpack.c.l.b16 %v352
        %v1010 = vunpack.c.h.b16 %v352
        %v1011 = vunpack.c.l.b16 %v353
        %v1012 = vunpack.c.h.b16 %v353
        %v1013 = vunpack.c.l.b16 %v354
        %v1014 = vunpack.c.h.b16 %v354
        %v1015 = vunpack.c.l.b16 %v355
        %v1016 = vunpack.c.h.b16 %v355
        %v1017 = vunpack.c.l.b16 %v356
        %v1018 = vunpack.c.h.b16 %v356
        %v1019 = vunpack.c.l.b16 %v357
        %v1020 = vunpack.c.h.b16 %v357
        %v1021 = vunpack.c.l.b16 %v358
        %v1022 = vunpack.c.h.b16 %v358
        %v1023 = vunpack.c.l.b16 %v359
        %v1024 = vunpack.c.h.b16 %v359
        %v1025 = vunpack.c.l.b16 %v360
        %v1026 = vunpack.c.h.b16 %v360
        %v1027 = vunpack.c.l.b16 %v361
        %v1028 = vunpack.c.h.b16 %v361
        %v1029 = vunpack.c.l.b16 %v362
        %v1030 = vunpack.c.h.b16 %v362
        %v1031 = vunpack.c.l.b16 %v363
        %v1032 = vunpack.c.h.b16 %v363
        %v1033 = vunpack.c.l.b16 %v364
        %v1034 = vunpack.c.h.b16 %v364
        %v1035 = vunpack.c.l.b16 %v365
        %v1036 = vunpack.c.h.b16 %v365
        %v1037 = vunpack.c.l.b16 %v366
        %v1038 = vunpack.c.h.b16 %v366
        %v1039 = vunpack.c.l.b16 %v367
        %v1040 = vunpack.c.h.b16 %v367
        %v1041 = vunpack.c.l.b16 %v368
        %v1042 = vunpack.c.h.b16 %v368
        %v1043 = vunpack.c.l.b16 %v369
        %v1044 = vunpack.c.h.b16 %v369
        %v1045 = vunpack.c.l.b16 %v370
        %v1046 = vunpack.c.h.b16 %v370
        %v1047 = vunpack.c.l.b16 %v371
        %v1048 = vunpack.c.h.b16 %v371
        %v1049 = vunpack.c.l.b16 %v372
        %v1050 = vunpack.c.h.b16 %v372
        %v1051 = vunpack.c.l.b16 %v373
        %v1052 = vunpack.c.h.b16 %v373
        %v1053 = vunpack.c.l.b16 %v374
        %v1054 = vunpack.c.h.b16 %v374
        %v1055 = vunpack.c.l.b16 %v375
        %v1056 = vunpack.c.h.b16 %v375
        %v1057 = vunpack.c.l.b16 %v376
        %v1058 = vunpack.c.h.b16 %v376
        %v1059 = vunpack.c.l.b16 %v377
        %v1060 = vunpack.c.h.b16 %v377
        %v1061 = vunpack.c.l.b16 %v378
        %v1062 = vunpack.c.h.b16 %v378
        %v1063 = vunpack.c.l.b16 %v379
        %v1064 = vunpack.c.h.b16 %v379
        %v1065 = vunpack.c.l.b16 %v380
        %v1066 = vunpack.c.h.b16 %v380
        %v1067 = vunpack.c.l.b16 %v381
        %v1068 = vunpack.c.h.b16 %v381
        %v1069 = vunpack.c.l.b16 %v382
        %v1070 = vunpack.c.h.b16 %v382
        %v1071 = vunpack.c.l.b16 %v383
        %v1072 = vunpack.c.h.b16 %v383
        %v1073 = vunpack.c.l.b16 %v384
        %v1074 = vunpack.c.h.b16 %v384
        %v1075 = vunpack.c.l.b16 %v385
        %v1076 = vunpack.c.h.b16 %v385
        %v1077 = vunpack.c.l.b16 %v386
        %v1078 = vunpack.c.h.b16 %v386
        %v1079 = vunpack.c.l.b16 %v387
        %v1080 = vunpack.c.h.b16 %v387
        %v1081 = vunpack.c.l.b16 %v388
        %v1082 = vunpack.c.h.b16 %v388
        %v1083 = vunpack.c.l.b16 %v389
        %v1084 = vunpack.c.h.b16 %v389
        %v1085 = vunpack.c.l.b16 %v390
        %v1086 = vunpack.c.h.b16 %v390
        %v1087 = vunpack.c.l.b16 %v391
        %v1088 = vunpack.c.h.b16 %v391
        %v1089 = vunpack.c.l.b16 %v392
        %v1090 = vunpack.c.h.b16 %v392
        %v1091 = vunpack.c.l.b16 %v393
        %v1092 = vunpack.c.h.b16 %v393
        %v1093 = vunpack.c.l.b16 %v394
        %v1094 = vunpack.c.h.b16 %v394
        %v1095 = vunpack.c.l.b16 %v395
        %v1096 = vunpack.c.h.b16 %v395
        %v1097 = vunpack.c.l.b16 %v396
        %v1098 = vunpack.c.h.b16 %v396
        %v1099 = vunpack.c.l.b16 %v397
        %v1100 = vunpack.c.h.b16 %v397
        %v1101 = vunpack.c.l.b16 %v398
        %v1102 = vunpack.c.h.b16 %v398
        %v1103 = vunpack.c.l.b16 %v399
        %v1104 = vunpack.c.h.b16 %v399
        %v1105 = vunpack.c.l.b16 %v400
        %v1106 = vunpack.c.h.b16 %v400
        %v1107 = vunpack.c.l.b16 %v401
        %v1108 = vunpack.c.h.b16 %v401
        %v1109 = vunpack.c.l.b16 %v402
        %v1110 = vunpack.c.h.b16 %v402
        %v1111 = vunpack.c.l.b16 %v403
        %v1112 = vunpack.c.h.b16 %v403
        %v1113 = vunpack.c.l.b16 %v404
        %v1114 = vunpack.c.h.b16 %v404
        %v1115 = vunpack.c.l.b16 %v405
        %v1116 = vunpack.c.h.b16 %v405
        %v1117 = vunpack.c.l.b16 %v406
        %v1118 = vunpack.c.h.b16 %v406
        %v1119 = vunpack.c.l.b16 %v407
        %v1120 = vunpack.c.h.b16 %v407
        %v1121 = vunpack.c.l.b16 %v408
        %v1122 = vunpack.c.h.b16 %v408
        %v1123 = vunpack.c.l.b16 %v409
        %v1124 = vunpack.c.h.b16 %v409
        %v1125 = vunpack.c.l.b16 %v410
        %v1126 = vunpack.c.h.b16 %v410
        %v1127 = vunpack.c.l.b16 %v411
        %v1128 = vunpack.c.h.b16 %v411
        %v1129 = vunpack.c.l.b16 %v412
        %v1130 = vunpack.c.h.b16 %v412
        %v1131 = vunpack.c.l.b16 %v413
        %v1132 = vunpack.c.h.b16 %v413
        %v1133 = vunpack.c.l.b16 %v414
        %v1134 = vunpack.c.h.b16 %v414
        %v1135 = vunpack.c.l.b16 %v415
        %v1136 = vunpack.c.h.b16 %v415
        %v1137 = vunpack.c.l.b16 %v416
        %v1138 = vunpack.c.h.b16 %v416
        %v1139 = vunpack.c.l.b16 %v417
        %v1140 = vunpack.c.h.b16 %v417
        %v1141 = vunpack.c.l.b16 %v418
        %v1142 = vunpack.c.h.b16 %v418
        %v1143 = vunpack.c.l.b16 %v419
        %v1144 = vunpack.c.h.b16 %v419
        %v1145 = vunpack.c.l.b16 %v420
        %v1146 = vunpack.c.h.b16 %v420
        %v1147 = vunpack.c.l.b16 %v421
        %v1148 = vunpack.c.h.b16 %v421
        %v1149 = vunpack.c.l.b16 %v422
        %v1150 = vunpack.c.h.b16 %v422
        %v1151 = vunpack.c.l.b16 %v423
        %v1152 = vunpack.c.h.b16 %v423
        %v1153 = vunpack.c.l.b16 %v424
        %v1154 = vunpack.c.h.b16 %v424
        %v1155 = vunpack.c.l.b16 %v425
        %v1156 = vunpack.c.h.b16 %v425
        %v1157 = vunpack.c.l.b16 %v426
        %v1158 = vunpack.c.h.b16 %v426
        %v1159 = vunpack.c.l.b16 %v427
        %v1160 = vunpack.c.h.b16 %v427
        %v1161 = vunpack.c.l.b16 %v428
        %v1162 = vunpack.c.h.b16 %v428
        %v1163 = vunpack.c.l.b16 %v429
        %v1164 = vunpack.c.h.b16 %v429
        %v1165 = vunpack.c.l.b16 %v430
        %v1166 = vunpack.c.h.b16 %v430
        %v1167 = vunpack.c.l.b16 %v431
        %v1168 = vunpack.c.h.b16 %v431
        %v1169 = vunpack.c.l.b16 %v432
        %v1170 = vunpack.c.h.b16 %v432
        %v1171 = vunpack.c.l.b16 %v433
        %v1172 = vunpack.c.h.b16 %v433
        %v1173 = vunpack.c.l.b16 %v434
        %v1174 = vunpack.c.h.b16 %v434
        %v1175 = vunpack.c.l.b16 %v435
        %v1176 = vunpack.c.h.b16 %v435
        %v1177 = vunpack.c.l.b16 %v436
        %v1178 = vunpack.c.h.b16 %v436
        %v1179 = vunpack.c.l.b16 %v437
        %v1180 = vunpack.c.h.b16 %v437
        %v1181 = vunpack.c.l.b16 %v438
        %v1182 = vunpack.c.h.b16 %v438
        %v1183 = vunpack.c.l.b16 %v439
        %v1184 = vunpack.c.h.b16 %v439
        %v1185 = vunpack.c.l.b16 %v440
        %v1186 = vunpack.c.h.b16 %v440
        %v1187 = vunpack.c.l.b16 %v441
        %v1188 = vunpack.c.h.b16 %v441
        %v1189 = vunpack.c.l.b16 %v442
        %v1190 = vunpack.c.h.b16 %v442
        %v1191 = vunpack.c.l.b16 %v443
        %v1192 = vunpack.c.h.b16 %v443
        %v1193 = vunpack.c.l.b16 %v444
        %v1194 = vunpack.c.h.b16 %v444
        %v1195 = vunpack.c.l.b16 %v445
        %v1196 = vunpack.c.h.b16 %v445
        %v1197 = vunpack.c.l.b16 %v446
        %v1198 = vunpack.c.h.b16 %v446
        %v1199 = vunpack.c.l.b16 %v447
        %v1200 = vunpack.c.h.b16 %v447
        %v1201 = vunpack.c.l.b16 %v448
        %v1202 = vunpack.c.h.b16 %v448
        %v1203 = vunpack.c.l.b16 %v449
        %v1204 = vunpack.c.h.b16 %v449
        %v1205 = vunpack.c.l.b16 %v450
        %v1206 = vunpack.c.h.b16 %v450
        %v1207 = vunpack.c.l.b16 %v451
        %v1208 = vunpack.c.h.b16 %v451
        %v1209 = vunpack.c.l.b16 %v452
        %v1210 = vunpack.c.h.b16 %v452
        %v1211 = vunpack.c.l.b16 %v453
        %v1212 = vunpack.c.h.b16 %v453
        %v1213 = vunpack.c.l.b16 %v454
        %v1214 = vunpack.c.h.b16 %v454
        %v1215 = vunpack.c.l.b16 %v455
        %v1216 = vunpack.c.h.b16 %v455
        %v1217 = vunpack.c.l.b16 %v456
        %v1218 = vunpack.c.h.b16 %v456
        %v1219 = vunpack.c.l.b16 %v457
        %v1220 = vunpack.c.h.b16 %v457
        %v1221 = vunpack.c.l.b16 %v458
        %v1222 = vunpack.c.h.b16 %v458
        %v1223 = vunpack.c.l.b16 %v459
        %v1224 = vunpack.c.h.b16 %v459
        %v1225 = vunpack.c.l.b16 %v460
        %v1226 = vunpack.c.h.b16 %v460
        %v1227 = vunpack.c.l.b16 %v461
        %v1228 = vunpack.c.h.b16 %v461
        %v1229 = vunpack.c.l.b16 %v462
        %v1230 = vunpack.c.h.b16 %v462
        %v1231 = vunpack.c.l.b16 %v463
        %v1232 = vunpack.c.h.b16 %v463
        %v1233 = vunpack.c.l.b16 %v464
        %v1234 = vunpack.c.h.b16 %v464
        %v1235 = vunpack.c.l.b16 %v465
        %v1236 = vunpack.c.h.b16 %v465
        %v1237 = vunpack.c.l.b16 %v466
        %v1238 = vunpack.c.h.b16 %v466
        %v1239 = vunpack.c.l.b16 %v467
        %v1240 = vunpack.c.h.b16 %v467
        %v1241 = vunpack.c.l.b16 %v468
        %v1242 = vunpack.c.h.b16 %v468
        %v1243 = vunpack.c.l.b16 %v469
        %v1244 = vunpack.c.h.b16 %v469
        %v1245 = vunpack.c.l.b16 %v470
        %v1246 = vunpack.c.h.b16 %v470
        %v1247 = vunpack.c.l.b16 %v471
        %v1248 = vunpack.c.h.b16 %v471
        %v1249 = vunpack.c.l.b16 %v472
        %v1250 = vunpack.c.h.b16 %v472
        %v1251 = vunpack.c.l.b16 %v473
        %v1252 = vunpack.c.h.b16 %v473
        %v1253 = vunpack.c.l.b16 %v474
        %v1254 = vunpack.c.h.b16 %v474
        %v1255 = vunpack.c.l.b16 %v475
        %v1256 = vunpack.c.h.b16 %v475
        %v1257 = vunpack.c.l.b16 %v476
        %v1258 = vunpack.c.h.b16 %v476
        %v1259 = vunpack.c.l.b16 %v477
        %v1260 = vunpack.c.h.b16 %v477
        %v1261 = vunpack.c.l.b16 %v478
        %v1262 = vunpack.c.h.b16 %v478
        %v1263 = vunpack.c.l.b16 %v479
        %v1264 = vunpack.c.h.b16 %v479
        %v1265 = vunpack.c.l.b16 %v480
        %v1266 = vunpack.c.h.b16 %v480
        %v1267 = vunpack.c.l.b16 %v481
        %v1268 = vunpack.c.h.b16 %v481
        %v1269 = vunpack.c.l.b16 %v482
        %v1270 = vunpack.c.h.b16 %v482
        %v1271 = vunpack.c.l.b16 %v483
        %v1272 = vunpack.c.h.b16 %v483
        %v1273 = vunpack.c.l.b16 %v484
        %v1274 = vunpack.c.h.b16 %v484
        %v1275 = vunpack.c.l.b16 %v485
        %v1276 = vunpack.c.h.b16 %v485
        %v1277 = vunpack.c.l.b16 %v486
        %v1278 = vunpack.c.h.b16 %v486
        %v1279 = vunpack.c.l.b16 %v487
        %v1280 = vunpack.c.h.b16 %v487
        %v1281 = vunpack.c.l.b16 %v488
        %v1282 = vunpack.c.h.b16 %v488
        %v1283 = vunpack.c.l.b16 %v489
        %v1284 = vunpack.c.h.b16 %v489
        %v1285 = vunpack.c.l.b16 %v490
        %v1286 = vunpack.c.h.b16 %v490
        %v1287 = vunpack.c.l.b16 %v491
        %v1288 = vunpack.c.h.b16 %v491
        %v1289 = vunpack.c.l.b16 %v492
        %v1290 = vunpack.c.h.b16 %v492
        %v1291 = vunpack.c.l.b16 %v493
        %v1292 = vunpack.c.h.b16 %v493
        %v1293 = vunpack.c.l.b16 %v494
        %v1294 = vunpack.c.h.b16 %v494
        %v1295 = vunpack.c.l.b16 %v495
        %v1296 = vunpack.c.h.b16 %v495
        %v1297 = vunpack.c.l.b16 %v496
        %v1298 = vunpack.c.h.b16 %v496
        %v1299 = vunpack.c.l.b16 %v497
        %v1300 = vunpack.c.h.b16 %v497
        %v1301 = vunpack.c.l.b16 %v498
        %v1302 = vunpack.c.h.b16 %v498
        %v1303 = vunpack.c.l.b16 %v499
        %v1304 = vunpack.c.h.b16 %v499
        %v1305 = vunpack.c.l.b16 %v500
        %v1306 = vunpack.c.h.b16 %v500
        %v1307 = vunpack.c.l.b16 %v501
        %v1308 = vunpack.c.h.b16 %v501
        %v1309 = vunpack.c.l.b16 %v502
        %v1310 = vunpack.c.h.b16 %v502
        %v1311 = vunpack.c.l.b16 %v503
        %v1312 = vunpack.c.h.b16 %v503
        %v1313 = vunpack.c.l.b16 %v504
        %v1314 = vunpack.c.h.b16 %v504
        %v1315 = vunpack.c.l.b16 %v505
        %v1316 = vunpack.c.h.b16 %v505
        %v1317 = vunpack.c.l.b16 %v506
        %v1318 = vunpack.c.h.b16 %v506
        %v1319 = vunpack.c.l.b16 %v507
        %v1320 = vunpack.c.h.b16 %v507
        %v1321 = vunpack.c.l.b16 %v508
        %v1322 = vunpack.c.h.b16 %v508
        %v1323 = vunpack.c.l.b16 %v509
        %v1324 = vunpack.c.h.b16 %v509
        %v1325 = vunpack.c.l.b16 %v510
        %v1326 = vunpack.c.h.b16 %v510
        %v1327 = vunpack.c.l.b16 %v511
        %v1328 = vunpack.c.h.b16 %v511
        %v1329 = vunpack.c.l.b16 %v512
        %v1330 = vunpack.c.h.b16 %v512
        %v1331 = vunpack.c.l.b16 %v513
        %v1332 = vunpack.c.h.b16 %v513
        %v1333 = vunpack.c.l.b16 %v514
        %v1334 = vunpack.c.h.b16 %v514
        %v1335 = vunpack.c.l.b16 %v515
        %v1336 = vunpack.c.h.b16 %v515
        %v1337 = vunpack.c.l.b16 %v516
        %v1338 = vunpack.c.h.b16 %v516
        %v1339 = vunpack.c.l.b16 %v517
        %v1340 = vunpack.c.h.b16 %v517
        %v1341 = vunpack.c.l.b16 %v518
        %v1342 = vunpack.c.h.b16 %v518
        %v1343 = vunpack.c.l.b16 %v519
        %v1344 = vunpack.c.h.b16 %v519
        %v1345 = vunpack.c.l.b16 %v520
        %v1346 = vunpack.c.h.b16 %v520
        %v1347 = vunpack.c.l.b16 %v521
        %v1348 = vunpack.c.h.b16 %v521
        %v1349 = vunpack.c.l.b16 %v522
        %v1350 = vunpack.c.h.b16 %v522
        %v1351 = vunpack.c.l.b16 %v523
        %v1352 = vunpack.c.h.b16 %v523
        %v1353 = vunpack.c.l.b16 %v524
        %v1354 = vunpack.c.h.b16 %v524
        %v1355 = vunpack.c.l.b16 %v525
        %v1356 = vunpack.c.h.b16 %v525
        %v1357 = vunpack.c.l.b16 %v526
        %v1358 = vunpack.c.h.b16 %v526
        %v1359 = vunpack.c.l.b16 %v527
        %v1360 = vunpack.c.h.b16 %v527
        %v1361 = vunpack.c.l.b16 %v528
        %v1362 = vunpack.c.h.b16 %v528
        %v1363 = vunpack.c.l.b16 %v529
        %v1364 = vunpack.c.h.b16 %v529
        %v1365 = vunpack.c.l.b16 %v530
        %v1366 = vunpack.c.h.b16 %v530
        %v1367 = vunpack.c.l.b16 %v531
        %v1368 = vunpack.c.h.b16 %v531
        %v1369 = vunpack.c.l.b16 %v532
        %v1370 = vunpack.c.h.b16 %v532
        %v1371 = vunpack.c.l.b16 %v533
        %v1372 = vunpack.c.h.b16 %v533
        %v1373 = vunpack.c.l.b16 %v534
        %v1374 = vunpack.c.h.b16 %v534
        %v1375 = vunpack.c.l.b16 %v535
        %v1376 = vunpack.c.h.b16 %v535
        %v1377 = vunpack.c.l.b16 %v536
        %v1378 = vunpack.c.h.b16 %v536
        %v1379 = vunpack.c.l.b16 %v537
        %v1380 = vunpack.c.h.b16 %v537
        %v1381 = vunpack.c.l.b16 %v538
        %v1382 = vunpack.c.h.b16 %v538
        %v1383 = vunpack.c.l.b16 %v539
        %v1384 = vunpack.c.h.b16 %v539
        %v1385 = vunpack.c.l.b16 %v540
        %v1386 = vunpack.c.h.b16 %v540
        %v1387 = vunpack.c.l.b16 %v541
        %v1388 = vunpack.c.h.b16 %v541
        %v1389 = vunpack.c.l.b16 %v542
        %v1390 = vunpack.c.h.b16 %v542
        %v1391 = vunpack.c.l.b16 %v543
        %v1392 = vunpack.c.h.b16 %v543
        %v1393 = vunpack.c.l.b16 %v544
        %v1394 = vunpack.c.h.b16 %v544
        %v1395 = vunpack.c.l.b16 %v545
        %v1396 = vunpack.c.h.b16 %v545
        %v1397 = vunpack.c.l.b16 %v546
        %v1398 = vunpack.c.h.b16 %v546
        %v1399 = vunpack.c.l.b16 %v547
        %v1400 = vunpack.c.h.b16 %v547
        %v1401 = vunpack.c.l.b16 %v548
        %v1402 = vunpack.c.h.b16 %v548
        %v1403 = vunpack.c.l.b16 %v549
        %v1404 = vunpack.c.h.b16 %v549
        %v1405 = vunpack.c.l.b16 %v550
        %v1406 = vunpack.c.h.b16 %v550
        %v1407 = vunpack.c.l.b16 %v551
        %v1408 = vunpack.c.h.b16 %v551
        %v1409 = vunpack.c.l.b16 %v552
        %v1410 = vunpack.c.h.b16 %v552
        %v1411 = vunpack.c.l.b16 %v553
        %v1412 = vunpack.c.h.b16 %v553
        %v1413 = vunpack.c.l.b16 %v554
        %v1414 = vunpack.c.h.b16 %v554
        %v1415 = vunpack.c.l.b16 %v555
        %v1416 = vunpack.c.h.b16 %v555
        %v1417 = vunpack.c.l.b16 %v556
        %v1418 = vunpack.c.h.b16 %v556
        %v1419 = vunpack.c.l.b16 %v557
        %v1420 = vunpack.c.h.b16 %v557
        %v1421 = vunpack.c.l.b16 %v558
        %v1422 = vunpack.c.h.b16 %v558
        %v1423 = vunpack.c.l.b16 %v559
        %v1424 = vunpack.c.h.b16 %v559
        %v1425 = vunpack.c.l.b16 %v560
        %v1426 = vunpack.c.h.b16 %v560
        %v1427 = vunpack.c.l.b16 %v561
        %v1428 = vunpack.c.h.b16 %v561
        %v1429 = vunpack.c.l.b16 %v562
        %v1430 = vunpack.c.h.b16 %v562
        %v1431 = vunpack.c.l.b16 %v563
        %v1432 = vunpack.c.h.b16 %v563
        %v1433 = vunpack.c.l.b16 %v564
        %v1434 = vunpack.c.h.b16 %v564
        %v1435 = vunpack.c.l.b16 %v565
        %v1436 = vunpack.c.h.b16 %v565
        %v1437 = vunpack.c.l.b16 %v566
        %v1438 = vunpack.c.h.b16 %v566
        %v1439 = vunpack.c.l.b16 %v567
        %v1440 = vunpack.c.h.b16 %v567
        %v1441 = vunpack.c.l.b16 %v568
        %v1442 = vunpack.c.h.b16 %v568
        %v1443 = vunpack.c.l.b16 %v569
        %v1444 = vunpack.c.h.b16 %v569
        %v1445 = vunpack.c.l.b16 %v570
        %v1446 = vunpack.c.h.b16 %v570
        %v1447 = vunpack.c.l.b16 %v571
        %v1448 = vunpack.c.h.b16 %v571
        %v1449 = vunpack.c.l.b16 %v572
        %v1450 = vunpack.c.h.b16 %v572
        %v1451 = vunpack.c.l.b16 %v573
        %v1452 = vunpack.c.h.b16 %v573
        %v1453 = vunpack.c.l.b16 %v574
        %v1454 = vunpack.c.h.b16 %v574
        %v1455 = vunpack.c.l.b16 %v575
        %v1456 = vunpack.c.h.b16 %v575
        %v1457 = vunpack.c.l.b16 %v576
        %v1458 = vunpack.c.h.b16 %v576
        %v1459 = vunpack.c.l.b16 %v577
        %v1460 = vunpack.c.h.b16 %v577
        %v1461 = vunpack.c.l.b16 %v578
        %v1462 = vunpack.c.h.b16 %v578
        %v1463 = vpack.c.b16 %v953, %v951
        %v1464 = vpack.c.b16 %v954, %v952
        %v1465 = vpack.c.b16 %v957, %v955
        %v1466 = vpack.c.b16 %v958, %v956
        %v1467 = vpack.c.b16 %v961, %v959
        %v1468 = vpack.c.b16 %v962, %v960
        %v1469 = vpack.c.b16 %v965, %v963
        %v1470 = vpack.c.b16 %v966, %v964
        %v1471 = vpack.c.b16 %v969, %v967
        %v1472 = vpack.c.b16 %v970, %v968
        %v1473 = vpack.c.b16 %v973, %v971
        %v1474 = vpack.c.b16 %v974, %v972
        %v1475 = vpack.c.b16 %v977, %v975
        %v1476 = vpack.c.b16 %v978, %v976
        %v1477 = vpack.c.b16 %v981, %v979
        %v1478 = vpack.c.b16 %v982, %v980
        %v1479 = vpack.c.b16 %v985, %v983
        %v1480 = vpack.c.b16 %v986, %v984
        %v1481 = vpack.c.b16 %v989, %v987
        %v1482 = vpack.c.b16 %v990, %v988
        %v1483 = vpack.c.b16 %v993, %v991
        %v1484 = vpack.c.b16 %v994, %v992
        %v1485 = vpack.c.b16 %v997, %v995
        %v1486 = vpack.c.b16 %v998, %v996
        %v1487 = vpack.c.b16 %v1001, %v999
        %v1488 = vpack.c.b16 %v1002, %v1000
        %v1489 = vpack.c.b16 %v1005, %v1003
        %v1490 = vpack.c.b16 %v1006, %v1004
        %v1491 = vpack.c.b16 %v1009, %v1007
        %v1492 = vpack.c.b16 %v1010, %v1008
        %v1493 = vpack.c.b16 %v1013, %v1011
        %v1494 = vpack.c.b16 %v1014, %v1012
        %v1495 = vpack.c.b16 %v1017, %v1015
        %v1496 = vpack.c.b16 %v1018, %v1016
        %v1497 = vpack.c.b16 %v1021, %v1019
        %v1498 = vpack.c.b16 %v1022, %v1020
        %v1499 = vpack.c.b16 %v1025, %v1023
        %v1500 = vpack.c.b16 %v1026, %v1024
        %v1501 = vpack.c.b16 %v1029, %v1027
        %v1502 = vpack.c.b16 %v1030, %v1028
        %v1503 = vpack.c.b16 %v1033, %v1031
        %v1504 = vpack.c.b16 %v1034, %v1032
        %v1505 = vpack.c.b16 %v1037, %v1035
        %v1506 = vpack.c.b16 %v1038, %v1036
        %v1507 = vpack.c.b16 %v1041, %v1039
        %v1508 = vpack.c.b16 %v1042, %v1040
        %v1509 = vpack.c.b16 %v1045, %v1043
        %v1510 = vpack.c.b16 %v1046, %v1044
        %v1511 = vpack.c.b16 %v1049, %v1047
        %v1512 = vpack.c.b16 %v1050, %v1048
        %v1513 = vpack.c.b16 %v1053, %v1051
        %v1514 = vpack.c.b16 %v1054, %v1052
        %v1515 = vpack.c.b16 %v1057, %v1055
        %v1516 = vpack.c.b16 %v1058, %v1056
        %v1517 = vpack.c.b16 %v1061, %v1059
        %v1518 = vpack.c.b16 %v1062, %v1060
        %v1519 = vpack.c.b16 %v1065, %v1063
        %v1520 = vpack.c.b16 %v1066, %v1064
        %v1521 = vpack.c.b16 %v1069, %v1067
        %v1522 = vpack.c.b16 %v1070, %v1068
        %v1523 = vpack.c.b16 %v1073, %v1071
        %v1524 = vpack.c.b16 %v1074, %v1072
        %v1525 = vpack.c.b16 %v1077, %v1075
        %v1526 = vpack.c.b16 %v1078, %v1076
        %v1527 = vpack.c.b16 %v1081, %v1079
        %v1528 = vpack.c.b16 %v1082, %v1080
        %v1529 = vpack.c.b16 %v1085, %v1083
        %v1530 = vpack.c.b16 %v1086, %v1084
        %v1531 = vpack.c.b16 %v1089, %v1087
        %v1532 = vpack.c.b16 %v1090, %v1088
        %v1533 = vpack.c.b16 %v1093, %v1091
        %v1534 = vpack.c.b16 %v1094, %v1092
        %v1535 = vpack.c.b16 %v1097, %v1095
        %v1536 = vpack.c.b16 %v1098, %v1096
        %v1537 = vpack.c.b16 %v1101, %v1099
        %v1538 = vpack.c.b16 %v1102, %v1100
        %v1539 = vpack.c.b16 %v1105, %v1103
        %v1540 = vpack.c.b16 %v1106, %v1104
        %v1541 = vpack.c.b16 %v1109, %v1107
        %v1542 = vpack.c.b16 %v1110, %v1108
        %v1543 = vpack.c.b16 %v1113, %v1111
        %v1544 = vpack.c.b16 %v1114, %v1112
        %v1545 = vpack.c.b16 %v1117, %v1115
        %v1546 = vpack.c.b16 %v1118, %v1116
        %v1547 = vpack.c.b16 %v1121, %v1119
        %v1548 = vpack.c.b16 %v1122, %v1120
        %v1549 = vpack.c.b16 %v1125, %v1123
        %v1550 = vpack.c.b16 %v1126, %v1124
        %v1551 = vpack.c.b16 %v1129, %v1127
        %v1552 = vpack.c.b16 %v1130, %v1128
        %v1553 = vpack.c.b16 %v1133, %v1131
        %v1554 = vpack.c.b16 %v1134, %v1132
        %v1555 = vpack.c.b16 %v1137, %v1135
        %v1556 = vpack.c.b16 %v1138, %v1136
        %v1557 = vpack.c.b16 %v1141, %v1139
        %v1558 = vpack.c.b16 %v1142, %v1140
        %v1559 = vpack.c.b16 %v1145, %v1143
        %v1560 = vpack.c.b16 %v1146, %v1144
        %v1561 = vpack.c.b16 %v1149, %v1147
        %v1562 = vpack.c.b16 %v1150, %v1148
        %v1563 = vpack.c.b16 %v1153, %v1151
        %v1564 = vpack.c.b16 %v1154, %v1152
        %v1565 = vpack.c.b16 %v1157, %v1155
        %v1566 = vpack.c.b16 %v1158, %v1156
        %v1567 = vpack.c.b16 %v1161, %v1159
        %v1568 = vpack.c.b16 %v1162, %v1160
        %v1569 = vpack.c.b16 %v1165, %v1163
        %v1570 = vpack.c.b16 %v1166, %v1164
        %v1571 = vpack.c.b16 %v1169, %v1167
        %v1572 = vpack.c.b16 %v1170, %v1168
        %v1573 = vpack.c.b16 %v1173, %v1171
        %v1574 = vpack.c.b16 %v1174, %v1172
        %v1575 = vpack.c.b16 %v1177, %v1175
        %v1576 = vpack.c.b16 %v1178, %v1176
        %v1577 = vpack.c.b16 %v1181, %v1179
        %v1578 = vpack.c.b16 %v1182, %v1180
        %v1579 = vpack.c.b16 %v1185, %v1183
        %v1580 = vpack.c.b16 %v1186, %v1184
        %v1581 = vpack.c.b16 %v1189, %v1187
        %v1582 = vpack.c.b16 %v1190, %v1188
        %v1583 = vpack.c.b16 %v1193, %v1191
        %v1584 = vpack.c.b16 %v1194, %v1192
        %v1585 = vpack.c.b16 %v1197, %v1195
        %v1586 = vpack.c.b16 %v1198, %v1196
        %v1587 = vpack.c.b16 %v1201, %v1199
        %v1588 = vpack.c.b16 %v1202, %v1200
        %v1589 = vpack.c.b16 %v1205, %v1203
        %v1590 = vpack.c.b16 %v1206, %v1204
        %v1591 = vpack.c.b16 %v1209, %v1207
        %v1592 = vpack.c.b16 %v1210, %v1208
        %v1593 = vpack.c.b16 %v1213, %v1211
        %v1594 = vpack.c.b16 %v1214, %v1212
        %v1595 = vpack.c.b16 %v1217, %v1215
        %v1596 = vpack.c.b16 %v1218, %v1216
        %v1597 = vpack.c.b16 %v1221, %v1219
        %v1598 = vpack.c.b16 %v1222, %v1220
        %v1599 = vpack.c.b16 %v1225, %v1223
        %v1600 = vpack.c.b16 %v1226, %v1224
        %v1601 = vpack.c.b16 %v1229, %v1227
        %v1602 = vpack.c.b16 %v1230, %v1228
        %v1603 = vpack.c.b16 %v1233, %v1231
        %v1604 = vpack.c.b16 %v1234, %v1232
        %v1605 = vpack.c.b16 %v1237, %v1235
        %v1606 = vpack.c.b16 %v1238, %v1236
        %v1607 = vpack.c.b16 %v1241, %v1239
        %v1608 = vpack.c.b16 %v1242, %v1240
        %v1609 = vpack.c.b16 %v1245, %v1243
        %v1610 = vpack.c.b16 %v1246, %v1244
        %v1611 = vpack.c.b16 %v1249, %v1247
        %v1612 = vpack.c.b16 %v1250, %v1248
        %v1613 = vpack.c.b16 %v1253, %v1251
        %v1614 = vpack.c.b16 %v1254, %v1252
        %v1615 = vpack.c.b16 %v1257, %v1255
        %v1616 = vpack.c.b16 %v1258, %v1256
        %v1617 = vpack.c.b16 %v1261, %v1259
        %v1618 = vpack.c.b16 %v1262, %v1260
        %v1619 = vpack.c.b16 %v1265, %v1263
        %v1620 = vpack.c.b16 %v1266, %v1264
        %v1621 = vpack.c.b16 %v1269, %v1267
        %v1622 = vpack.c.b16 %v1270, %v1268
        %v1623 = vpack.c.b16 %v1273, %v1271
        %v1624 = vpack.c.b16 %v1274, %v1272
        %v1625 = vpack.c.b16 %v1277, %v1275
        %v1626 = vpack.c.b16 %v1278, %v1276
        %v1627 = vpack.c.b16 %v1281, %v1279
        %v1628 = vpack.c.b16 %v1282, %v1280
        %v1629 = vpack.c.b16 %v1285, %v1283
        %v1630 = vpack.c.b16 %v1286, %v1284
        %v1631 = vpack.c.b16 %v1289, %v1287
        %v1632 = vpack.c.b16 %v1290, %v1288
        %v1633 = vpack.c.b16 %v1293, %v1291
        %v1634 = vpack.c.b16 %v1294, %v1292
        %v1635 = vpack.c.b16 %v1297, %v1295
        %v1636 = vpack.c.b16 %v1298, %v1296
        %v1637 = vpack.c.b16 %v1301, %v1299
        %v1638 = vpack.c.b16 %v1302, %v1300
        %v1639 = vpack.c.b16 %v1305, %v1303
        %v1640 = vpack.c.b16 %v1306, %v1304
        %v1641 = vpack.c.b16 %v1309, %v1307
        %v1642 = vpack.c.b16 %v1310, %v1308
        %v1643 = vpack.c.b16 %v1313, %v1311
        %v1644 = vpack.c.b16 %v1314, %v1312
        %v1645 = vpack.c.b16 %v1317, %v1315
        %v1646 = vpack.c.b16 %v1318, %v1316
        %v1647 = vpack.c.b16 %v1321, %v1319
        %v1648 = vpack.c.b16 %v1322, %v1320
        %v1649 = vpack.c.b16 %v1325, %v1323
        %v1650 = vpack.c.b16 %v1326, %v1324
        %v1651 = vpack.c.b16 %v1329, %v1327
        %v1652 = vpack.c.b16 %v1330, %v1328
        %v1653 = vpack.c.b16 %v1333, %v1331
        %v1654 = vpack.c.b16 %v1334, %v1332
        %v1655 = vpack.c.b16 %v1337, %v1335
        %v1656 = vpack.c.b16 %v1338, %v1336
        %v1657 = vpack.c.b16 %v1341, %v1339
        %v1658 = vpack.c.b16 %v1342, %v1340
        %v1659 = vpack.c.b16 %v1345, %v1343
        %v1660 = vpack.c.b16 %v1346, %v1344
        %v1661 = vpack.c.b16 %v1349, %v1347
        %v1662 = vpack.c.b16 %v1350, %v1348
        %v1663 = vpack.c.b16 %v1353, %v1351
        %v1664 = vpack.c.b16 %v1354, %v1352
        %v1665 = vpack.c.b16 %v1357, %v1355
        %v1666 = vpack.c.b16 %v1358, %v1356
        %v1667 = vpack.c.b16 %v1361, %v1359
        %v1668 = vpack.c.b16 %v1362, %v1360
        %v1669 = vpack.c.b16 %v1365, %v1363
        %v1670 = vpack.c.b16 %v1366, %v1364
        %v1671 = vpack.c.b16 %v1369, %v1367
        %v1672 = vpack.c.b16 %v1370, %v1368
        %v1673 = vpack.c.b16 %v1373, %v1371
        %v1674 = vpack.c.b16 %v1374, %v1372
        %v1675 = vpack.c.b16 %v1377, %v1375
        %v1676 = vpack.c.b16 %v1378, %v1376
        %v1677 = vpack.c.b16 %v1381, %v1379
        %v1678 = vpack.c.b16 %v1382, %v1380
        %v1679 = vpack.c.b16 %v1385, %v1383
        %v1680 = vpack.c.b16 %v1386, %v1384
        %v1681 = vpack.c.b16 %v1389, %v1387
        %v1682 = vpack.c.b16 %v1390, %v1388
        %v1683 = vpack.c.b16 %v1393, %v1391
        %v1684 = vpack.c.b16 %v1394, %v1392
        %v1685 = vpack.c.b16 %v1397, %v1395
        %v1686 = vpack.c.b16 %v1398, %v1396
        %v1687 = vpack.c.b16 %v1401, %v1399
        %v1688 = vpack.c.b16 %v1402, %v1400
        %v1689 = vpack.c.b16 %v1405, %v1403
        %v1690 = vpack.c.b16 %v1406, %v1404
        %v1691 = vpack.c.b16 %v1409, %v1407
        %v1692 = vpack.c.b16 %v1410, %v1408
        %v1693 = vpack.c.b16 %v1413, %v1411
        %v1694 = vpack.c.b16 %v1414, %v1412
        %v1695 = vpack.c.b16 %v1417, %v1415
        %v1696 = vpack.c.b16 %v1418, %v1416
        %v1697 = vpack.c.b16 %v1421, %v1419
        %v1698 = vpack.c.b16 %v1422, %v1420
        %v1699 = vpack.c.b16 %v1425, %v1423
        %v1700 = vpack.c.b16 %v1426, %v1424
        %v1701 = vpack.c.b16 %v1429, %v1427
        %v1702 = vpack.c.b16 %v1430, %v1428
        %v1703 = vpack.c.b16 %v1433, %v1431
        %v1704 = vpack.c.b16 %v1434, %v1432
        %v1705 = vpack.c.b16 %v1437, %v1435
        %v1706 = vpack.c.b16 %v1438, %v1436
        %v1707 = vpack.c.b16 %v1441, %v1439
        %v1708 = vpack.c.b16 %v1442, %v1440
        %v1709 = vpack.c.b16 %v1445, %v1443
        %v1710 = vpack.c.b16 %v1446, %v1444
        %v1711 = vpack.c.b16 %v1449, %v1447
        %v1712 = vpack.c.b16 %v1450, %v1448
        %v1713 = vpack.c.b16 %v1453, %v1451
        %v1714 = vpack.c.b16 %v1454, %v1452
        %v1715 = vpack.c.b16 %v1457, %v1455
        %v1716 = vpack.c.b16 %v1458, %v1456
        %v1717 = vpack.c.b16 %v1461, %v1459
        %v1718 = vpack.c.b16 %v1462, %v1460
        %1975 = vmatprep.subr.bf16.mxu0 %v1464
        %1976 = vmatpush1.bf16.msra.mxu0 %v1463
        %1977 = vmatprep.subr.bf16.mxu0 %v1466
        %1978 = vmatpush1.bf16.msra.mxu0 %v1465
        %1979 = vmatprep.subr.bf16.mxu0 %v1468
        %1980 = vmatpush1.bf16.msra.mxu0 %v1467
        %1981 = vmatprep.subr.bf16.mxu0 %v1470
        %1982 = vmatpush1.bf16.msra.mxu0 %v1469
        %1983 = vmatprep.subr.bf16.mxu0 %v1472
        %1984 = vmatpush1.bf16.msra.mxu0 %v1471
        %1985 = vmatprep.subr.bf16.mxu0 %v1474
        %1986 = vmatpush1.bf16.msra.mxu0 %v1473
        %1987 = vmatprep.subr.bf16.mxu0 %v1476
        %1988 = vmatpush1.bf16.msra.mxu0 %v1475
        %1989 = vmatprep.subr.bf16.mxu0 %v1478
        %1990 = vmatpush1.bf16.msra.mxu0 %v1477
        %1991 = vmatprep.subr.bf16.mxu0 %v1480
        %1992 = vmatpush1.bf16.msra.mxu0 %v1479
        %1993 = vmatprep.subr.bf16.mxu0 %v1482
        %1994 = vmatpush1.bf16.msra.mxu0 %v1481
        %1995 = vmatprep.subr.bf16.mxu0 %v1484
        %1996 = vmatpush1.bf16.msra.mxu0 %v1483
        %1997 = vmatprep.subr.bf16.mxu0 %v1486
        %1998 = vmatpush1.bf16.msra.mxu0 %v1485
        %1999 = vmatprep.subr.bf16.mxu0 %v1488
        %2000 = vmatpush1.bf16.msra.mxu0 %v1487
        %2001 = vmatprep.subr.bf16.mxu0 %v1490
        %2002 = vmatpush1.bf16.msra.mxu0 %v1489
        %2003 = vmatprep.subr.bf16.mxu0 %v1492
        %2004 = vmatpush1.bf16.msra.mxu0 %v1491
        %2005 = vmatprep.subr.bf16.mxu0 %v1494
        %2006 = vmatpush1.bf16.msra.mxu0 %v1493
        %2007 = vmatprep.mubr.bf16.mxu0 %v618
        %2008 = vmatmul.mubr.bf16.gmra.mrb[0].mxu0 %v604
        %v2009 = vpop.f32.mrb[0].mxu0
        %v2010 = vadd.f32 0.0, %v2009
        %v2011 = vpop.f32.mrb[0].mxu0
        %v2012 = vadd.f32 0.0, %v2011
        %v2013 = vpop.f32.mrb[0].mxu0
        %v2014 = vpop.f32.mrb[0].mxu0
        %2015 = vdwg.mxu0
        %2016 = vmatprep.subr.bf16.mxu0 %v1496
        %2017 = vmatpush1.bf16.msra.mxu0 %v1495
        %2018 = vmatprep.subr.bf16.mxu0 %v1498
        %2019 = vmatpush1.bf16.msra.mxu0 %v1497
        %2020 = vmatprep.subr.bf16.mxu0 %v1500
        %2021 = vmatpush1.bf16.msra.mxu0 %v1499
        %2022 = vmatprep.subr.bf16.mxu0 %v1502
        %2023 = vmatpush1.bf16.msra.mxu0 %v1501
        %2024 = vmatprep.subr.bf16.mxu0 %v1504
        %2025 = vmatpush1.bf16.msra.mxu0 %v1503
        %2026 = vmatprep.subr.bf16.mxu0 %v1506
        %2027 = vmatpush1.bf16.msra.mxu0 %v1505
        %2028 = vmatprep.subr.bf16.mxu0 %v1508
        %2029 = vmatpush1.bf16.msra.mxu0 %v1507
        %2030 = vmatprep.subr.bf16.mxu0 %v1510
        %2031 = vmatpush1.bf16.msra.mxu0 %v1509
        %2032 = vmatprep.subr.bf16.mxu0 %v1512
        %2033 = vmatpush1.bf16.msra.mxu0 %v1511
        %2034 = vmatprep.subr.bf16.mxu0 %v1514
        %2035 = vmatpush1.bf16.msra.mxu0 %v1513
        %2036 = vmatprep.subr.bf16.mxu0 %v1516
        %2037 = vmatpush1.bf16.msra.mxu0 %v1515
        %2038 = vmatprep.subr.bf16.mxu0 %v1518
        %2039 = vmatpush1.bf16.msra.mxu0 %v1517
        %2040 = vmatprep.subr.bf16.mxu0 %v1520
        %2041 = vmatpush1.bf16.msra.mxu0 %v1519
        %2042 = vmatprep.subr.bf16.mxu0 %v1522
        %2043 = vmatpush1.bf16.msra.mxu0 %v1521
        %2044 = vmatprep.subr.bf16.mxu0 %v1524
        %2045 = vmatpush1.bf16.msra.mxu0 %v1523
        %2046 = vmatprep.subr.bf16.mxu0 %v1526
        %2047 = vmatpush1.bf16.msra.mxu0 %v1525
        %2048 = vmatprep.mubr.bf16.mxu0 %v628
        %2049 = vmatmul.mubr.bf16.gmra.mrb[0].mxu0 %v626
        %v2050 = vpop.f32.mrb[0].mxu0
        %v2051 = vadd.f32 %v2010, %v2050
        %v2052 = vpop.f32.mrb[0].mxu0
        %v2053 = vadd.f32 %v2012, %v2052
        %v2054 = vpop.f32.mrb[0].mxu0
        %v2055 = vpop.f32.mrb[0].mxu0
        %2056 = vdwg.mxu0
        %2057 = vmatprep.subr.bf16.mxu0 %v1528
        %2058 = vmatpush1.bf16.msra.mxu0 %v1527
        %2059 = vmatprep.subr.bf16.mxu0 %v1530
        %2060 = vmatpush1.bf16.msra.mxu0 %v1529
        %2061 = vmatprep.subr.bf16.mxu0 %v1532
        %2062 = vmatpush1.bf16.msra.mxu0 %v1531
        %2063 = vmatprep.subr.bf16.mxu0 %v1534
        %2064 = vmatpush1.bf16.msra.mxu0 %v1533
        %2065 = vmatprep.subr.bf16.mxu0 %v1536
        %2066 = vmatpush1.bf16.msra.mxu0 %v1535
        %2067 = vmatprep.subr.bf16.mxu0 %v1538
        %2068 = vmatpush1.bf16.msra.mxu0 %v1537
        %2069 = vmatprep.subr.bf16.mxu0 %v1540
        %2070 = vmatpush1.bf16.msra.mxu0 %v1539
        %2071 = vmatprep.subr.bf16.mxu0 %v1542
        %2072 = vmatpush1.bf16.msra.mxu0 %v1541
        %2073 = vmatprep.subr.bf16.mxu0 %v1544
        %2074 = vmatpush1.bf16.msra.mxu0 %v1543
        %2075 = vmatprep.subr.bf16.mxu0 %v1546
        %2076 = vmatpush1.bf16.msra.mxu0 %v1545
        %2077 = vmatprep.subr.bf16.mxu0 %v1548
        %2078 = vmatpush1.bf16.msra.mxu0 %v1547
        %2079 = vmatprep.subr.bf16.mxu0 %v1550
        %2080 = vmatpush1.bf16.msra.mxu0 %v1549
        %2081 = vmatprep.subr.bf16.mxu0 %v1552
        %2082 = vmatpush1.bf16.msra.mxu0 %v1551
        %2083 = vmatprep.subr.bf16.mxu0 %v1554
        %2084 = vmatpush1.bf16.msra.mxu0 %v1553
        %2085 = vmatprep.subr.bf16.mxu0 %v1556
        %2086 = vmatpush1.bf16.msra.mxu0 %v1555
        %2087 = vmatprep.subr.bf16.mxu0 %v1558
        %2088 = vmatpush1.bf16.msra.mxu0 %v1557
        %2089 = vmatprep.mubr.bf16.mxu0 %v625
        %2090 = vmatmul.mubr.bf16.gmra.mrb[0].mxu0 %v611
        %v2091 = vpop.f32.mrb[0].mxu0
        %v2092 = vadd.f32 %v2051, %v2091
        %v2093 = vpop.f32.mrb[0].mxu0
        %v2094 = vadd.f32 %v2053, %v2093
        %v2095 = vpop.f32.mrb[0].mxu0
        %v2096 = vpop.f32.mrb[0].mxu0
        %2097 = vdwg.mxu0
        %2098 = vmatprep.subr.bf16.mxu0 %v1560
        %2099 = vmatpush1.bf16.msra.mxu0 %v1559
        %2100 = vmatprep.subr.bf16.mxu0 %v1562
        %2101 = vmatpush1.bf16.msra.mxu0 %v1561
        %2102 = vmatprep.subr.bf16.mxu0 %v1564
        %2103 = vmatpush1.bf16.msra.mxu0 %v1563
        %2104 = vmatprep.subr.bf16.mxu0 %v1566
        %2105 = vmatpush1.bf16.msra.mxu0 %v1565
        %2106 = vmatprep.subr.bf16.mxu0 %v1568
        %2107 = vmatpush1.bf16.msra.mxu0 %v1567
        %2108 = vmatprep.subr.bf16.mxu0 %v1570
        %2109 = vmatpush1.bf16.msra.mxu0 %v1569
        %2110 = vmatprep.subr.bf16.mxu0 %v1572
        %2111 = vmatpush1.bf16.msra.mxu0 %v1571
        %2112 = vmatprep.subr.bf16.mxu0 %v1574
        %2113 = vmatpush1.bf16.msra.mxu0 %v1573
        %2114 = vmatprep.subr.bf16.mxu0 %v1576
        %2115 = vmatpush1.bf16.msra.mxu0 %v1575
        %2116 = vmatprep.subr.bf16.mxu0 %v1578
        %2117 = vmatpush1.bf16.msra.mxu0 %v1577
        %2118 = vmatprep.subr.bf16.mxu0 %v1580
        %2119 = vmatpush1.bf16.msra.mxu0 %v1579
        %2120 = vmatprep.subr.bf16.mxu0 %v1582
        %2121 = vmatpush1.bf16.msra.mxu0 %v1581
        %2122 = vmatprep.subr.bf16.mxu0 %v1584
        %2123 = vmatpush1.bf16.msra.mxu0 %v1583
        %2124 = vmatprep.subr.bf16.mxu0 %v1586
        %2125 = vmatpush1.bf16.msra.mxu0 %v1585
        %2126 = vmatprep.subr.bf16.mxu0 %v1588
        %2127 = vmatpush1.bf16.msra.mxu0 %v1587
        %2128 = vmatprep.subr.bf16.mxu0 %v1590
        %2129 = vmatpush1.bf16.msra.mxu0 %v1589
        %2130 = vmatprep.mubr.bf16.mxu0 %v629
        %2131 = vmatmul.mubr.bf16.gmra.mrb[0].mxu0 %v627
        %v2132 = vpop.f32.mrb[0].mxu0
        %v2133 = vadd.f32 %v2092, %v2132
        %v2134 = vpop.f32.mrb[0].mxu0
        %v2135 = vadd.f32 %v2094, %v2134
        %v2136 = vpop.f32.mrb[0].mxu0
        %v2137 = vpop.f32.mrb[0].mxu0
        %2138 = vdwg.mxu0
        %2139 = vmatprep.subr.bf16.mxu0 %v1592
        %2140 = vmatpush1.bf16.msra.mxu0 %v1591
        %2141 = vmatprep.subr.bf16.mxu0 %v1594
        %2142 = vmatpush1.bf16.msra.mxu0 %v1593
        %2143 = vmatprep.subr.bf16.mxu0 %v1596
        %2144 = vmatpush1.bf16.msra.mxu0 %v1595
        %2145 = vmatprep.subr.bf16.mxu0 %v1598
        %2146 = vmatpush1.bf16.msra.mxu0 %v1597
        %2147 = vmatprep.subr.bf16.mxu0 %v1600
        %2148 = vmatpush1.bf16.msra.mxu0 %v1599
        %2149 = vmatprep.subr.bf16.mxu0 %v1602
        %2150 = vmatpush1.bf16.msra.mxu0 %v1601
        %2151 = vmatprep.subr.bf16.mxu0 %v1604
        %2152 = vmatpush1.bf16.msra.mxu0 %v1603
        %2153 = vmatprep.subr.bf16.mxu0 %v1606
        %2154 = vmatpush1.bf16.msra.mxu0 %v1605
        %2155 = vmatprep.subr.bf16.mxu0 %v1608
        %2156 = vmatpush1.bf16.msra.mxu0 %v1607
        %2157 = vmatprep.subr.bf16.mxu0 %v1610
        %2158 = vmatpush1.bf16.msra.mxu0 %v1609
        %2159 = vmatprep.subr.bf16.mxu0 %v1612
        %2160 = vmatpush1.bf16.msra.mxu0 %v1611
        %2161 = vmatprep.subr.bf16.mxu0 %v1614
        %2162 = vmatpush1.bf16.msra.mxu0 %v1613
        %2163 = vmatprep.subr.bf16.mxu0 %v1616
        %2164 = vmatpush1.bf16.msra.mxu0 %v1615
        %2165 = vmatprep.subr.bf16.mxu0 %v1618
        %2166 = vmatpush1.bf16.msra.mxu0 %v1617
        %2167 = vmatprep.subr.bf16.mxu0 %v1620
        %2168 = vmatpush1.bf16.msra.mxu0 %v1619
        %2169 = vmatprep.subr.bf16.mxu0 %v1622
        %2170 = vmatpush1.bf16.msra.mxu0 %v1621
        %2171 = vmatprep.mubr.bf16.mxu0 %v667
        %2172 = vmatmul.mubr.bf16.gmra.mrb[0].mxu0 %v653
        %v2173 = vpop.f32.mrb[0].mxu0
        %v2174 = vadd.f32 %v2133, %v2173
        %v2175 = vpop.f32.mrb[0].mxu0
        %v2176 = vadd.f32 %v2135, %v2175
        %v2177 = vpop.f32.mrb[0].mxu0
        %v2178 = vpop.f32.mrb[0].mxu0
        %2179 = vdwg.mxu0
        %2180 = vmatprep.subr.bf16.mxu0 %v1624
        %2181 = vmatpush1.bf16.msra.mxu0 %v1623
        %2182 = vmatprep.subr.bf16.mxu0 %v1626
        %2183 = vmatpush1.bf16.msra.mxu0 %v1625
        %2184 = vmatprep.subr.bf16.mxu0 %v1628
        %2185 = vmatpush1.bf16.msra.mxu0 %v1627
        %2186 = vmatprep.subr.bf16.mxu0 %v1630
        %2187 = vmatpush1.bf16.msra.mxu0 %v1629
        %2188 = vmatprep.subr.bf16.mxu0 %v1632
        %2189 = vmatpush1.bf16.msra.mxu0 %v1631
        %2190 = vmatprep.subr.bf16.mxu0 %v1634
        %2191 = vmatpush1.bf16.msra.mxu0 %v1633
        %2192 = vmatprep.subr.bf16.mxu0 %v1636
        %2193 = vmatpush1.bf16.msra.mxu0 %v1635
        %2194 = vmatprep.subr.bf16.mxu0 %v1638
        %2195 = vmatpush1.bf16.msra.mxu0 %v1637
        %2196 = vmatprep.subr.bf16.mxu0 %v1640
        %2197 = vmatpush1.bf16.msra.mxu0 %v1639
        %2198 = vmatprep.subr.bf16.mxu0 %v1642
        %2199 = vmatpush1.bf16.msra.mxu0 %v1641
        %2200 = vmatprep.subr.bf16.mxu0 %v1644
        %2201 = vmatpush1.bf16.msra.mxu0 %v1643
        %2202 = vmatprep.subr.bf16.mxu0 %v1646
        %2203 = vmatpush1.bf16.msra.mxu0 %v1645
        %2204 = vmatprep.subr.bf16.mxu0 %v1648
        %2205 = vmatpush1.bf16.msra.mxu0 %v1647
        %2206 = vmatprep.subr.bf16.mxu0 %v1650
        %2207 = vmatpush1.bf16.msra.mxu0 %v1649
        %2208 = vmatprep.subr.bf16.mxu0 %v1652
        %2209 = vmatpush1.bf16.msra.mxu0 %v1651
        %2210 = vmatprep.subr.bf16.mxu0 %v1654
        %2211 = vmatpush1.bf16.msra.mxu0 %v1653
        %2212 = vmatprep.mubr.bf16.mxu0 %v677
        %2213 = vmatmul.mubr.bf16.gmra.mrb[0].mxu0 %v675
        %v2214 = vpop.f32.mrb[0].mxu0
        %v2215 = vadd.f32 %v2174, %v2214
        %v2216 = vpop.f32.mrb[0].mxu0
        %v2217 = vadd.f32 %v2176, %v2216
        %v2218 = vpop.f32.mrb[0].mxu0
        %v2219 = vpop.f32.mrb[0].mxu0
        %2220 = vdwg.mxu0
        %2221 = vmatprep.subr.bf16.mxu0 %v1656
        %2222 = vmatpush1.bf16.msra.mxu0 %v1655
        %2223 = vmatprep.subr.bf16.mxu0 %v1658
        %2224 = vmatpush1.bf16.msra.mxu0 %v1657
        %2225 = vmatprep.subr.bf16.mxu0 %v1660
        %2226 = vmatpush1.bf16.msra.mxu0 %v1659
        %2227 = vmatprep.subr.bf16.mxu0 %v1662
        %2228 = vmatpush1.bf16.msra.mxu0 %v1661
        %2229 = vmatprep.subr.bf16.mxu0 %v1664
        %2230 = vmatpush1.bf16.msra.mxu0 %v1663
        %2231 = vmatprep.subr.bf16.mxu0 %v1666
        %2232 = vmatpush1.bf16.msra.mxu0 %v1665
        %2233 = vmatprep.subr.bf16.mxu0 %v1668
        %2234 = vmatpush1.bf16.msra.mxu0 %v1667
        %2235 = vmatprep.subr.bf16.mxu0 %v1670
        %2236 = vmatpush1.bf16.msra.mxu0 %v1669
        %2237 = vmatprep.subr.bf16.mxu0 %v1672
        %2238 = vmatpush1.bf16.msra.mxu0 %v1671
        %2239 = vmatprep.subr.bf16.mxu0 %v1674
        %2240 = vmatpush1.bf16.msra.mxu0 %v1673
        %2241 = vmatprep.subr.bf16.mxu0 %v1676
        %2242 = vmatpush1.bf16.msra.mxu0 %v1675
        %2243 = vmatprep.subr.bf16.mxu0 %v1678
        %2244 = vmatpush1.bf16.msra.mxu0 %v1677
        %2245 = vmatprep.subr.bf16.mxu0 %v1680
        %2246 = vmatpush1.bf16.msra.mxu0 %v1679
        %2247 = vmatprep.subr.bf16.mxu0 %v1682
        %2248 = vmatpush1.bf16.msra.mxu0 %v1681
        %2249 = vmatprep.subr.bf16.mxu0 %v1684
        %2250 = vmatpush1.bf16.msra.mxu0 %v1683
        %2251 = vmatprep.subr.bf16.mxu0 %v1686
        %2252 = vmatpush1.bf16.msra.mxu0 %v1685
        %2253 = vmatprep.mubr.bf16.mxu0 %v674
        %2254 = vmatmul.mubr.bf16.gmra.mrb[0].mxu0 %v660
        %v2255 = vpop.f32.mrb[0].mxu0
        %v2256 = vadd.f32 %v2215, %v2255
        %v2257 = vpop.f32.mrb[0].mxu0
        %v2258 = vadd.f32 %v2217, %v2257
        %v2259 = vpop.f32.mrb[0].mxu0
        %v2260 = vpop.f32.mrb[0].mxu0
        %2261 = vdwg.mxu0
        %2262 = vmatprep.subr.bf16.mxu0 %v1688
        %2263 = vmatpush1.bf16.msra.mxu0 %v1687
        %2264 = vmatprep.subr.bf16.mxu0 %v1690
        %2265 = vmatpush1.bf16.msra.mxu0 %v1689
        %2266 = vmatprep.subr.bf16.mxu0 %v1692
        %2267 = vmatpush1.bf16.msra.mxu0 %v1691
        %2268 = vmatprep.subr.bf16.mxu0 %v1694
        %2269 = vmatpush1.bf16.msra.mxu0 %v1693
        %2270 = vmatprep.subr.bf16.mxu0 %v1696
        %2271 = vmatpush1.bf16.msra.mxu0 %v1695
        %2272 = vmatprep.subr.bf16.mxu0 %v1698
        %2273 = vmatpush1.bf16.msra.mxu0 %v1697
        %2274 = vmatprep.subr.bf16.mxu0 %v1700
        %2275 = vmatpush1.bf16.msra.mxu0 %v1699
        %2276 = vmatprep.subr.bf16.mxu0 %v1702
        %2277 = vmatpush1.bf16.msra.mxu0 %v1701
        %2278 = vmatprep.subr.bf16.mxu0 %v1704
        %2279 = vmatpush1.bf16.msra.mxu0 %v1703
        %2280 = vmatprep.subr.bf16.mxu0 %v1706
        %2281 = vmatpush1.bf16.msra.mxu0 %v1705
        %2282 = vmatprep.subr.bf16.mxu0 %v1708
        %2283 = vmatpush1.bf16.msra.mxu0 %v1707
        %2284 = vmatprep.subr.bf16.mxu0 %v1710
        %2285 = vmatpush1.bf16.msra.mxu0 %v1709
        %2286 = vmatprep.subr.bf16.mxu0 %v1712
        %2287 = vmatpush1.bf16.msra.mxu0 %v1711
        %2288 = vmatprep.subr.bf16.mxu0 %v1714
        %2289 = vmatpush1.bf16.msra.mxu0 %v1713
        %2290 = vmatprep.subr.bf16.mxu0 %v1716
        %2291 = vmatpush1.bf16.msra.mxu0 %v1715
        %2292 = vmatprep.subr.bf16.mxu0 %v1718
        %2293 = vmatpush1.bf16.msra.mxu0 %v1717
        %2294 = vmatprep.mubr.bf16.mxu0 %v678
        %2295 = vmatmul.mubr.bf16.gmra.mrb[0].mxu0 %v676
        %v2296 = vpop.f32.mrb[0].mxu0
        %v2297 = vadd.f32 %v2256, %v2296
        %v2298 = vpop.f32.mrb[0].mxu0
        %v2299 = vadd.f32 %v2258, %v2298
        %v2300 = vpop.f32.mrb[0].mxu0
        %v2301 = vpop.f32.mrb[0].mxu0
        %2302 = vdwg.mxu0
        %v2305 = vcombine.low %v2297, %v2299
        %v2307 = vunpack.c.l.s4 1983009808
        %v2308 = vunpack.c.0.s8 %v2307
        %v2309 = vlaneseq
        %v2310 = vshrl.u32 %v2309, 7
        %v2311 = vsub.s32 %v2308, %v2310
        %v2312 = vrot.slane %v2305, %v2311
        %v2314 = vadd.f32 %v320, %v2312
        %2315 = vst [vmem:[#allocation2] sm:$0xf] %v2314
        %p2316 = scmp.eq.s32.totalorder %s26, 3
        // Predicated region
        $region49: #{_forward.3} parent=35 // pred_check
          %p2317 = pneg %p2316
        $region50: #{_forward.3} parent=35 // pred_check_branch
          %2319 = sbr.rel (%p2317) target = $region52
        $region51: #{_forward.3} parent=35 // pred_region
          %v2320 = vld [vmem:[#allocation2] sm:$0xf]
          %v2321 = vld [vmem:[%s259] sm:$0x3]
          %v2323 = vlaneseq
          %v2324 = vshrl.u32 %v2323, 7
          %v2325 = vsub.s32 0, %v2324
          %v2326 = vrot.slane %v2321, %v2325
          %v2327 = vlaneseq
          %v2328 = vshrl.u32 %v2327, 7
          %v2329 = vsub.s32 1, %v2328
          %v2330 = vrot.slane %v2321, %v2329
          %v2331 = vcombine.low %v2326, %v2330
          %v2333 = vunpack.c.l.s4 1983009808
          %v2334 = vunpack.c.0.s8 %v2333
          %v2335 = vlaneseq
          %v2336 = vshrl.u32 %v2335, 7
          %v2337 = vsub.s32 %v2334, %v2336
          %v2338 = vrot.slane %v2331, %v2337
          %v2340 = vadd.f32 %v2320, %v2338
          %v2341 = vmax.f32 %v2340, 0.0
          %v2342 = vld [vmem:[%s309] sm:$0xff]
          %v2343 = vld [vmem:[%s309 + $0x8] sm:$0xff]
          %v2344 = vld [vmem:[%s309 + $0x10] sm:$0xff]
          %v2345 = vld [vmem:[%s309 + $0x18] sm:$0xff]
          %v2346 = vld [vmem:[%s309 + $0x20] sm:$0xff]
          %v2347 = vld [vmem:[%s309 + $0x28] sm:$0xff]
          %v2348 = vld [vmem:[%s309 + $0x30] sm:$0xff]
          %v2349 = vld [vmem:[%s309 + $0x38] sm:$0xff]
          %v2350 = vld [vmem:[%s309 + $0x40] sm:$0xff]
          %v2351 = vld [vmem:[%s309 + $0x48] sm:$0xff]
          %v2352 = vld [vmem:[%s309 + $0x50] sm:$0xff]
          %v2353 = vld [vmem:[%s309 + $0x58] sm:$0xff]
          %v2354 = vld [vmem:[%s309 + $0x60] sm:$0xff]
          %v2355 = vld [vmem:[%s309 + $0x68] sm:$0xff]
          %v2356 = vld [vmem:[%s309 + $0x70] sm:$0xff]
          %v2357 = vld [vmem:[%s309 + $0x78] sm:$0xff]
          %v2358 = vld [vmem:[%s309 + $0x80] sm:$0xff]
          %v2359 = vld [vmem:[%s309 + $0x88] sm:$0xff]
          %v2360 = vld [vmem:[%s309 + $0x90] sm:$0xff]
          %v2361 = vld [vmem:[%s309 + $0x98] sm:$0xff]
          %v2362 = vld [vmem:[%s309 + $0xa0] sm:$0xff]
          %v2363 = vld [vmem:[%s309 + $0xa8] sm:$0xff]
          %v2364 = vld [vmem:[%s309 + $0xb0] sm:$0xff]
          %v2365 = vld [vmem:[%s309 + $0xb8] sm:$0xff]
          %v2366 = vld [vmem:[%s309 + $0xc0] sm:$0xff]
          %v2367 = vld [vmem:[%s309 + $0xc8] sm:$0xff]
          %v2368 = vld [vmem:[%s309 + $0xd0] sm:$0xff]
          %v2369 = vld [vmem:[%s309 + $0xd8] sm:$0xff]
          %v2370 = vld [vmem:[%s309 + $0xe0] sm:$0xff]
          %v2371 = vld [vmem:[%s309 + $0xe8] sm:$0xff]
          %v2372 = vld [vmem:[%s309 + $0xf0] sm:$0xff]
          %v2373 = vld [vmem:[%s309 + $0xf8] sm:$0xff]
          %v2376 = vunpack.c.l.s4 1983009808
          %v2377 = vunpack.c.0.s8 %v2376
          %v2378 = vlaneseq
          %v2379 = vshrl.u32 %v2378, 7
          %v2380 = vsub.s32 %v2377, %v2379
          %v2381 = vrot.slane %v2341, %v2380
          %v2382 = vcombine.high %v2381, %v2381
          %2385 = vmatprep.subr.mxu0 0.0
          %2386 = vmatpush1.msra.mxu0 %v2342
          %2387 = vmatprep.subr.mxu0 0.0
          %2388 = vmatpush1.msra.mxu0 %v2343
          %2389 = vmatprep.subr.mxu0 0.0
          %2390 = vmatpush1.msra.mxu0 %v2344
          %2391 = vmatprep.subr.mxu0 0.0
          %2392 = vmatpush1.msra.mxu0 %v2345
          %2393 = vmatprep.subr.mxu0 0.0
          %2394 = vmatpush1.msra.mxu0 %v2346
          %2395 = vmatprep.subr.mxu0 0.0
          %2396 = vmatpush1.msra.mxu0 %v2347
          %2397 = vmatprep.subr.mxu0 0.0
          %2398 = vmatpush1.msra.mxu0 %v2348
          %2399 = vmatprep.subr.mxu0 0.0
          %2400 = vmatpush1.msra.mxu0 %v2349
          %2401 = vmatprep.subr.mxu0 0.0
          %2402 = vmatpush1.msra.mxu0 %v2350
          %2403 = vmatprep.subr.mxu0 0.0
          %2404 = vmatpush1.msra.mxu0 %v2351
          %2405 = vmatprep.subr.mxu0 0.0
          %2406 = vmatpush1.msra.mxu0 %v2352
          %2407 = vmatprep.subr.mxu0 0.0
          %2408 = vmatpush1.msra.mxu0 %v2353
          %2409 = vmatprep.subr.mxu0 0.0
          %2410 = vmatpush1.msra.mxu0 %v2354
          %2411 = vmatprep.subr.mxu0 0.0
          %2412 = vmatpush1.msra.mxu0 %v2355
          %2413 = vmatprep.subr.mxu0 0.0
          %2414 = vmatpush1.msra.mxu0 %v2356
          %2415 = vmatprep.subr.mxu0 0.0
          %2416 = vmatpush1.msra.mxu0 %v2357
          %2417 = vmatprep.subr.mxu0 0.0
          %2418 = vmatpush1.msra.mxu0 %v2358
          %2419 = vmatprep.subr.mxu0 0.0
          %2420 = vmatpush1.msra.mxu0 %v2359
          %2421 = vmatprep.subr.mxu0 0.0
          %2422 = vmatpush1.msra.mxu0 %v2360
          %2423 = vmatprep.subr.mxu0 0.0
          %2424 = vmatpush1.msra.mxu0 %v2361
          %2425 = vmatprep.subr.mxu0 0.0
          %2426 = vmatpush1.msra.mxu0 %v2362
          %2427 = vmatprep.subr.mxu0 0.0
          %2428 = vmatpush1.msra.mxu0 %v2363
          %2429 = vmatprep.subr.mxu0 0.0
          %2430 = vmatpush1.msra.mxu0 %v2364
          %2431 = vmatprep.subr.mxu0 0.0
          %2432 = vmatpush1.msra.mxu0 %v2365
          %2433 = vmatprep.subr.mxu0 0.0
          %2434 = vmatpush1.msra.mxu0 %v2366
          %2435 = vmatprep.subr.mxu0 0.0
          %2436 = vmatpush1.msra.mxu0 %v2367
          %2437 = vmatprep.subr.mxu0 0.0
          %2438 = vmatpush1.msra.mxu0 %v2368
          %2439 = vmatprep.subr.mxu0 0.0
          %2440 = vmatpush1.msra.mxu0 %v2369
          %2441 = vmatprep.subr.mxu0 0.0
          %2442 = vmatpush1.msra.mxu0 %v2370
          %2443 = vmatprep.subr.mxu0 0.0
          %2444 = vmatpush1.msra.mxu0 %v2371
          %2445 = vmatprep.subr.mxu0 0.0
          %2446 = vmatpush1.msra.mxu0 %v2372
          %2447 = vmatprep.subr.mxu0 0.0
          %2448 = vmatpush1.msra.mxu0 %v2373
          %2449 = vmatprep.mubr.f32.mxu0 %v2382
          %2450 = vmatmul.mubr.f32.gmra.mrb[0].mxu0 %v2381
          %v2451 = vpop.f32.mrb[0].mxu0
          %v2452 = vadd.f32 0.0, %v2451
          %v2453 = vpop.f32.mrb[0].mxu0
          %2454 = vdwg.mxu0
          %vm2455 = vcmask 41984
          %2456 = vst.msk [vmem:[%s314] sm:$0x3] %vm2455, %v2452
        $region52: #{_forward.3} parent=35 // pred_fallthru
          _
        %p2457 = scmp.lt.s32.totalorder %s25, 1
        %s2458 = scalar_select %p2457, %s25, 1
        %s2459 = smul.addr %s2458, 2
        %s2460 = scalar_lea.vmem %s4, %s2459
        // Predicated region
        $region53: #{_forward.3} parent=35 // pred_check
          %p2461 = pneg %p157
        $region54: #{_forward.3} parent=35 // pred_check_branch
          %2463 = sbr.rel (%p2461) target = $region56
        $region55: #{_forward.3} parent=35 // pred_region
          _
        $region56: #{_forward.3} parent=35 // pred_fallthru
          _
      $region36: #{_forward.3} parent=5 // pred_fallthru
        _
      %p2464 = scmp.le.s32.totalorder 2, %s16
      // Predicated region
      $region57: #{_forward.3} parent=5 // pred_check
        %p2465 = pneg %p2464
      $region58: #{_forward.3} parent=5 // pred_check_branch
        %2467 = sbr.rel (%p2465) target = $region60
      $region59: #{_forward.3} parent=5 // pred_region
        %s2468 = ssub.s32 %s16, 2
        // Predicated region
        $region61: #{_forward.3} parent=59 // pred_check
          %p2469 = pneg %p163
        $region62: #{_forward.3} parent=59 // pred_check_branch
          %2471 = sbr.rel (%p2469) target = $region64
        $region63: #{_forward.3} parent=59 // pred_region
          %p2472 = scmp.lt.s32.totalorder %s27, 1
          %s2473 = scalar_select %p2472, %s27, 1
          %s2474 = smul.addr %s2473, 2
          %s2475 = scalar_lea.vmem %s4, %s2474
        $region64: #{_forward.3} parent=59 // pred_fallthru
          _
      $region60: #{_forward.3} parent=5 // pred_fallthru
        _
    $region6: #{_forward.3} parent=1 // loop_footer
      %s20 = sadd.s32 1, %s16
    $region7: #{_forward.3} parent=1 // loop_footer_branch
      %15 = sbr.rel target = $region3
    $region8: #{_forward.3} parent=1 // loop_exit
      _
    %2476 = vsyncpa [#allocation4], 1
    %s2477 = scalar_lea.sflag [#allocation4], 1
    %2478 = vsyncpa %s2477, 1
    %2479 = vsyncpa [#allocation6], 1
    %s2480 = scalar_lea.sflag [#allocation6], 1
    %2481 = vsyncpa %s2480, 1

// kernel: _forward.2
$region0: #{_forward.2}
  #allocation0 [shape = 'u32[]', space=smem, size = 0x4, offset = 0x4, fixed_abs, tag = 'smem constant byte address 0x4 - core index']
  #allocation1 [shape = 'u32[144,128]{1,0:T(1,128)}', space=vmem, size = 0x12000, scoped, tag = 'internal scratch']
  #allocation2 [shape = 'f32[18,18,4]{2,1,0:T(8,128)}', space=vmem, size = 0x36000, scoped, tag = 'scratch operand']
  #allocation3 [shape = 'f32[18,18,16]{2,1,0:T(8,128)}', space=vmem, size = 0x36000, scoped, tag = 'scratch operand']
  %s0 = inlined_call_operand.vmem [shape: f32[2,16,16,4], index: 0, kind: input, shape index: {}]
  %s1 = inlined_call_operand.vmem [shape: f32[36,16], index: 1, kind: input, shape index: {}]
  %s2 = inlined_call_operand.hbm [shape: f32[1,16], index: 2, kind: input, shape index: {}]
  %s3 = inlined_call_operand.vmem [shape: f32[144,32], index: 3, kind: input, shape index: {}]
  %s4 = inlined_call_operand.hbm [shape: f32[1,32], index: 4, kind: input, shape index: {}]
  %s5 = inlined_call_operand.vmem [shape: bf16[2,32,256], index: 5, kind: output, shape index: {}]
  %s6 = sld [smem:[#allocation0]]
  $region61: #{_forward.2} parent=0
    _
  %s8 = ssub.s32 1, %s6
  %s9 = scalar_select 0, %s8, %s6
  $region1: #{_forward.2} parent=0
    #allocation4 [shape = 'u8[512]{0}', space=vmem, size = 0x400, scoped, tag = 'input window, operand 2, single buffered']
    #allocation5 [shape = 's32[2]{0}', space=sflag, size = 0x8, scoped, tag = 'scoped memory for _forward.2']
    #allocation6 [shape = 'u8[512]{0}', space=vmem, size = 0x400, scoped, tag = 'input window, operand 4, single buffered']
    #allocation7 [shape = 's32[1]{0}', space=sflag, size = 0x4, scoped, tag = 'scoped memory for _forward.2']
    %10 = vsyncpa [#allocation5], 0
    %11 = vsyncpa [#allocation7], 0
    loop: start=0, step=1, limit=4
    $region2: #{_forward.2} parent=1 // loop_pre_header
      _
    $region3: #{_forward.2} parent=1 // loop_header
      %s13 = sphi 0, %s17
      %p14 = scmp.ge.s32.totalorder %s13, 4
      %s23 = sphi 0, %s25
      %s26 = sphi 0, %s23
      %s27 = sphi 0, %s26
      %s43 = sphi 0, %s27
      %s47 = sphi 0, %s47
      %s49 = sphi 0, %s47
      %s50 = sphi 0, %s49
      %s64 = sphi 0, %s50
      %s68 = sphi 0, %s68
      %s70 = sphi 0, %s68
      %s71 = sphi 0, %s70
      %s85 = sphi 0, %s71
      %s89 = sphi 0, %s89
      %s91 = sphi 0, %s89
      %s92 = sphi 0, %s91
      %s106 = sphi 0, %s92
      %s110 = sphi 0, %s110
      %s112 = sphi 0, %s110
      %s113 = sphi 0, %s112
      %s127 = sphi 0, %s113
      %s133 = sphi 0, %s135
      %s136 = sphi 0, %s133
      %s137 = sphi 0, %s136
      %s153 = sphi 0, %s137
    $region4: #{_forward.2} parent=1 // loop_header_branch
      %16 = sbr.rel (%p14) target = $region8
    $region5: #{_forward.2} parent=1 // loop_body
      %s18 = ssub.s32 %s13, 1
      %s19 = ssub.s32 %s13, 2
      %s20 = sadd.s32 %s13, 1
      %s21 = ssub.s32 %s13, %s20
      %p22 = scmp.eq.s32.totalorder %s21, 0
      %s24 = sadd.s32 %s23, 1
      %s25 = scalar_select %p22, %s23, %s24
      %p28 = pneg %p22
      %p29 = scmp.eq.s32.totalorder %s13, 1
      %p30 = por %p28, %p29
      %p31 = scmp.ne.s32.totalorder %s23, %s26
      %p32 = scmp.eq.s32.totalorder %s13, 0
      %p33 = por %p31, %p32
      %p34 = scmp.ne.s32.totalorder %s23, %s26
      %p35 = scmp.eq.s32.totalorder %s18, 1
      %p36 = por %p34, %p35
      %p37 = scmp.ne.s32.totalorder %s26, %s27
      %p38 = scmp.eq.s32.totalorder %s18, 0
      %p39 = por %p37, %p38
      %p40 = scmp.ne.s32.totalorder %s26, %s27
      %p41 = scmp.eq.s32.totalorder %s19, 1
      %p42 = por %p40, %p41
      %p44 = scmp.ne.s32.totalorder %s27, %s43
      %p45 = scmp.eq.s32.totalorder %s19, 0
      %p46 = por %p44, %p45
      %s48 = sadd.s32 %s47, 1
      %p51 = scmp.eq.s32.totalorder %s13, 1
      %p52 = scmp.ne.s32.totalorder %s47, %s49
      %p53 = scmp.eq.s32.totalorder %s13, 0
      %p54 = por %p52, %p53
      %p55 = scmp.ne.s32.totalorder %s47, %s49
      %p56 = scmp.eq.s32.totalorder %s18, 1
      %p57 = por %p55, %p56
      %p58 = scmp.ne.s32.totalorder %s49, %s50
      %p59 = scmp.eq.s32.totalorder %s18, 0
      %p60 = por %p58, %p59
      %p61 = scmp.ne.s32.totalorder %s49, %s50
      %p62 = scmp.eq.s32.totalorder %s19, 1
      %p63 = por %p61, %p62
      %p65 = scmp.ne.s32.totalorder %s50, %s64
      %p66 = scmp.eq.s32.totalorder %s19, 0
      %p67 = por %p65, %p66
      %s69 = sadd.s32 %s68, 1
      %p72 = scmp.eq.s32.totalorder %s13, 1
      %p73 = scmp.ne.s32.totalorder %s68, %s70
      %p74 = scmp.eq.s32.totalorder %s13, 0
      %p75 = por %p73, %p74
      %p76 = scmp.ne.s32.totalorder %s68, %s70
      %p77 = scmp.eq.s32.totalorder %s18, 1
      %p78 = por %p76, %p77
      %p79 = scmp.ne.s32.totalorder %s70, %s71
      %p80 = scmp.eq.s32.totalorder %s18, 0
      %p81 = por %p79, %p80
      %p82 = scmp.ne.s32.totalorder %s70, %s71
      %p83 = scmp.eq.s32.totalorder %s19, 1
      %p84 = por %p82, %p83
      %p86 = scmp.ne.s32.totalorder %s71, %s85
      %p87 = scmp.eq.s32.totalorder %s19, 0
      %p88 = por %p86, %p87
      %s90 = sadd.s32 %s89, 1
      %p93 = scmp.eq.s32.totalorder %s13, 1
      %p94 = scmp.ne.s32.totalorder %s89, %s91
      %p95 = scmp.eq.s32.totalorder %s13, 0
      %p96 = por %p94, %p95
      %p97 = scmp.ne.s32.totalorder %s89, %s91
      %p98 = scmp.eq.s32.totalorder %s18, 1
      %p99 = por %p97, %p98
      %p100 = scmp.ne.s32.totalorder %s91, %s92
      %p101 = scmp.eq.s32.totalorder %s18, 0
      %p102 = por %p100, %p101
      %p103 = scmp.ne.s32.totalorder %s91, %s92
      %p104 = scmp.eq.s32.totalorder %s19, 1
      %p105 = por %p103, %p104
      %p107 = scmp.ne.s32.totalorder %s92, %s106
      %p108 = scmp.eq.s32.totalorder %s19, 0
      %p109 = por %p107, %p108
      %s111 = sadd.s32 %s110, 1
      %p114 = scmp.eq.s32.totalorder %s13, 1
      %p115 = scmp.ne.s32.totalorder %s110, %s112
      %p116 = scmp.eq.s32.totalorder %s13, 0
      %p117 = por %p115, %p116
      %p118 = scmp.ne.s32.totalorder %s110, %s112
      %p119 = scmp.eq.s32.totalorder %s18, 1
      %p120 = por %p118, %p119
      %p121 = scmp.ne.s32.totalorder %s112, %s113
      %p122 = scmp.eq.s32.totalorder %s18, 0
      %p123 = por %p121, %p122
      %p124 = scmp.ne.s32.totalorder %s112, %s113
      %p125 = scmp.eq.s32.totalorder %s19, 1
      %p126 = por %p124, %p125
      %p128 = scmp.ne.s32.totalorder %s113, %s127
      %p129 = scmp.eq.s32.totalorder %s19, 0
      %p130 = por %p128, %p129
      %s131 = ssub.s32 %s13, %s20
      %p132 = scmp.eq.s32.totalorder %s131, 0
      %s134 = sadd.s32 %s133, 1
      %s135 = scalar_select %p132, %s133, %s134
      %p138 = pneg %p132
      %p139 = scmp.eq.s32.totalorder %s13, 1
      %p140 = por %p138, %p139
      %p141 = scmp.ne.s32.totalorder %s133, %s136
      %p142 = scmp.eq.s32.totalorder %s13, 0
      %p143 = por %p141, %p142
      %p144 = scmp.ne.s32.totalorder %s133, %s136
      %p145 = scmp.eq.s32.totalorder %s18, 1
      %p146 = por %p144, %p145
      %p147 = scmp.ne.s32.totalorder %s136, %s137
      %p148 = scmp.eq.s32.totalorder %s18, 0
      %p149 = por %p147, %p148
      %p150 = scmp.ne.s32.totalorder %s136, %s137
      %p151 = scmp.eq.s32.totalorder %s19, 1
      %p152 = por %p150, %p151
      %p154 = scmp.ne.s32.totalorder %s137, %s153
      %p155 = scmp.eq.s32.totalorder %s19, 0
      %p156 = por %p154, %p155
      %p157 = scmp.le.s32.totalorder 1, %s13
      %p158 = scmp.lt.s32.totalorder %s13, 3
      %p159 = pnand %p157, %p158
      %p160 = pneg %p159
      // Predicated region
      $region9: #{_forward.2} parent=5 // pred_check
        _
      $region10: #{_forward.2} parent=5 // pred_check_branch
        %162 = sbr.rel (%p159) target = $region12
      $region11: #{_forward.2} parent=5 // pred_region
        %s163 = ssub.s32 %s13, 1
        // Predicated region
        $region13: #{_forward.2} parent=11 // pred_check
          %p164 = pneg %p60
        $region14: #{_forward.2} parent=11 // pred_check_branch
          %166 = sbr.rel (%p164) target = $region16
        $region15: #{_forward.2} parent=11 // pred_region
          _
        $region16: #{_forward.2} parent=11 // pred_fallthru
          _
        // Predicated region
        $region17: #{_forward.2} parent=11 // pred_check
          %p167 = pneg %p81
        $region18: #{_forward.2} parent=11 // pred_check_branch
          %169 = sbr.rel (%p167) target = $region20
        $region19: #{_forward.2} parent=11 // pred_region
          %s171 = ssub.s32 16, 16
          %172 = vsyncadd [#allocation5], %s171
          %s174 = sshll.u32 [#allocation4], 4
          %s175 = int_to_ptr.vmem [resolvable:$true] %s174
          %177 = dma.hbm_to_vmem [thread:$0]  %s2, 16, %s175, [#allocation5]
        $region20: #{_forward.2} parent=11 // pred_fallthru
          _
        // Predicated region
        $region21: #{_forward.2} parent=11 // pred_check
          %p178 = pneg %p102
        $region22: #{_forward.2} parent=11 // pred_check_branch
          %180 = sbr.rel (%p178) target = $region24
        $region23: #{_forward.2} parent=11 // pred_region
          _
        $region24: #{_forward.2} parent=11 // pred_fallthru
          _
        // Predicated region
        $region25: #{_forward.2} parent=11 // pred_check
          %p181 = pneg %p123
        $region26: #{_forward.2} parent=11 // pred_check_branch
          %183 = sbr.rel (%p181) target = $region28
        $region27: #{_forward.2} parent=11 // pred_region
          %s185 = ssub.s32 16, 16
          %186 = vsyncadd [#allocation7], %s185
          %s188 = sshll.u32 [#allocation6], 4
          %s189 = int_to_ptr.vmem [resolvable:$true] %s188
          %191 = dma.hbm_to_vmem [thread:$0]  %s4, 16, %s189, [#allocation7]
        $region28: #{_forward.2} parent=11 // pred_fallthru
          _
      $region12: #{_forward.2} parent=5 // pred_fallthru
        _
      %p192 = scmp.lt.s32.totalorder %s13, 2
      // Predicated region
      $region29: #{_forward.2} parent=5 // pred_check
        %p193 = pneg %p192
      $region30: #{_forward.2} parent=5 // pred_check_branch
        %195 = sbr.rel (%p193) target = $region32
      $region31: #{_forward.2} parent=5 // pred_region
        // Predicated region
        $region33: #{_forward.2} parent=31 // pred_check
          %p196 = pneg %p33
        $region34: #{_forward.2} parent=31 // pred_check_branch
          %198 = sbr.rel (%p196) target = $region36
        $region35: #{_forward.2} parent=31 // pred_region
          %p199 = scmp.lt.s32.totalorder %s13, 1
          %s200 = scalar_select %p199, %s13, 1
          %s201 = smul.addr %s200, 32
          %s202 = smul.addr %s201, 8
          %s203 = scalar_lea.vmem %s0, %s202
        $region36: #{_forward.2} parent=31 // pred_fallthru
          _
      $region32: #{_forward.2} parent=5 // pred_fallthru
        _
      %p204 = scmp.le.s32.totalorder 1, %s13
      %p205 = scmp.lt.s32.totalorder %s13, 3
      %p206 = pnand %p204, %p205
      %p207 = pneg %p206
      // Predicated region
      $region37: #{_forward.2} parent=5 // pred_check
        _
      $region38: #{_forward.2} parent=5 // pred_check_branch
        %209 = sbr.rel (%p206) target = $region40
      $region39: #{_forward.2} parent=5 // pred_region
        %s210 = ssub.s32 %s13, 1
        // Predicated region
        $region41: #{_forward.2} parent=39 // pred_check
          %p211 = pneg %p81
        $region42: #{_forward.2} parent=39 // pred_check_branch
          %213 = sbr.rel (%p211) target = $region44
        $region43: #{_forward.2} parent=39 // pred_region
          %214 = dma.done [#allocation5], 16
        $region44: #{_forward.2} parent=39 // pred_fallthru
          _
        // Predicated region
        $region45: #{_forward.2} parent=39 // pred_check
          %p215 = pneg %p123
        $region46: #{_forward.2} parent=39 // pred_check_branch
          %217 = sbr.rel (%p215) target = $region48
        $region47: #{_forward.2} parent=39 // pred_region
          %218 = dma.done [#allocation7], 16
        $region48: #{_forward.2} parent=39 // pred_fallthru
          _
        %p219 = scmp.lt.s32.totalorder %s18, 1
        %s220 = scalar_select %p219, %s18, 1
        %s221 = smul.addr %s220, 32
        %s222 = smul.addr %s221, 8
        %s223 = scalar_lea.vmem %s0, %s222
        %p224 = pneg %p39
        %p225 = pneg %p36
        %p226 = pneg %p60
        %p227 = pneg %p57
        %p228 = pneg %p81
        %p229 = pneg %p78
        %p230 = pneg %p102
        %p231 = pneg %p99
        %p232 = pneg %p123
        %p233 = pneg %p120
        %p234 = pneg %p149
        %p235 = pneg %p146
        %p236 = scmp.lt.s32.totalorder %s18, 1
        %s237 = scalar_select %p236, %s18, 1
        %s238 = smul.addr %s237, 8
        %s239 = smul.addr %s238, 4
        %s240 = scalar_lea.vmem %s5, %s239
        %p241 = scmp.lt.s32.totalorder %s18, 1
        %s242 = scalar_select %p241, %s18, 1
        %s243 = smul.addr %s242, 32
        %s244 = smul.addr %s243, 8
        %s245 = scalar_lea.vmem %s0, %s244
        %p246 = scmp.lt.s32.totalorder %s18, 1
        %s247 = scalar_select %p246, %s18, 1
        %s248 = smul.addr %s247, 8
        %s249 = smul.addr %s248, 4
        %s250 = scalar_lea.vmem %s5, %s249
        %vm251 = vcmask 31744
        %252 = vst.msk [vmem:[#allocation2] sm:$0xff] %vm251, 0.0
        %253 = vst.msk [vmem:[#allocation2 + $0x8] sm:$0xff] %vm251, 0.0
        %vm254 = vcmask 25600
        %255 = vst.msk [vmem:[#allocation2 + $0x10] sm:$0x3] %vm254, 0.0
        %256 = vst.msk [vmem:[#allocation2 + $0x18] sm:$0xff] %vm251, 0.0
        %257 = vst.msk [vmem:[#allocation2 + $0x20] sm:$0xff] %vm251, 0.0
        %258 = vst.msk [vmem:[#allocation2 + $0x28] sm:$0x3] %vm254, 0.0
        %259 = vst.msk [vmem:[#allocation2 + $0x30] sm:$0xff] %vm251, 0.0
        %260 = vst.msk [vmem:[#allocation2 + $0x38] sm:$0xff] %vm251, 0.0
        %261 = vst.msk [vmem:[#allocation2 + $0x40] sm:$0x3] %vm254, 0.0
        %262 = vst.msk [vmem:[#allocation2 + $0x48] sm:$0xff] %vm251, 0.0
        %263 = vst.msk [vmem:[#allocation2 + $0x50] sm:$0xff] %vm251, 0.0
        %264 = vst.msk [vmem:[#allocation2 + $0x58] sm:$0x3] %vm254, 0.0
        %265 = vst.msk [vmem:[#allocation2 + $0x60] sm:$0xff] %vm251, 0.0
        %266 = vst.msk [vmem:[#allocation2 + $0x68] sm:$0xff] %vm251, 0.0
        %267 = vst.msk [vmem:[#allocation2 + $0x70] sm:$0x3] %vm254, 0.0
        %268 = vst.msk [vmem:[#allocation2 + $0x78] sm:$0xff] %vm251, 0.0
        %269 = vst.msk [vmem:[#allocation2 + $0x80] sm:$0xff] %vm251, 0.0
        %270 = vst.msk [vmem:[#allocation2 + $0x88] sm:$0x3] %vm254, 0.0
        %271 = vst.msk [vmem:[#allocation2 + $0x90] sm:$0xff] %vm251, 0.0
        %272 = vst.msk [vmem:[#allocation2 + $0x98] sm:$0xff] %vm251, 0.0
        %273 = vst.msk [vmem:[#allocation2 + $0xa0] sm:$0x3] %vm254, 0.0
        %274 = vst.msk [vmem:[#allocation2 + $0xa8] sm:$0xff] %vm251, 0.0
        %275 = vst.msk [vmem:[#allocation2 + $0xb0] sm:$0xff] %vm251, 0.0
        %276 = vst.msk [vmem:[#allocation2 + $0xb8] sm:$0x3] %vm254, 0.0
        %277 = vst.msk [vmem:[#allocation2 + $0xc0] sm:$0xff] %vm251, 0.0
        %278 = vst.msk [vmem:[#allocation2 + $0xc8] sm:$0xff] %vm251, 0.0
        %279 = vst.msk [vmem:[#allocation2 + $0xd0] sm:$0x3] %vm254, 0.0
        %280 = vst.msk [vmem:[#allocation2 + $0xd8] sm:$0xff] %vm251, 0.0
        %281 = vst.msk [vmem:[#allocation2 + $0xe0] sm:$0xff] %vm251, 0.0
        %282 = vst.msk [vmem:[#allocation2 + $0xe8] sm:$0x3] %vm254, 0.0
        %283 = vst.msk [vmem:[#allocation2 + $0xf0] sm:$0xff] %vm251, 0.0
        %284 = vst.msk [vmem:[#allocation2 + $0xf8] sm:$0xff] %vm251, 0.0
        %285 = vst.msk [vmem:[#allocation2 + $0x100] sm:$0x3] %vm254, 0.0
        %286 = vst.msk [vmem:[#allocation2 + $0x108] sm:$0xff] %vm251, 0.0
        %287 = vst.msk [vmem:[#allocation2 + $0x110] sm:$0xff] %vm251, 0.0
        %288 = vst.msk [vmem:[#allocation2 + $0x118] sm:$0x3] %vm254, 0.0
        %289 = vst.msk [vmem:[#allocation2 + $0x120] sm:$0xff] %vm251, 0.0
        %290 = vst.msk [vmem:[#allocation2 + $0x128] sm:$0xff] %vm251, 0.0
        %291 = vst.msk [vmem:[#allocation2 + $0x130] sm:$0x3] %vm254, 0.0
        %292 = vst.msk [vmem:[#allocation2 + $0x138] sm:$0xff] %vm251, 0.0
        %293 = vst.msk [vmem:[#allocation2 + $0x140] sm:$0xff] %vm251, 0.0
        %294 = vst.msk [vmem:[#allocation2 + $0x148] sm:$0x3] %vm254, 0.0
        %295 = vst.msk [vmem:[#allocation2 + $0x150] sm:$0xff] %vm251, 0.0
        %296 = vst.msk [vmem:[#allocation2 + $0x158] sm:$0xff] %vm251, 0.0
        %297 = vst.msk [vmem:[#allocation2 + $0x160] sm:$0x3] %vm254, 0.0
        %298 = vst.msk [vmem:[#allocation2 + $0x168] sm:$0xff] %vm251, 0.0
        %299 = vst.msk [vmem:[#allocation2 + $0x170] sm:$0xff] %vm251, 0.0
        %300 = vst.msk [vmem:[#allocation2 + $0x178] sm:$0x3] %vm254, 0.0
        %301 = vst.msk [vmem:[#allocation2 + $0x180] sm:$0xff] %vm251, 0.0
        %302 = vst.msk [vmem:[#allocation2 + $0x188] sm:$0xff] %vm251, 0.0
        %303 = vst.msk [vmem:[#allocation2 + $0x190] sm:$0x3] %vm254, 0.0
        %304 = vst.msk [vmem:[#allocation2 + $0x198] sm:$0xff] %vm251, 0.0
        %305 = vst.msk [vmem:[#allocation2 + $0x1a0] sm:$0xff] %vm251, 0.0
        %306 = vst.msk [vmem:[#allocation2 + $0x1a8] sm:$0x3] %vm254, 0.0
        %v307 = vld [vmem:[%s245] sm:$0xff]
        %v308 = vld [vmem:[%s245 + $0x8] sm:$0xff]
        %v309 = vld [vmem:[%s245 + $0x10] sm:$0xff]
        %v310 = vld [vmem:[%s245 + $0x18] sm:$0xff]
        %v311 = vld [vmem:[%s245 + $0x20] sm:$0xff]
        %v312 = vld [vmem:[%s245 + $0x28] sm:$0xff]
        %v313 = vld [vmem:[%s245 + $0x30] sm:$0xff]
        %v314 = vld [vmem:[%s245 + $0x38] sm:$0xff]
        %v315 = vld [vmem:[%s245 + $0x40] sm:$0xff]
        %v316 = vld [vmem:[%s245 + $0x48] sm:$0xff]
        %v317 = vld [vmem:[%s245 + $0x50] sm:$0xff]
        %v318 = vld [vmem:[%s245 + $0x58] sm:$0xff]
        %v319 = vld [vmem:[%s245 + $0x60] sm:$0xff]
        %v320 = vld [vmem:[%s245 + $0x68] sm:$0xff]
        %v321 = vld [vmem:[%s245 + $0x70] sm:$0xff]
        %v322 = vld [vmem:[%s245 + $0x78] sm:$0xff]
        %v323 = vld [vmem:[%s245 + $0x80] sm:$0xff]
        %v324 = vld [vmem:[%s245 + $0x88] sm:$0xff]
        %v325 = vld [vmem:[%s245 + $0x90] sm:$0xff]
        %v326 = vld [vmem:[%s245 + $0x98] sm:$0xff]
        %v327 = vld [vmem:[%s245 + $0xa0] sm:$0xff]
        %v328 = vld [vmem:[%s245 + $0xa8] sm:$0xff]
        %v329 = vld [vmem:[%s245 + $0xb0] sm:$0xff]
        %v330 = vld [vmem:[%s245 + $0xb8] sm:$0xff]
        %v331 = vld [vmem:[%s245 + $0xc0] sm:$0xff]
        %v332 = vld [vmem:[%s245 + $0xc8] sm:$0xff]
        %v333 = vld [vmem:[%s245 + $0xd0] sm:$0xff]
        %v334 = vld [vmem:[%s245 + $0xd8] sm:$0xff]
        %v335 = vld [vmem:[%s245 + $0xe0] sm:$0xff]
        %v336 = vld [vmem:[%s245 + $0xe8] sm:$0xff]
        %v337 = vld [vmem:[%s245 + $0xf0] sm:$0xff]
        %v338 = vld [vmem:[%s245 + $0xf8] sm:$0xff]
        %s339 = scalar_lea.vmem [#allocation2], 24
        %340 = vst.msk [vmem:[%s339 + $0x1] sm:$0xff] %vm251, %v307
        %341 = vst.msk [vmem:[%s339 + $0x9] sm:$0xff] %vm251, %v308
        %342 = vst.msk [vmem:[%s339 + $0x19] sm:$0xff] %vm251, %v309
        %343 = vst.msk [vmem:[%s339 + $0x21] sm:$0xff] %vm251, %v310
        %344 = vst.msk [vmem:[%s339 + $0x31] sm:$0xff] %vm251, %v311
        %345 = vst.msk [vmem:[%s339 + $0x39] sm:$0xff] %vm251, %v312
        %346 = vst.msk [vmem:[%s339 + $0x49] sm:$0xff] %vm251, %v313
        %347 = vst.msk [vmem:[%s339 + $0x51] sm:$0xff] %vm251, %v314
        %348 = vst.msk [vmem:[%s339 + $0x61] sm:$0xff] %vm251, %v315
        %349 = vst.msk [vmem:[%s339 + $0x69] sm:$0xff] %vm251, %v316
        %350 = vst.msk [vmem:[%s339 + $0x79] sm:$0xff] %vm251, %v317
        %351 = vst.msk [vmem:[%s339 + $0x81] sm:$0xff] %vm251, %v318
        %352 = vst.msk [vmem:[%s339 + $0x91] sm:$0xff] %vm251, %v319
        %353 = vst.msk [vmem:[%s339 + $0x99] sm:$0xff] %vm251, %v320
        %354 = vst.msk [vmem:[%s339 + $0xa9] sm:$0xff] %vm251, %v321
        %355 = vst.msk [vmem:[%s339 + $0xb1] sm:$0xff] %vm251, %v322
        %356 = vst.msk [vmem:[%s339 + $0xc1] sm:$0xff] %vm251, %v323
        %357 = vst.msk [vmem:[%s339 + $0xc9] sm:$0xff] %vm251, %v324
        %358 = vst.msk [vmem:[%s339 + $0xd9] sm:$0xff] %vm251, %v325
        %359 = vst.msk [vmem:[%s339 + $0xe1] sm:$0xff] %vm251, %v326
        %360 = vst.msk [vmem:[%s339 + $0xf1] sm:$0xff] %vm251, %v327
        %361 = vst.msk [vmem:[%s339 + $0xf9] sm:$0xff] %vm251, %v328
        %362 = vst.msk [vmem:[%s339 + $0x109] sm:$0xff] %vm251, %v329
        %363 = vst.msk [vmem:[%s339 + $0x111] sm:$0xff] %vm251, %v330
        %364 = vst.msk [vmem:[%s339 + $0x121] sm:$0xff] %vm251, %v331
        %365 = vst.msk [vmem:[%s339 + $0x129] sm:$0xff] %vm251, %v332
        %366 = vst.msk [vmem:[%s339 + $0x139] sm:$0xff] %vm251, %v333
        %367 = vst.msk [vmem:[%s339 + $0x141] sm:$0xff] %vm251, %v334
        %368 = vst.msk [vmem:[%s339 + $0x151] sm:$0xff] %vm251, %v335
        %369 = vst.msk [vmem:[%s339 + $0x159] sm:$0xff] %vm251, %v336
        %370 = vst.msk [vmem:[%s339 + $0x169] sm:$0xff] %vm251, %v337
        %371 = vst.msk [vmem:[%s339 + $0x171] sm:$0xff] %vm251, %v338
        %v372 = vld [vmem:[#allocation2] sm:$0xff]
        %v373 = vld [vmem:[#allocation2 + $0x8] sm:$0xff]
        %v374 = vld [vmem:[#allocation2 + $0x10] sm:$0x3]
        %v375 = vld [vmem:[#allocation2 + $0x18] sm:$0xff]
        %v376 = vld [vmem:[#allocation2 + $0x20] sm:$0xff]
        %v377 = vld [vmem:[#allocation2 + $0x28] sm:$0x3]
        %v378 = vld [vmem:[#allocation2 + $0x30] sm:$0xff]
        %v379 = vld [vmem:[#allocation2 + $0x38] sm:$0xff]
        %v380 = vld [vmem:[#allocation2 + $0x40] sm:$0x3]
        %v381 = vld [vmem:[#allocation2 + $0x48] sm:$0xff]
        %v382 = vld [vmem:[#allocation2 + $0x50] sm:$0xff]
        %v383 = vld [vmem:[#allocation2 + $0x58] sm:$0x3]
        %v384 = vld [vmem:[#allocation2 + $0x60] sm:$0xff]
        %v385 = vld [vmem:[#allocation2 + $0x68] sm:$0xff]
        %v386 = vld [vmem:[#allocation2 + $0x70] sm:$0x3]
        %v387 = vld [vmem:[#allocation2 + $0x78] sm:$0xff]
        %v388 = vld [vmem:[#allocation2 + $0x80] sm:$0xff]
        %v389 = vld [vmem:[#allocation2 + $0x88] sm:$0x3]
        %v390 = vld [vmem:[#allocation2 + $0x90] sm:$0xff]
        %v391 = vld [vmem:[#allocation2 + $0x98] sm:$0xff]
        %v392 = vld [vmem:[#allocation2 + $0xa0] sm:$0x3]
        %v393 = vld [vmem:[#allocation2 + $0xa8] sm:$0xff]
        %v394 = vld [vmem:[#allocation2 + $0xb0] sm:$0xff]
        %v395 = vld [vmem:[#allocation2 + $0xb8] sm:$0x3]
        %v396 = vld [vmem:[#allocation2 + $0xc0] sm:$0xff]
        %v397 = vld [vmem:[#allocation2 + $0xc8] sm:$0xff]
        %v398 = vld [vmem:[#allocation2 + $0xd0] sm:$0x3]
        %v399 = vld [vmem:[#allocation2 + $0xd8] sm:$0xff]
        %v400 = vld [vmem:[#allocation2 + $0xe0] sm:$0xff]
        %v401 = vld [vmem:[#allocation2 + $0xe8] sm:$0x3]
        %v402 = vld [vmem:[#allocation2 + $0xf0] sm:$0xff]
        %v403 = vld [vmem:[#allocation2 + $0xf8] sm:$0xff]
        %v404 = vld [vmem:[#allocation2 + $0x100] sm:$0x3]
        %v405 = vld [vmem:[#allocation2 + $0x108] sm:$0xff]
        %v406 = vld [vmem:[#allocation2 + $0x110] sm:$0xff]
        %v407 = vld [vmem:[#allocation2 + $0x118] sm:$0x3]
        %v408 = vld [vmem:[#allocation2 + $0x120] sm:$0xff]
        %v409 = vld [vmem:[#allocation2 + $0x128] sm:$0xff]
        %v410 = vld [vmem:[#allocation2 + $0x130] sm:$0x3]
        %v411 = vld [vmem:[#allocation2 + $0x138] sm:$0xff]
        %v412 = vld [vmem:[#allocation2 + $0x140] sm:$0xff]
        %v413 = vld [vmem:[#allocation2 + $0x148] sm:$0x3]
        %v414 = vld [vmem:[#allocation2 + $0x150] sm:$0xff]
        %v415 = vld [vmem:[#allocation2 + $0x158] sm:$0xff]
        %v416 = vld [vmem:[#allocation2 + $0x160] sm:$0x3]
        %v417 = vld [vmem:[#allocation2 + $0x168] sm:$0xff]
        %v418 = vld [vmem:[#allocation2 + $0x170] sm:$0xff]
        %v419 = vld [vmem:[#allocation2 + $0x178] sm:$0x3]
        %v420 = vld [vmem:[#allocation2 + $0x180] sm:$0xff]
        %v421 = vld [vmem:[#allocation2 + $0x188] sm:$0xff]
        %v422 = vld [vmem:[#allocation2 + $0x190] sm:$0x3]
        %v423 = vld [vmem:[#allocation2 + $0x198] sm:$0xff]
        %v424 = vld [vmem:[#allocation2 + $0x1a0] sm:$0xff]
        %v425 = vld [vmem:[#allocation2 + $0x1a8] sm:$0x3]
        %vm474 = vcmask 1046528
        %v475 = vrot.slane %v372, 1
        %v476 = vrot.slane %v373, 1
        %v477 = vsel %vm474, %v475, %v476
        %v478 = vrot.slane %v374, 1
        %v479 = vsel %vm474, %v476, %v478
        %v480 = vrot.slane %v375, 1
        %v481 = vrot.slane %v376, 1
        %v482 = vsel %vm474, %v480, %v481
        %v483 = vrot.slane %v377, 1
        %v484 = vsel %vm474, %v481, %v483
        %v485 = vrot.slane %v378, 1
        %v486 = vrot.slane %v379, 1
        %v487 = vsel %vm474, %v485, %v486
        %v488 = vrot.slane %v380, 1
        %v489 = vsel %vm474, %v486, %v488
        %v490 = vrot.slane %v381, 1
        %v491 = vrot.slane %v382, 1
        %v492 = vsel %vm474, %v490, %v491
        %v493 = vrot.slane %v383, 1
        %v494 = vsel %vm474, %v491, %v493
        %v495 = vrot.slane %v384, 1
        %v496 = vrot.slane %v385, 1
        %v497 = vsel %vm474, %v495, %v496
        %v498 = vrot.slane %v386, 1
        %v499 = vsel %vm474, %v496, %v498
        %v500 = vrot.slane %v387, 1
        %v501 = vrot.slane %v388, 1
        %v502 = vsel %vm474, %v500, %v501
        %v503 = vrot.slane %v389, 1
        %v504 = vsel %vm474, %v501, %v503
        %v505 = vrot.slane %v390, 1
        %v506 = vrot.slane %v391, 1
        %v507 = vsel %vm474, %v505, %v506
        %v508 = vrot.slane %v392, 1
        %v509 = vsel %vm474, %v506, %v508
        %v510 = vrot.slane %v393, 1
        %v511 = vrot.slane %v394, 1
        %v512 = vsel %vm474, %v510, %v511
        %v513 = vrot.slane %v395, 1
        %v514 = vsel %vm474, %v511, %v513
        %v515 = vrot.slane %v396, 1
        %v516 = vrot.slane %v397, 1
        %v517 = vsel %vm474, %v515, %v516
        %v518 = vrot.slane %v398, 1
        %v519 = vsel %vm474, %v516, %v518
        %v520 = vrot.slane %v399, 1
        %v521 = vrot.slane %v400, 1
        %v522 = vsel %vm474, %v520, %v521
        %v523 = vrot.slane %v401, 1
        %v524 = vsel %vm474, %v521, %v523
        %v525 = vrot.slane %v402, 1
        %v526 = vrot.slane %v403, 1
        %v527 = vsel %vm474, %v525, %v526
        %v528 = vrot.slane %v404, 1
        %v529 = vsel %vm474, %v526, %v528
        %v530 = vrot.slane %v405, 1
        %v531 = vrot.slane %v406, 1
        %v532 = vsel %vm474, %v530, %v531
        %v533 = vrot.slane %v407, 1
        %v534 = vsel %vm474, %v531, %v533
        %v535 = vrot.slane %v408, 1
        %v536 = vrot.slane %v409, 1
        %v537 = vsel %vm474, %v535, %v536
        %v538 = vrot.slane %v410, 1
        %v539 = vsel %vm474, %v536, %v538
        %v540 = vrot.slane %v411, 1
        %v541 = vrot.slane %v412, 1
        %v542 = vsel %vm474, %v540, %v541
        %v543 = vrot.slane %v413, 1
        %v544 = vsel %vm474, %v541, %v543
        %v545 = vrot.slane %v414, 1
        %v546 = vrot.slane %v415, 1
        %v547 = vsel %vm474, %v545, %v546
        %v548 = vrot.slane %v416, 1
        %v549 = vsel %vm474, %v546, %v548
        %v550 = vrot.slane %v417, 1
        %v551 = vrot.slane %v418, 1
        %v552 = vsel %vm474, %v550, %v551
        %v553 = vrot.slane %v419, 1
        %v554 = vsel %vm474, %v551, %v553
        %vm555 = vcmask 1045504
        %v556 = vrot.slane %v372, 2
        %v557 = vrot.slane %v373, 2
        %v558 = vsel %vm555, %v556, %v557
        %v559 = vrot.slane %v374, 2
        %v560 = vsel %vm555, %v557, %v559
        %v561 = vrot.slane %v375, 2
        %v562 = vrot.slane %v376, 2
        %v563 = vsel %vm555, %v561, %v562
        %v564 = vrot.slane %v377, 2
        %v565 = vsel %vm555, %v562, %v564
        %v566 = vrot.slane %v378, 2
        %v567 = vrot.slane %v379, 2
        %v568 = vsel %vm555, %v566, %v567
        %v569 = vrot.slane %v380, 2
        %v570 = vsel %vm555, %v567, %v569
        %v571 = vrot.slane %v381, 2
        %v572 = vrot.slane %v382, 2
        %v573 = vsel %vm555, %v571, %v572
        %v574 = vrot.slane %v383, 2
        %v575 = vsel %vm555, %v572, %v574
        %v576 = vrot.slane %v384, 2
        %v577 = vrot.slane %v385, 2
        %v578 = vsel %vm555, %v576, %v577
        %v579 = vrot.slane %v386, 2
        %v580 = vsel %vm555, %v577, %v579
        %v581 = vrot.slane %v387, 2
        %v582 = vrot.slane %v388, 2
        %v583 = vsel %vm555, %v581, %v582
        %v584 = vrot.slane %v389, 2
        %v585 = vsel %vm555, %v582, %v584
        %v586 = vrot.slane %v390, 2
        %v587 = vrot.slane %v391, 2
        %v588 = vsel %vm555, %v586, %v587
        %v589 = vrot.slane %v392, 2
        %v590 = vsel %vm555, %v587, %v589
        %v591 = vrot.slane %v393, 2
        %v592 = vrot.slane %v394, 2
        %v593 = vsel %vm555, %v591, %v592
        %v594 = vrot.slane %v395, 2
        %v595 = vsel %vm555, %v592, %v594
        %v596 = vrot.slane %v396, 2
        %v597 = vrot.slane %v397, 2
        %v598 = vsel %vm555, %v596, %v597
        %v599 = vrot.slane %v398, 2
        %v600 = vsel %vm555, %v597, %v599
        %v601 = vrot.slane %v399, 2
        %v602 = vrot.slane %v400, 2
        %v603 = vsel %vm555, %v601, %v602
        %v604 = vrot.slane %v401, 2
        %v605 = vsel %vm555, %v602, %v604
        %v606 = vrot.slane %v402, 2
        %v607 = vrot.slane %v403, 2
        %v608 = vsel %vm555, %v606, %v607
        %v609 = vrot.slane %v404, 2
        %v610 = vsel %vm555, %v607, %v609
        %v611 = vrot.slane %v405, 2
        %v612 = vrot.slane %v406, 2
        %v613 = vsel %vm555, %v611, %v612
        %v614 = vrot.slane %v407, 2
        %v615 = vsel %vm555, %v612, %v614
        %v616 = vrot.slane %v408, 2
        %v617 = vrot.slane %v409, 2
        %v618 = vsel %vm555, %v616, %v617
        %v619 = vrot.slane %v410, 2
        %v620 = vsel %vm555, %v617, %v619
        %v621 = vrot.slane %v411, 2
        %v622 = vrot.slane %v412, 2
        %v623 = vsel %vm555, %v621, %v622
        %v624 = vrot.slane %v413, 2
        %v625 = vsel %vm555, %v622, %v624
        %v626 = vrot.slane %v414, 2
        %v627 = vrot.slane %v415, 2
        %v628 = vsel %vm555, %v626, %v627
        %v629 = vrot.slane %v416, 2
        %v630 = vsel %vm555, %v627, %v629
        %v631 = vrot.slane %v417, 2
        %v632 = vrot.slane %v418, 2
        %v633 = vsel %vm555, %v631, %v632
        %v634 = vrot.slane %v419, 2
        %v635 = vsel %vm555, %v632, %v634
        %v639 = vrot.slane %v420, 1
        %v640 = vrot.slane %v421, 1
        %v641 = vsel %vm474, %v639, %v640
        %v642 = vrot.slane %v422, 1
        %v643 = vsel %vm474, %v640, %v642
        %v644 = vrot.slane %v420, 2
        %v645 = vrot.slane %v421, 2
        %v646 = vsel %vm555, %v644, %v645
        %v647 = vrot.slane %v422, 2
        %v648 = vsel %vm555, %v645, %v647
        %v652 = vrot.slane %v423, 1
        %v653 = vrot.slane %v424, 1
        %v654 = vsel %vm474, %v652, %v653
        %v655 = vrot.slane %v425, 1
        %v656 = vsel %vm474, %v653, %v655
        %v657 = vrot.slane %v423, 2
        %v658 = vrot.slane %v424, 2
        %v659 = vsel %vm555, %v657, %v658
        %v660 = vrot.slane %v425, 2
        %v661 = vsel %vm555, %v658, %v660
        %662 = vrot.lane.b32.xlu0 %v477, 4
        %v663 = vpop.permute.xlu0 %662
        %664 = vrot.lane.b32.xlu0 %v479, 4
        %v665 = vpop.permute.xlu0 %664
        %666 = vrot.lane.b32.xlu0 %v482, 4
        %v667 = vpop.permute.xlu0 %666
        %668 = vrot.lane.b32.xlu0 %v484, 4
        %v669 = vpop.permute.xlu0 %668
        %670 = vrot.lane.b32.xlu0 %v487, 4
        %v671 = vpop.permute.xlu0 %670
        %672 = vrot.lane.b32.xlu0 %v489, 4
        %v673 = vpop.permute.xlu0 %672
        %674 = vrot.lane.b32.xlu0 %v492, 4
        %v675 = vpop.permute.xlu0 %674
        %676 = vrot.lane.b32.xlu0 %v494, 4
        %v677 = vpop.permute.xlu0 %676
        %678 = vrot.lane.b32.xlu0 %v497, 4
        %v679 = vpop.permute.xlu0 %678
        %680 = vrot.lane.b32.xlu0 %v499, 4
        %v681 = vpop.permute.xlu0 %680
        %682 = vrot.lane.b32.xlu0 %v502, 4
        %v683 = vpop.permute.xlu0 %682
        %684 = vrot.lane.b32.xlu0 %v504, 4
        %v685 = vpop.permute.xlu0 %684
        %686 = vrot.lane.b32.xlu0 %v507, 4
        %v687 = vpop.permute.xlu0 %686
        %688 = vrot.lane.b32.xlu0 %v509, 4
        %v689 = vpop.permute.xlu0 %688
        %690 = vrot.lane.b32.xlu0 %v512, 4
        %v691 = vpop.permute.xlu0 %690
        %692 = vrot.lane.b32.xlu0 %v514, 4
        %v693 = vpop.permute.xlu0 %692
        %694 = vrot.lane.b32.xlu0 %v517, 4
        %v695 = vpop.permute.xlu0 %694
        %696 = vrot.lane.b32.xlu0 %v519, 4
        %v697 = vpop.permute.xlu0 %696
        %698 = vrot.lane.b32.xlu0 %v522, 4
        %v699 = vpop.permute.xlu0 %698
        %700 = vrot.lane.b32.xlu0 %v524, 4
        %v701 = vpop.permute.xlu0 %700
        %702 = vrot.lane.b32.xlu0 %v527, 4
        %v703 = vpop.permute.xlu0 %702
        %704 = vrot.lane.b32.xlu0 %v529, 4
        %v705 = vpop.permute.xlu0 %704
        %706 = vrot.lane.b32.xlu0 %v532, 4
        %v707 = vpop.permute.xlu0 %706
        %708 = vrot.lane.b32.xlu0 %v534, 4
        %v709 = vpop.permute.xlu0 %708
        %710 = vrot.lane.b32.xlu0 %v537, 4
        %v711 = vpop.permute.xlu0 %710
        %712 = vrot.lane.b32.xlu0 %v539, 4
        %v713 = vpop.permute.xlu0 %712
        %714 = vrot.lane.b32.xlu0 %v542, 4
        %v715 = vpop.permute.xlu0 %714
        %716 = vrot.lane.b32.xlu0 %v544, 4
        %v717 = vpop.permute.xlu0 %716
        %718 = vrot.lane.b32.xlu0 %v547, 4
        %v719 = vpop.permute.xlu0 %718
        %720 = vrot.lane.b32.xlu0 %v549, 4
        %v721 = vpop.permute.xlu0 %720
        %722 = vrot.lane.b32.xlu0 %v552, 4
        %v723 = vpop.permute.xlu0 %722
        %724 = vrot.lane.b32.xlu0 %v554, 4
        %v725 = vpop.permute.xlu0 %724
        %758 = vrot.lane.b32.xlu0 %v558, 8
        %v759 = vpop.permute.xlu0 %758
        %760 = vrot.lane.b32.xlu0 %v560, 8
        %v761 = vpop.permute.xlu0 %760
        %762 = vrot.lane.b32.xlu0 %v563, 8
        %v763 = vpop.permute.xlu0 %762
        %764 = vrot.lane.b32.xlu0 %v565, 8
        %v765 = vpop.permute.xlu0 %764
        %766 = vrot.lane.b32.xlu0 %v568, 8
        %v767 = vpop.permute.xlu0 %766
        %768 = vrot.lane.b32.xlu0 %v570, 8
        %v769 = vpop.permute.xlu0 %768
        %770 = vrot.lane.b32.xlu0 %v573, 8
        %v771 = vpop.permute.xlu0 %770
        %772 = vrot.lane.b32.xlu0 %v575, 8
        %v773 = vpop.permute.xlu0 %772
        %774 = vrot.lane.b32.xlu0 %v578, 8
        %v775 = vpop.permute.xlu0 %774
        %776 = vrot.lane.b32.xlu0 %v580, 8
        %v777 = vpop.permute.xlu0 %776
        %778 = vrot.lane.b32.xlu0 %v583, 8
        %v779 = vpop.permute.xlu0 %778
        %780 = vrot.lane.b32.xlu0 %v585, 8
        %v781 = vpop.permute.xlu0 %780
        %782 = vrot.lane.b32.xlu0 %v588, 8
        %v783 = vpop.permute.xlu0 %782
        %784 = vrot.lane.b32.xlu0 %v590, 8
        %v785 = vpop.permute.xlu0 %784
        %786 = vrot.lane.b32.xlu0 %v593, 8
        %v787 = vpop.permute.xlu0 %786
        %788 = vrot.lane.b32.xlu0 %v595, 8
        %v789 = vpop.permute.xlu0 %788
        %790 = vrot.lane.b32.xlu0 %v598, 8
        %v791 = vpop.permute.xlu0 %790
        %792 = vrot.lane.b32.xlu0 %v600, 8
        %v793 = vpop.permute.xlu0 %792
        %794 = vrot.lane.b32.xlu0 %v603, 8
        %v795 = vpop.permute.xlu0 %794
        %796 = vrot.lane.b32.xlu0 %v605, 8
        %v797 = vpop.permute.xlu0 %796
        %798 = vrot.lane.b32.xlu0 %v608, 8
        %v799 = vpop.permute.xlu0 %798
        %800 = vrot.lane.b32.xlu0 %v610, 8
        %v801 = vpop.permute.xlu0 %800
        %802 = vrot.lane.b32.xlu0 %v613, 8
        %v803 = vpop.permute.xlu0 %802
        %804 = vrot.lane.b32.xlu0 %v615, 8
        %v805 = vpop.permute.xlu0 %804
        %806 = vrot.lane.b32.xlu0 %v618, 8
        %v807 = vpop.permute.xlu0 %806
        %808 = vrot.lane.b32.xlu0 %v620, 8
        %v809 = vpop.permute.xlu0 %808
        %810 = vrot.lane.b32.xlu0 %v623, 8
        %v811 = vpop.permute.xlu0 %810
        %812 = vrot.lane.b32.xlu0 %v625, 8
        %v813 = vpop.permute.xlu0 %812
        %814 = vrot.lane.b32.xlu0 %v628, 8
        %v815 = vpop.permute.xlu0 %814
        %816 = vrot.lane.b32.xlu0 %v630, 8
        %v817 = vpop.permute.xlu0 %816
        %818 = vrot.lane.b32.xlu0 %v633, 8
        %v819 = vpop.permute.xlu0 %818
        %820 = vrot.lane.b32.xlu0 %v635, 8
        %v821 = vpop.permute.xlu0 %820
        %854 = vrot.lane.b32.xlu0 %v375, 12
        %v855 = vpop.permute.xlu0 %854
        %856 = vrot.lane.b32.xlu0 %v376, 12
        %v857 = vpop.permute.xlu0 %856
        %858 = vrot.lane.b32.xlu0 %v378, 12
        %v859 = vpop.permute.xlu0 %858
        %860 = vrot.lane.b32.xlu0 %v379, 12
        %v861 = vpop.permute.xlu0 %860
        %862 = vrot.lane.b32.xlu0 %v381, 12
        %v863 = vpop.permute.xlu0 %862
        %864 = vrot.lane.b32.xlu0 %v382, 12
        %v865 = vpop.permute.xlu0 %864
        %866 = vrot.lane.b32.xlu0 %v384, 12
        %v867 = vpop.permute.xlu0 %866
        %868 = vrot.lane.b32.xlu0 %v385, 12
        %v869 = vpop.permute.xlu0 %868
        %870 = vrot.lane.b32.xlu0 %v387, 12
        %v871 = vpop.permute.xlu0 %870
        %872 = vrot.lane.b32.xlu0 %v388, 12
        %v873 = vpop.permute.xlu0 %872
        %874 = vrot.lane.b32.xlu0 %v390, 12
        %v875 = vpop.permute.xlu0 %874
        %876 = vrot.lane.b32.xlu0 %v391, 12
        %v877 = vpop.permute.xlu0 %876
        %878 = vrot.lane.b32.xlu0 %v393, 12
        %v879 = vpop.permute.xlu0 %878
        %880 = vrot.lane.b32.xlu0 %v394, 12
        %v881 = vpop.permute.xlu0 %880
        %882 = vrot.lane.b32.xlu0 %v396, 12
        %v883 = vpop.permute.xlu0 %882
        %884 = vrot.lane.b32.xlu0 %v397, 12
        %v885 = vpop.permute.xlu0 %884
        %886 = vrot.lane.b32.xlu0 %v399, 12
        %v887 = vpop.permute.xlu0 %886
        %888 = vrot.lane.b32.xlu0 %v400, 12
        %v889 = vpop.permute.xlu0 %888
        %890 = vrot.lane.b32.xlu0 %v402, 12
        %v891 = vpop.permute.xlu0 %890
        %892 = vrot.lane.b32.xlu0 %v403, 12
        %v893 = vpop.permute.xlu0 %892
        %894 = vrot.lane.b32.xlu0 %v405, 12
        %v895 = vpop.permute.xlu0 %894
        %896 = vrot.lane.b32.xlu0 %v406, 12
        %v897 = vpop.permute.xlu0 %896
        %898 = vrot.lane.b32.xlu0 %v408, 12
        %v899 = vpop.permute.xlu0 %898
        %900 = vrot.lane.b32.xlu0 %v409, 12
        %v901 = vpop.permute.xlu0 %900
        %902 = vrot.lane.b32.xlu0 %v411, 12
        %v903 = vpop.permute.xlu0 %902
        %904 = vrot.lane.b32.xlu0 %v412, 12
        %v905 = vpop.permute.xlu0 %904
        %906 = vrot.lane.b32.xlu0 %v414, 12
        %v907 = vpop.permute.xlu0 %906
        %908 = vrot.lane.b32.xlu0 %v415, 12
        %v909 = vpop.permute.xlu0 %908
        %910 = vrot.lane.b32.xlu0 %v417, 12
        %v911 = vpop.permute.xlu0 %910
        %912 = vrot.lane.b32.xlu0 %v418, 12
        %v913 = vpop.permute.xlu0 %912
        %914 = vrot.lane.b32.xlu0 %v420, 12
        %v915 = vpop.permute.xlu0 %914
        %916 = vrot.lane.b32.xlu0 %v421, 12
        %v917 = vpop.permute.xlu0 %916
        %950 = vrot.lane.b32.xlu0 %v482, 16
        %v951 = vpop.permute.xlu0 %950
        %952 = vrot.lane.b32.xlu0 %v484, 16
        %v953 = vpop.permute.xlu0 %952
        %954 = vrot.lane.b32.xlu0 %v487, 16
        %v955 = vpop.permute.xlu0 %954
        %956 = vrot.lane.b32.xlu0 %v489, 16
        %v957 = vpop.permute.xlu0 %956
        %958 = vrot.lane.b32.xlu0 %v492, 16
        %v959 = vpop.permute.xlu0 %958
        %960 = vrot.lane.b32.xlu0 %v494, 16
        %v961 = vpop.permute.xlu0 %960
        %962 = vrot.lane.b32.xlu0 %v497, 16
        %v963 = vpop.permute.xlu0 %962
        %964 = vrot.lane.b32.xlu0 %v499, 16
        %v965 = vpop.permute.xlu0 %964
        %966 = vrot.lane.b32.xlu0 %v502, 16
        %v967 = vpop.permute.xlu0 %966
        %968 = vrot.lane.b32.xlu0 %v504, 16
        %v969 = vpop.permute.xlu0 %968
        %970 = vrot.lane.b32.xlu0 %v507, 16
        %v971 = vpop.permute.xlu0 %970
        %972 = vrot.lane.b32.xlu0 %v509, 16
        %v973 = vpop.permute.xlu0 %972
        %974 = vrot.lane.b32.xlu0 %v512, 16
        %v975 = vpop.permute.xlu0 %974
        %976 = vrot.lane.b32.xlu0 %v514, 16
        %v977 = vpop.permute.xlu0 %976
        %978 = vrot.lane.b32.xlu0 %v517, 16
        %v979 = vpop.permute.xlu0 %978
        %980 = vrot.lane.b32.xlu0 %v519, 16
        %v981 = vpop.permute.xlu0 %980
        %982 = vrot.lane.b32.xlu0 %v522, 16
        %v983 = vpop.permute.xlu0 %982
        %984 = vrot.lane.b32.xlu0 %v524, 16
        %v985 = vpop.permute.xlu0 %984
        %986 = vrot.lane.b32.xlu0 %v527, 16
        %v987 = vpop.permute.xlu0 %986
        %988 = vrot.lane.b32.xlu0 %v529, 16
        %v989 = vpop.permute.xlu0 %988
        %990 = vrot.lane.b32.xlu0 %v532, 16
        %v991 = vpop.permute.xlu0 %990
        %992 = vrot.lane.b32.xlu0 %v534, 16
        %v993 = vpop.permute.xlu0 %992
        %994 = vrot.lane.b32.xlu0 %v537, 16
        %v995 = vpop.permute.xlu0 %994
        %996 = vrot.lane.b32.xlu0 %v539, 16
        %v997 = vpop.permute.xlu0 %996
        %998 = vrot.lane.b32.xlu0 %v542, 16
        %v999 = vpop.permute.xlu0 %998
        %1000 = vrot.lane.b32.xlu0 %v544, 16
        %v1001 = vpop.permute.xlu0 %1000
        %1002 = vrot.lane.b32.xlu0 %v547, 16
        %v1003 = vpop.permute.xlu0 %1002
        %1004 = vrot.lane.b32.xlu0 %v549, 16
        %v1005 = vpop.permute.xlu0 %1004
        %1006 = vrot.lane.b32.xlu0 %v552, 16
        %v1007 = vpop.permute.xlu0 %1006
        %1008 = vrot.lane.b32.xlu0 %v554, 16
        %v1009 = vpop.permute.xlu0 %1008
        %1010 = vrot.lane.b32.xlu0 %v641, 16
        %v1011 = vpop.permute.xlu0 %1010
        %1012 = vrot.lane.b32.xlu0 %v643, 16
        %v1013 = vpop.permute.xlu0 %1012
        %1046 = vrot.lane.b32.xlu0 %v563, 20
        %v1047 = vpop.permute.xlu0 %1046
        %1048 = vrot.lane.b32.xlu0 %v565, 20
        %v1049 = vpop.permute.xlu0 %1048
        %1050 = vrot.lane.b32.xlu0 %v568, 20
        %v1051 = vpop.permute.xlu0 %1050
        %1052 = vrot.lane.b32.xlu0 %v570, 20
        %v1053 = vpop.permute.xlu0 %1052
        %1054 = vrot.lane.b32.xlu0 %v573, 20
        %v1055 = vpop.permute.xlu0 %1054
        %1056 = vrot.lane.b32.xlu0 %v575, 20
        %v1057 = vpop.permute.xlu0 %1056
        %1058 = vrot.lane.b32.xlu0 %v578, 20
        %v1059 = vpop.permute.xlu0 %1058
        %1060 = vrot.lane.b32.xlu0 %v580, 20
        %v1061 = vpop.permute.xlu0 %1060
        %1062 = vrot.lane.b32.xlu0 %v583, 20
        %v1063 = vpop.permute.xlu0 %1062
        %1064 = vrot.lane.b32.xlu0 %v585, 20
        %v1065 = vpop.permute.xlu0 %1064
        %1066 = vrot.lane.b32.xlu0 %v588, 20
        %v1067 = vpop.permute.xlu0 %1066
        %1068 = vrot.lane.b32.xlu0 %v590, 20
        %v1069 = vpop.permute.xlu0 %1068
        %1070 = vrot.lane.b32.xlu0 %v593, 20
        %v1071 = vpop.permute.xlu0 %1070
        %1072 = vrot.lane.b32.xlu0 %v595, 20
        %v1073 = vpop.permute.xlu0 %1072
        %1074 = vrot.lane.b32.xlu0 %v598, 20
        %v1075 = vpop.permute.xlu0 %1074
        %1076 = vrot.lane.b32.xlu0 %v600, 20
        %v1077 = vpop.permute.xlu0 %1076
        %1078 = vrot.lane.b32.xlu0 %v603, 20
        %v1079 = vpop.permute.xlu0 %1078
        %1080 = vrot.lane.b32.xlu0 %v605, 20
        %v1081 = vpop.permute.xlu0 %1080
        %1082 = vrot.lane.b32.xlu0 %v608, 20
        %v1083 = vpop.permute.xlu0 %1082
        %1084 = vrot.lane.b32.xlu0 %v610, 20
        %v1085 = vpop.permute.xlu0 %1084
        %1086 = vrot.lane.b32.xlu0 %v613, 20
        %v1087 = vpop.permute.xlu0 %1086
        %1088 = vrot.lane.b32.xlu0 %v615, 20
        %v1089 = vpop.permute.xlu0 %1088
        %1090 = vrot.lane.b32.xlu0 %v618, 20
        %v1091 = vpop.permute.xlu0 %1090
        %1092 = vrot.lane.b32.xlu0 %v620, 20
        %v1093 = vpop.permute.xlu0 %1092
        %1094 = vrot.lane.b32.xlu0 %v623, 20
        %v1095 = vpop.permute.xlu0 %1094
        %1096 = vrot.lane.b32.xlu0 %v625, 20
        %v1097 = vpop.permute.xlu0 %1096
        %1098 = vrot.lane.b32.xlu0 %v628, 20
        %v1099 = vpop.permute.xlu0 %1098
        %1100 = vrot.lane.b32.xlu0 %v630, 20
        %v1101 = vpop.permute.xlu0 %1100
        %1102 = vrot.lane.b32.xlu0 %v633, 20
        %v1103 = vpop.permute.xlu0 %1102
        %1104 = vrot.lane.b32.xlu0 %v635, 20
        %v1105 = vpop.permute.xlu0 %1104
        %1106 = vrot.lane.b32.xlu0 %v646, 20
        %v1107 = vpop.permute.xlu0 %1106
        %1108 = vrot.lane.b32.xlu0 %v648, 20
        %v1109 = vpop.permute.xlu0 %1108
        %1142 = vrot.lane.b32.xlu0 %v378, 24
        %v1143 = vpop.permute.xlu0 %1142
        %1144 = vrot.lane.b32.xlu0 %v379, 24
        %v1145 = vpop.permute.xlu0 %1144
        %1146 = vrot.lane.b32.xlu0 %v381, 24
        %v1147 = vpop.permute.xlu0 %1146
        %1148 = vrot.lane.b32.xlu0 %v382, 24
        %v1149 = vpop.permute.xlu0 %1148
        %1150 = vrot.lane.b32.xlu0 %v384, 24
        %v1151 = vpop.permute.xlu0 %1150
        %1152 = vrot.lane.b32.xlu0 %v385, 24
        %v1153 = vpop.permute.xlu0 %1152
        %1154 = vrot.lane.b32.xlu0 %v387, 24
        %v1155 = vpop.permute.xlu0 %1154
        %1156 = vrot.lane.b32.xlu0 %v388, 24
        %v1157 = vpop.permute.xlu0 %1156
        %1158 = vrot.lane.b32.xlu0 %v390, 24
        %v1159 = vpop.permute.xlu0 %1158
        %1160 = vrot.lane.b32.xlu0 %v391, 24
        %v1161 = vpop.permute.xlu0 %1160
        %1162 = vrot.lane.b32.xlu0 %v393, 24
        %v1163 = vpop.permute.xlu0 %1162
        %1164 = vrot.lane.b32.xlu0 %v394, 24
        %v1165 = vpop.permute.xlu0 %1164
        %1166 = vrot.lane.b32.xlu0 %v396, 24
        %v1167 = vpop.permute.xlu0 %1166
        %1168 = vrot.lane.b32.xlu0 %v397, 24
        %v1169 = vpop.permute.xlu0 %1168
        %1170 = vrot.lane.b32.xlu0 %v399, 24
        %v1171 = vpop.permute.xlu0 %1170
        %1172 = vrot.lane.b32.xlu0 %v400, 24
        %v1173 = vpop.permute.xlu0 %1172
        %1174 = vrot.lane.b32.xlu0 %v402, 24
        %v1175 = vpop.permute.xlu0 %1174
        %1176 = vrot.lane.b32.xlu0 %v403, 24
        %v1177 = vpop.permute.xlu0 %1176
        %1178 = vrot.lane.b32.xlu0 %v405, 24
        %v1179 = vpop.permute.xlu0 %1178
        %1180 = vrot.lane.b32.xlu0 %v406, 24
        %v1181 = vpop.permute.xlu0 %1180
        %1182 = vrot.lane.b32.xlu0 %v408, 24
        %v1183 = vpop.permute.xlu0 %1182
        %1184 = vrot.lane.b32.xlu0 %v409, 24
        %v1185 = vpop.permute.xlu0 %1184
        %1186 = vrot.lane.b32.xlu0 %v411, 24
        %v1187 = vpop.permute.xlu0 %1186
        %1188 = vrot.lane.b32.xlu0 %v412, 24
        %v1189 = vpop.permute.xlu0 %1188
        %1190 = vrot.lane.b32.xlu0 %v414, 24
        %v1191 = vpop.permute.xlu0 %1190
        %1192 = vrot.lane.b32.xlu0 %v415, 24
        %v1193 = vpop.permute.xlu0 %1192
        %1194 = vrot.lane.b32.xlu0 %v417, 24
        %v1195 = vpop.permute.xlu0 %1194
        %1196 = vrot.lane.b32.xlu0 %v418, 24
        %v1197 = vpop.permute.xlu0 %1196
        %1198 = vrot.lane.b32.xlu0 %v420, 24
        %v1199 = vpop.permute.xlu0 %1198
        %1200 = vrot.lane.b32.xlu0 %v421, 24
        %v1201 = vpop.permute.xlu0 %1200
        %1202 = vrot.lane.b32.xlu0 %v423, 24
        %v1203 = vpop.permute.xlu0 %1202
        %1204 = vrot.lane.b32.xlu0 %v424, 24
        %v1205 = vpop.permute.xlu0 %1204
        %1238 = vrot.lane.b32.xlu0 %v487, 28
        %v1239 = vpop.permute.xlu0 %1238
        %1240 = vrot.lane.b32.xlu0 %v489, 28
        %v1241 = vpop.permute.xlu0 %1240
        %1242 = vrot.lane.b32.xlu0 %v492, 28
        %v1243 = vpop.permute.xlu0 %1242
        %1244 = vrot.lane.b32.xlu0 %v494, 28
        %v1245 = vpop.permute.xlu0 %1244
        %1246 = vrot.lane.b32.xlu0 %v497, 28
        %v1247 = vpop.permute.xlu0 %1246
        %1248 = vrot.lane.b32.xlu0 %v499, 28
        %v1249 = vpop.permute.xlu0 %1248
        %1250 = vrot.lane.b32.xlu0 %v502, 28
        %v1251 = vpop.permute.xlu0 %1250
        %1252 = vrot.lane.b32.xlu0 %v504, 28
        %v1253 = vpop.permute.xlu0 %1252
        %1254 = vrot.lane.b32.xlu0 %v507, 28
        %v1255 = vpop.permute.xlu0 %1254
        %1256 = vrot.lane.b32.xlu0 %v509, 28
        %v1257 = vpop.permute.xlu0 %1256
        %1258 = vrot.lane.b32.xlu0 %v512, 28
        %v1259 = vpop.permute.xlu0 %1258
        %1260 = vrot.lane.b32.xlu0 %v514, 28
        %v1261 = vpop.permute.xlu0 %1260
        %1262 = vrot.lane.b32.xlu0 %v517, 28
        %v1263 = vpop.permute.xlu0 %1262
        %1264 = vrot.lane.b32.xlu0 %v519, 28
        %v1265 = vpop.permute.xlu0 %1264
        %1266 = vrot.lane.b32.xlu0 %v522, 28
        %v1267 = vpop.permute.xlu0 %1266
        %1268 = vrot.lane.b32.xlu0 %v524, 28
        %v1269 = vpop.permute.xlu0 %1268
        %1270 = vrot.lane.b32.xlu0 %v527, 28
        %v1271 = vpop.permute.xlu0 %1270
        %1272 = vrot.lane.b32.xlu0 %v529, 28
        %v1273 = vpop.permute.xlu0 %1272
        %1274 = vrot.lane.b32.xlu0 %v532, 28
        %v1275 = vpop.permute.xlu0 %1274
        %1276 = vrot.lane.b32.xlu0 %v534, 28
        %v1277 = vpop.permute.xlu0 %1276
        %1278 = vrot.lane.b32.xlu0 %v537, 28
        %v1279 = vpop.permute.xlu0 %1278
        %1280 = vrot.lane.b32.xlu0 %v539, 28
        %v1281 = vpop.permute.xlu0 %1280
        %1282 = vrot.lane.b32.xlu0 %v542, 28
        %v1283 = vpop.permute.xlu0 %1282
        %1284 = vrot.lane.b32.xlu0 %v544, 28
        %v1285 = vpop.permute.xlu0 %1284
        %1286 = vrot.lane.b32.xlu0 %v547, 28
        %v1287 = vpop.permute.xlu0 %1286
        %1288 = vrot.lane.b32.xlu0 %v549, 28
        %v1289 = vpop.permute.xlu0 %1288
        %1290 = vrot.lane.b32.xlu0 %v552, 28
        %v1291 = vpop.permute.xlu0 %1290
        %1292 = vrot.lane.b32.xlu0 %v554, 28
        %v1293 = vpop.permute.xlu0 %1292
        %1294 = vrot.lane.b32.xlu0 %v641, 28
        %v1295 = vpop.permute.xlu0 %1294
        %1296 = vrot.lane.b32.xlu0 %v643, 28
        %v1297 = vpop.permute.xlu0 %1296
        %1298 = vrot.lane.b32.xlu0 %v654, 28
        %v1299 = vpop.permute.xlu0 %1298
        %1300 = vrot.lane.b32.xlu0 %v656, 28
        %v1301 = vpop.permute.xlu0 %1300
        %1334 = vrot.lane.b32.xlu0 %v568, 32
        %v1335 = vpop.permute.xlu0 %1334
        %1336 = vrot.lane.b32.xlu0 %v570, 32
        %v1337 = vpop.permute.xlu0 %1336
        %1338 = vrot.lane.b32.xlu0 %v573, 32
        %v1339 = vpop.permute.xlu0 %1338
        %1340 = vrot.lane.b32.xlu0 %v575, 32
        %v1341 = vpop.permute.xlu0 %1340
        %1342 = vrot.lane.b32.xlu0 %v578, 32
        %v1343 = vpop.permute.xlu0 %1342
        %1344 = vrot.lane.b32.xlu0 %v580, 32
        %v1345 = vpop.permute.xlu0 %1344
        %1346 = vrot.lane.b32.xlu0 %v583, 32
        %v1347 = vpop.permute.xlu0 %1346
        %1348 = vrot.lane.b32.xlu0 %v585, 32
        %v1349 = vpop.permute.xlu0 %1348
        %1350 = vrot.lane.b32.xlu0 %v588, 32
        %v1351 = vpop.permute.xlu0 %1350
        %1352 = vrot.lane.b32.xlu0 %v590, 32
        %v1353 = vpop.permute.xlu0 %1352
        %1354 = vrot.lane.b32.xlu0 %v593, 32
        %v1355 = vpop.permute.xlu0 %1354
        %1356 = vrot.lane.b32.xlu0 %v595, 32
        %v1357 = vpop.permute.xlu0 %1356
        %1358 = vrot.lane.b32.xlu0 %v598, 32
        %v1359 = vpop.permute.xlu0 %1358
        %1360 = vrot.lane.b32.xlu0 %v600, 32
        %v1361 = vpop.permute.xlu0 %1360
        %1362 = vrot.lane.b32.xlu0 %v603, 32
        %v1363 = vpop.permute.xlu0 %1362
        %1364 = vrot.lane.b32.xlu0 %v605, 32
        %v1365 = vpop.permute.xlu0 %1364
        %1366 = vrot.lane.b32.xlu0 %v608, 32
        %v1367 = vpop.permute.xlu0 %1366
        %1368 = vrot.lane.b32.xlu0 %v610, 32
        %v1369 = vpop.permute.xlu0 %1368
        %1370 = vrot.lane.b32.xlu0 %v613, 32
        %v1371 = vpop.permute.xlu0 %1370
        %1372 = vrot.lane.b32.xlu0 %v615, 32
        %v1373 = vpop.permute.xlu0 %1372
        %1374 = vrot.lane.b32.xlu0 %v618, 32
        %v1375 = vpop.permute.xlu0 %1374
        %1376 = vrot.lane.b32.xlu0 %v620, 32
        %v1377 = vpop.permute.xlu0 %1376
        %1378 = vrot.lane.b32.xlu0 %v623, 32
        %v1379 = vpop.permute.xlu0 %1378
        %1380 = vrot.lane.b32.xlu0 %v625, 32
        %v1381 = vpop.permute.xlu0 %1380
        %1382 = vrot.lane.b32.xlu0 %v628, 32
        %v1383 = vpop.permute.xlu0 %1382
        %1384 = vrot.lane.b32.xlu0 %v630, 32
        %v1385 = vpop.permute.xlu0 %1384
        %1386 = vrot.lane.b32.xlu0 %v633, 32
        %v1387 = vpop.permute.xlu0 %1386
        %1388 = vrot.lane.b32.xlu0 %v635, 32
        %v1389 = vpop.permute.xlu0 %1388
        %1390 = vrot.lane.b32.xlu0 %v646, 32
        %v1391 = vpop.permute.xlu0 %1390
        %1392 = vrot.lane.b32.xlu0 %v648, 32
        %v1393 = vpop.permute.xlu0 %1392
        %1394 = vrot.lane.b32.xlu0 %v659, 32
        %v1395 = vpop.permute.xlu0 %1394
        %1396 = vrot.lane.b32.xlu0 %v661, 32
        %v1397 = vpop.permute.xlu0 %1396
        %v1430 = vsel %vm251, %v372, %v663
        %v1431 = vsel %vm251, %v373, %v665
        %v1432 = vsel %vm251, %v375, %v667
        %v1433 = vsel %vm251, %v376, %v669
        %v1434 = vsel %vm251, %v378, %v671
        %v1435 = vsel %vm251, %v379, %v673
        %v1436 = vsel %vm251, %v381, %v675
        %v1437 = vsel %vm251, %v382, %v677
        %v1438 = vsel %vm251, %v384, %v679
        %v1439 = vsel %vm251, %v385, %v681
        %v1440 = vsel %vm251, %v387, %v683
        %v1441 = vsel %vm251, %v388, %v685
        %v1442 = vsel %vm251, %v390, %v687
        %v1443 = vsel %vm251, %v391, %v689
        %v1444 = vsel %vm251, %v393, %v691
        %v1445 = vsel %vm251, %v394, %v693
        %v1446 = vsel %vm251, %v396, %v695
        %v1447 = vsel %vm251, %v397, %v697
        %v1448 = vsel %vm251, %v399, %v699
        %v1449 = vsel %vm251, %v400, %v701
        %v1450 = vsel %vm251, %v402, %v703
        %v1451 = vsel %vm251, %v403, %v705
        %v1452 = vsel %vm251, %v405, %v707
        %v1453 = vsel %vm251, %v406, %v709
        %v1454 = vsel %vm251, %v408, %v711
        %v1455 = vsel %vm251, %v409, %v713
        %v1456 = vsel %vm251, %v411, %v715
        %v1457 = vsel %vm251, %v412, %v717
        %v1458 = vsel %vm251, %v414, %v719
        %v1459 = vsel %vm251, %v415, %v721
        %v1460 = vsel %vm251, %v417, %v723
        %v1461 = vsel %vm251, %v418, %v725
        %vm1462 = vcmask 64512
        %v1463 = vsel %vm1462, %v1430, %v759
        %v1464 = vsel %vm1462, %v1431, %v761
        %v1465 = vsel %vm1462, %v1432, %v763
        %v1466 = vsel %vm1462, %v1433, %v765
        %v1467 = vsel %vm1462, %v1434, %v767
        %v1468 = vsel %vm1462, %v1435, %v769
        %v1469 = vsel %vm1462, %v1436, %v771
        %v1470 = vsel %vm1462, %v1437, %v773
        %v1471 = vsel %vm1462, %v1438, %v775
        %v1472 = vsel %vm1462, %v1439, %v777
        %v1473 = vsel %vm1462, %v1440, %v779
        %v1474 = vsel %vm1462, %v1441, %v781
        %v1475 = vsel %vm1462, %v1442, %v783
        %v1476 = vsel %vm1462, %v1443, %v785
        %v1477 = vsel %vm1462, %v1444, %v787
        %v1478 = vsel %vm1462, %v1445, %v789
        %v1479 = vsel %vm1462, %v1446, %v791
        %v1480 = vsel %vm1462, %v1447, %v793
        %v1481 = vsel %vm1462, %v1448, %v795
        %v1482 = vsel %vm1462, %v1449, %v797
        %v1483 = vsel %vm1462, %v1450, %v799
        %v1484 = vsel %vm1462, %v1451, %v801
        %v1485 = vsel %vm1462, %v1452, %v803
        %v1486 = vsel %vm1462, %v1453, %v805
        %v1487 = vsel %vm1462, %v1454, %v807
        %v1488 = vsel %vm1462, %v1455, %v809
        %v1489 = vsel %vm1462, %v1456, %v811
        %v1490 = vsel %vm1462, %v1457, %v813
        %v1491 = vsel %vm1462, %v1458, %v815
        %v1492 = vsel %vm1462, %v1459, %v817
        %v1493 = vsel %vm1462, %v1460, %v819
        %v1494 = vsel %vm1462, %v1461, %v821
        %vm1495 = vcmask 97280
        %v1496 = vsel %vm1495, %v1463, %v855
        %v1497 = vsel %vm1495, %v1464, %v857
        %v1498 = vsel %vm1495, %v1465, %v859
        %v1499 = vsel %vm1495, %v1466, %v861
        %v1500 = vsel %vm1495, %v1467, %v863
        %v1501 = vsel %vm1495, %v1468, %v865
        %v1502 = vsel %vm1495, %v1469, %v867
        %v1503 = vsel %vm1495, %v1470, %v869
        %v1504 = vsel %vm1495, %v1471, %v871
        %v1505 = vsel %vm1495, %v1472, %v873
        %v1506 = vsel %vm1495, %v1473, %v875
        %v1507 = vsel %vm1495, %v1474, %v877
        %v1508 = vsel %vm1495, %v1475, %v879
        %v1509 = vsel %vm1495, %v1476, %v881
        %v1510 = vsel %vm1495, %v1477, %v883
        %v1511 = vsel %vm1495, %v1478, %v885
        %v1512 = vsel %vm1495, %v1479, %v887
        %v1513 = vsel %vm1495, %v1480, %v889
        %v1514 = vsel %vm1495, %v1481, %v891
        %v1515 = vsel %vm1495, %v1482, %v893
        %v1516 = vsel %vm1495, %v1483, %v895
        %v1517 = vsel %vm1495, %v1484, %v897
        %v1518 = vsel %vm1495, %v1485, %v899
        %v1519 = vsel %vm1495, %v1486, %v901
        %v1520 = vsel %vm1495, %v1487, %v903
        %v1521 = vsel %vm1495, %v1488, %v905
        %v1522 = vsel %vm1495, %v1489, %v907
        %v1523 = vsel %vm1495, %v1490, %v909
        %v1524 = vsel %vm1495, %v1491, %v911
        %v1525 = vsel %vm1495, %v1492, %v913
        %v1526 = vsel %vm1495, %v1493, %v915
        %v1527 = vsel %vm1495, %v1494, %v917
        %vm1528 = vcmask 130048
        %v1529 = vsel %vm1528, %v1496, %v951
        %v1530 = vsel %vm1528, %v1497, %v953
        %v1531 = vsel %vm1528, %v1498, %v955
        %v1532 = vsel %vm1528, %v1499, %v957
        %v1533 = vsel %vm1528, %v1500, %v959
        %v1534 = vsel %vm1528, %v1501, %v961
        %v1535 = vsel %vm1528, %v1502, %v963
        %v1536 = vsel %vm1528, %v1503, %v965
        %v1537 = vsel %vm1528, %v1504, %v967
        %v1538 = vsel %vm1528, %v1505, %v969
        %v1539 = vsel %vm1528, %v1506, %v971
        %v1540 = vsel %vm1528, %v1507, %v973
        %v1541 = vsel %vm1528, %v1508, %v975
        %v1542 = vsel %vm1528, %v1509, %v977
        %v1543 = vsel %vm1528, %v1510, %v979
        %v1544 = vsel %vm1528, %v1511, %v981
        %v1545 = vsel %vm1528, %v1512, %v983
        %v1546 = vsel %vm1528, %v1513, %v985
        %v1547 = vsel %vm1528, %v1514, %v987
        %v1548 = vsel %vm1528, %v1515, %v989
        %v1549 = vsel %vm1528, %v1516, %v991
        %v1550 = vsel %vm1528, %v1517, %v993
        %v1551 = vsel %vm1528, %v1518, %v995
        %v1552 = vsel %vm1528, %v1519, %v997
        %v1553 = vsel %vm1528, %v1520, %v999
        %v1554 = vsel %vm1528, %v1521, %v1001
        %v1555 = vsel %vm1528, %v1522, %v1003
        %v1556 = vsel %vm1528, %v1523, %v1005
        %v1557 = vsel %vm1528, %v1524, %v1007
        %v1558 = vsel %vm1528, %v1525, %v1009
        %v1559 = vsel %vm1528, %v1526, %v1011
        %v1560 = vsel %vm1528, %v1527, %v1013
        %vm1561 = vcmask 162816
        %v1562 = vsel %vm1561, %v1529, %v1047
        %v1563 = vsel %vm1561, %v1530, %v1049
        %v1564 = vsel %vm1561, %v1531, %v1051
        %v1565 = vsel %vm1561, %v1532, %v1053
        %v1566 = vsel %vm1561, %v1533, %v1055
        %v1567 = vsel %vm1561, %v1534, %v1057
        %v1568 = vsel %vm1561, %v1535, %v1059
        %v1569 = vsel %vm1561, %v1536, %v1061
        %v1570 = vsel %vm1561, %v1537, %v1063
        %v1571 = vsel %vm1561, %v1538, %v1065
        %v1572 = vsel %vm1561, %v1539, %v1067
        %v1573 = vsel %vm1561, %v1540, %v1069
        %v1574 = vsel %vm1561, %v1541, %v1071
        %v1575 = vsel %vm1561, %v1542, %v1073
        %v1576 = vsel %vm1561, %v1543, %v1075
        %v1577 = vsel %vm1561, %v1544, %v1077
        %v1578 = vsel %vm1561, %v1545, %v1079
        %v1579 = vsel %vm1561, %v1546, %v1081
        %v1580 = vsel %vm1561, %v1547, %v1083
        %v1581 = vsel %vm1561, %v1548, %v1085
        %v1582 = vsel %vm1561, %v1549, %v1087
        %v1583 = vsel %vm1561, %v1550, %v1089
        %v1584 = vsel %vm1561, %v1551, %v1091
        %v1585 = vsel %vm1561, %v1552, %v1093
        %v1586 = vsel %vm1561, %v1553, %v1095
        %v1587 = vsel %vm1561, %v1554, %v1097
        %v1588 = vsel %vm1561, %v1555, %v1099
        %v1589 = vsel %vm1561, %v1556, %v1101
        %v1590 = vsel %vm1561, %v1557, %v1103
        %v1591 = vsel %vm1561, %v1558, %v1105
        %v1592 = vsel %vm1561, %v1559, %v1107
        %v1593 = vsel %vm1561, %v1560, %v1109
        %vm1594 = vcmask 195584
        %v1595 = vsel %vm1594, %v1562, %v1143
        %v1596 = vsel %vm1594, %v1563, %v1145
        %v1597 = vsel %vm1594, %v1564, %v1147
        %v1598 = vsel %vm1594, %v1565, %v1149
        %v1599 = vsel %vm1594, %v1566, %v1151
        %v1600 = vsel %vm1594, %v1567, %v1153
        %v1601 = vsel %vm1594, %v1568, %v1155
        %v1602 = vsel %vm1594, %v1569, %v1157
        %v1603 = vsel %vm1594, %v1570, %v1159
        %v1604 = vsel %vm1594, %v1571, %v1161
        %v1605 = vsel %vm1594, %v1572, %v1163
        %v1606 = vsel %vm1594, %v1573, %v1165
        %v1607 = vsel %vm1594, %v1574, %v1167
        %v1608 = vsel %vm1594, %v1575, %v1169
        %v1609 = vsel %vm1594, %v1576, %v1171
        %v1610 = vsel %vm1594, %v1577, %v1173
        %v1611 = vsel %vm1594, %v1578, %v1175
        %v1612 = vsel %vm1594, %v1579, %v1177
        %v1613 = vsel %vm1594, %v1580, %v1179
        %v1614 = vsel %vm1594, %v1581, %v1181
        %v1615 = vsel %vm1594, %v1582, %v1183
        %v1616 = vsel %vm1594, %v1583, %v1185
        %v1617 = vsel %vm1594, %v1584, %v1187
        %v1618 = vsel %vm1594, %v1585, %v1189
        %v1619 = vsel %vm1594, %v1586, %v1191
        %v1620 = vsel %vm1594, %v1587, %v1193
        %v1621 = vsel %vm1594, %v1588, %v1195
        %v1622 = vsel %vm1594, %v1589, %v1197
        %v1623 = vsel %vm1594, %v1590, %v1199
        %v1624 = vsel %vm1594, %v1591, %v1201
        %v1625 = vsel %vm1594, %v1592, %v1203
        %v1626 = vsel %vm1594, %v1593, %v1205
        %vm1627 = vcmask 228352
        %v1628 = vsel %vm1627, %v1595, %v1239
        %v1629 = vsel %vm1627, %v1596, %v1241
        %v1630 = vsel %vm1627, %v1597, %v1243
        %v1631 = vsel %vm1627, %v1598, %v1245
        %v1632 = vsel %vm1627, %v1599, %v1247
        %v1633 = vsel %vm1627, %v1600, %v1249
        %v1634 = vsel %vm1627, %v1601, %v1251
        %v1635 = vsel %vm1627, %v1602, %v1253
        %v1636 = vsel %vm1627, %v1603, %v1255
        %v1637 = vsel %vm1627, %v1604, %v1257
        %v1638 = vsel %vm1627, %v1605, %v1259
        %v1639 = vsel %vm1627, %v1606, %v1261
        %v1640 = vsel %vm1627, %v1607, %v1263
        %v1641 = vsel %vm1627, %v1608, %v1265
        %v1642 = vsel %vm1627, %v1609, %v1267
        %v1643 = vsel %vm1627, %v1610, %v1269
        %v1644 = vsel %vm1627, %v1611, %v1271
        %v1645 = vsel %vm1627, %v1612, %v1273
        %v1646 = vsel %vm1627, %v1613, %v1275
        %v1647 = vsel %vm1627, %v1614, %v1277
        %v1648 = vsel %vm1627, %v1615, %v1279
        %v1649 = vsel %vm1627, %v1616, %v1281
        %v1650 = vsel %vm1627, %v1617, %v1283
        %v1651 = vsel %vm1627, %v1618, %v1285
        %v1652 = vsel %vm1627, %v1619, %v1287
        %v1653 = vsel %vm1627, %v1620, %v1289
        %v1654 = vsel %vm1627, %v1621, %v1291
        %v1655 = vsel %vm1627, %v1622, %v1293
        %v1656 = vsel %vm1627, %v1623, %v1295
        %v1657 = vsel %vm1627, %v1624, %v1297
        %v1658 = vsel %vm1627, %v1625, %v1299
        %v1659 = vsel %vm1627, %v1626, %v1301
        %vm1660 = vcmask 261120
        %v1661 = vsel %vm1660, %v1628, %v1335
        %v1662 = vsel %vm1660, %v1629, %v1337
        %v1663 = vsel %vm1660, %v1630, %v1339
        %v1664 = vsel %vm1660, %v1631, %v1341
        %v1665 = vsel %vm1660, %v1632, %v1343
        %v1666 = vsel %vm1660, %v1633, %v1345
        %v1667 = vsel %vm1660, %v1634, %v1347
        %v1668 = vsel %vm1660, %v1635, %v1349
        %v1669 = vsel %vm1660, %v1636, %v1351
        %v1670 = vsel %vm1660, %v1637, %v1353
        %v1671 = vsel %vm1660, %v1638, %v1355
        %v1672 = vsel %vm1660, %v1639, %v1357
        %v1673 = vsel %vm1660, %v1640, %v1359
        %v1674 = vsel %vm1660, %v1641, %v1361
        %v1675 = vsel %vm1660, %v1642, %v1363
        %v1676 = vsel %vm1660, %v1643, %v1365
        %v1677 = vsel %vm1660, %v1644, %v1367
        %v1678 = vsel %vm1660, %v1645, %v1369
        %v1679 = vsel %vm1660, %v1646, %v1371
        %v1680 = vsel %vm1660, %v1647, %v1373
        %v1681 = vsel %vm1660, %v1648, %v1375
        %v1682 = vsel %vm1660, %v1649, %v1377
        %v1683 = vsel %vm1660, %v1650, %v1379
        %v1684 = vsel %vm1660, %v1651, %v1381
        %v1685 = vsel %vm1660, %v1652, %v1383
        %v1686 = vsel %vm1660, %v1653, %v1385
        %v1687 = vsel %vm1660, %v1654, %v1387
        %v1688 = vsel %vm1660, %v1655, %v1389
        %v1689 = vsel %vm1660, %v1656, %v1391
        %v1690 = vsel %vm1660, %v1657, %v1393
        %v1691 = vsel %vm1660, %v1658, %v1395
        %v1692 = vsel %vm1660, %v1659, %v1397
        %v1693 = vld [vmem:[%s1] sm:$0xff]
        %v1694 = vld [vmem:[%s1 + $0x8] sm:$0xff]
        %v1695 = vld [vmem:[%s1 + $0x10] sm:$0xff]
        %v1696 = vld [vmem:[%s1 + $0x18] sm:$0xff]
        %v1697 = vld [vmem:[%s1 + $0x20] sm:$0xf]
        %v1698 = vld [vmem:[#allocation4] sm:$0x1]
        %v1700 = vlaneseq
        %v1701 = vshrl.u32 %v1700, 7
        %v1702 = vsub.s32 0, %v1701
        %v1703 = vrot.slane %v1698, %v1702
        %vm1705 = vcmask 293888
        %v1707 = vsel %vm1705, %v1661, 0
        %v1710 = vsel %vm1705, %v1662, 0
        %v1713 = vsel %vm1705, %v1663, 0
        %v1716 = vsel %vm1705, %v1664, 0
        %v1719 = vsel %vm1705, %v1665, 0
        %v1722 = vsel %vm1705, %v1666, 0
        %v1725 = vsel %vm1705, %v1667, 0
        %v1728 = vsel %vm1705, %v1668, 0
        %v1731 = vsel %vm1705, %v1669, 0
        %v1734 = vsel %vm1705, %v1670, 0
        %v1737 = vsel %vm1705, %v1671, 0
        %v1740 = vsel %vm1705, %v1672, 0
        %v1743 = vsel %vm1705, %v1673, 0
        %v1746 = vsel %vm1705, %v1674, 0
        %v1749 = vsel %vm1705, %v1675, 0
        %v1752 = vsel %vm1705, %v1676, 0
        %v1755 = vsel %vm1705, %v1677, 0
        %v1758 = vsel %vm1705, %v1678, 0
        %v1761 = vsel %vm1705, %v1679, 0
        %v1764 = vsel %vm1705, %v1680, 0
        %v1767 = vsel %vm1705, %v1681, 0
        %v1770 = vsel %vm1705, %v1682, 0
        %v1773 = vsel %vm1705, %v1683, 0
        %v1776 = vsel %vm1705, %v1684, 0
        %v1779 = vsel %vm1705, %v1685, 0
        %v1782 = vsel %vm1705, %v1686, 0
        %v1785 = vsel %vm1705, %v1687, 0
        %v1788 = vsel %vm1705, %v1688, 0
        %v1791 = vsel %vm1705, %v1689, 0
        %v1794 = vsel %vm1705, %v1690, 0
        %v1797 = vsel %vm1705, %v1691, 0
        %v1800 = vsel %vm1705, %v1692, 0
        %vm1802 = vcmask 1043456
        %v1804 = vsel %vm1802, %v1697, 0
        %1806 = vmatprep.subr.mxu0 0.0
        %1807 = vmatpush1.msra.mxu0 %v1693
        %1808 = vmatprep.subr.mxu0 0.0
        %1809 = vmatpush1.msra.mxu0 %v1694
        %1810 = vmatprep.subr.mxu0 0.0
        %1811 = vmatpush1.msra.mxu0 %v1695
        %1812 = vmatprep.subr.mxu0 0.0
        %1813 = vmatpush1.msra.mxu0 %v1696
        %1814 = vmatprep.subr.mxu0 0.0
        %1815 = vmatpush1.msra.mxu0 %v1804
        %1816 = vmatprep.subr.mxu0 0.0
        %1817 = vmatpush1.msra.mxu0 0.0
        %1818 = vmatprep.subr.mxu0 0.0
        %1819 = vmatpush1.msra.mxu0 0.0
        %1820 = vmatprep.subr.mxu0 0.0
        %1821 = vmatpush1.msra.mxu0 0.0
        %1822 = vmatprep.subr.mxu0 0.0
        %1823 = vmatpush1.msra.mxu0 0.0
        %1824 = vmatprep.subr.mxu0 0.0
        %1825 = vmatpush1.msra.mxu0 0.0
        %1826 = vmatprep.subr.mxu0 0.0
        %1827 = vmatpush1.msra.mxu0 0.0
        %1828 = vmatprep.subr.mxu0 0.0
        %1829 = vmatpush1.msra.mxu0 0.0
        %1830 = vmatprep.subr.mxu0 0.0
        %1831 = vmatpush1.msra.mxu0 0.0
        %1832 = vmatprep.subr.mxu0 0.0
        %1833 = vmatpush1.msra.mxu0 0.0
        %1834 = vmatprep.subr.mxu0 0.0
        %1835 = vmatpush1.msra.mxu0 0.0
        %1836 = vmatprep.subr.mxu0 0.0
        %1837 = vmatpush1.msra.mxu0 0.0
        %1838 = vmatprep.subr.mxu0 0.0
        %1839 = vmatpush1.msra.mxu0 0.0
        %1840 = vmatprep.subr.mxu0 0.0
        %1841 = vmatpush1.msra.mxu0 0.0
        %1842 = vmatprep.subr.mxu0 0.0
        %1843 = vmatpush1.msra.mxu0 0.0
        %1844 = vmatprep.subr.mxu0 0.0
        %1845 = vmatpush1.msra.mxu0 0.0
        %1846 = vmatprep.subr.mxu0 0.0
        %1847 = vmatpush1.msra.mxu0 0.0
        %1848 = vmatprep.subr.mxu0 0.0
        %1849 = vmatpush1.msra.mxu0 0.0
        %1850 = vmatprep.subr.mxu0 0.0
        %1851 = vmatpush1.msra.mxu0 0.0
        %1852 = vmatprep.subr.mxu0 0.0
        %1853 = vmatpush1.msra.mxu0 0.0
        %1854 = vmatprep.subr.mxu0 0.0
        %1855 = vmatpush1.msra.mxu0 0.0
        %1856 = vmatprep.subr.mxu0 0.0
        %1857 = vmatpush1.msra.mxu0 0.0
        %1858 = vmatprep.subr.mxu0 0.0
        %1859 = vmatpush1.msra.mxu0 0.0
        %1860 = vmatprep.subr.mxu0 0.0
        %1861 = vmatpush1.msra.mxu0 0.0
        %1862 = vmatprep.subr.mxu0 0.0
        %1863 = vmatpush1.msra.mxu0 0.0
        %1864 = vmatprep.subr.mxu0 0.0
        %1865 = vmatpush1.msra.mxu0 0.0
        %1866 = vmatprep.subr.mxu0 0.0
        %1867 = vmatpush1.msra.mxu0 0.0
        %1868 = vmatprep.subr.mxu0 0.0
        %1869 = vmatpush1.msra.mxu0 0.0
        %1870 = vmatprep.mubr.f32.mxu0 0.0
        %1871 = vmatmul.mubr.f32.gmra.mrb[0].mxu0 %v1707
        %v1872 = vpop.f32.mrb[0].mxu0
        %v1873 = vadd.f32 %v1703, %v1872
        %v1874 = vpop.f32.mrb[0].mxu0
        %1875 = vmatprep.mubr.f32.mxu0 0.0
        %1876 = vmatmul.mubr.f32.gmra.mrb[0].mxu0 %v1710
        %v1877 = vpop.f32.mrb[0].mxu0
        %v1878 = vadd.f32 %v1703, %v1877
        %v1879 = vpop.f32.mrb[0].mxu0
        %1880 = vmatprep.mubr.f32.mxu0 0.0
        %1881 = vmatmul.mubr.f32.gmra.mrb[0].mxu0 %v1713
        %v1882 = vpop.f32.mrb[0].mxu0
        %v1883 = vadd.f32 %v1703, %v1882
        %v1884 = vpop.f32.mrb[0].mxu0
        %1885 = vmatprep.mubr.f32.mxu0 0.0
        %1886 = vmatmul.mubr.f32.gmra.mrb[0].mxu0 %v1716
        %v1887 = vpop.f32.mrb[0].mxu0
        %v1888 = vadd.f32 %v1703, %v1887
        %v1889 = vpop.f32.mrb[0].mxu0
        %1890 = vmatprep.mubr.f32.mxu0 0.0
        %1891 = vmatmul.mubr.f32.gmra.mrb[0].mxu0 %v1719
        %v1892 = vpop.f32.mrb[0].mxu0
        %v1893 = vadd.f32 %v1703, %v1892
        %v1894 = vpop.f32.mrb[0].mxu0
        %1895 = vmatprep.mubr.f32.mxu0 0.0
        %1896 = vmatmul.mubr.f32.gmra.mrb[0].mxu0 %v1722
        %v1897 = vpop.f32.mrb[0].mxu0
        %v1898 = vadd.f32 %v1703, %v1897
        %v1899 = vpop.f32.mrb[0].mxu0
        %1900 = vmatprep.mubr.f32.mxu0 0.0
        %1901 = vmatmul.mubr.f32.gmra.mrb[0].mxu0 %v1725
        %v1902 = vpop.f32.mrb[0].mxu0
        %v1903 = vadd.f32 %v1703, %v1902
        %v1904 = vpop.f32.mrb[0].mxu0
        %1905 = vmatprep.mubr.f32.mxu0 0.0
        %1906 = vmatmul.mubr.f32.gmra.mrb[0].mxu0 %v1728
        %v1907 = vpop.f32.mrb[0].mxu0
        %v1908 = vadd.f32 %v1703, %v1907
        %v1909 = vpop.f32.mrb[0].mxu0
        %1910 = vmatprep.mubr.f32.mxu0 0.0
        %1911 = vmatmul.mubr.f32.gmra.mrb[0].mxu0 %v1731
        %v1912 = vpop.f32.mrb[0].mxu0
        %v1913 = vadd.f32 %v1703, %v1912
        %v1914 = vpop.f32.mrb[0].mxu0
        %1915 = vmatprep.mubr.f32.mxu0 0.0
        %1916 = vmatmul.mubr.f32.gmra.mrb[0].mxu0 %v1734
        %v1917 = vpop.f32.mrb[0].mxu0
        %v1918 = vadd.f32 %v1703, %v1917
        %v1919 = vpop.f32.mrb[0].mxu0
        %1920 = vmatprep.mubr.f32.mxu0 0.0
        %1921 = vmatmul.mubr.f32.gmra.mrb[0].mxu0 %v1737
        %v1922 = vpop.f32.mrb[0].mxu0
        %v1923 = vadd.f32 %v1703, %v1922
        %v1924 = vpop.f32.mrb[0].mxu0
        %1925 = vmatprep.mubr.f32.mxu0 0.0
        %1926 = vmatmul.mubr.f32.gmra.mrb[0].mxu0 %v1740
        %v1927 = vpop.f32.mrb[0].mxu0
        %v1928 = vadd.f32 %v1703, %v1927
        %v1929 = vpop.f32.mrb[0].mxu0
        %1930 = vmatprep.mubr.f32.mxu0 0.0
        %1931 = vmatmul.mubr.f32.gmra.mrb[0].mxu0 %v1743
        %v1932 = vpop.f32.mrb[0].mxu0
        %v1933 = vadd.f32 %v1703, %v1932
        %v1934 = vpop.f32.mrb[0].mxu0
        %1935 = vmatprep.mubr.f32.mxu0 0.0
        %1936 = vmatmul.mubr.f32.gmra.mrb[0].mxu0 %v1746
        %v1937 = vpop.f32.mrb[0].mxu0
        %v1938 = vadd.f32 %v1703, %v1937
        %v1939 = vpop.f32.mrb[0].mxu0
        %1940 = vmatprep.mubr.f32.mxu0 0.0
        %1941 = vmatmul.mubr.f32.gmra.mrb[0].mxu0 %v1749
        %v1942 = vpop.f32.mrb[0].mxu0
        %v1943 = vadd.f32 %v1703, %v1942
        %v1944 = vpop.f32.mrb[0].mxu0
        %1945 = vmatprep.mubr.f32.mxu0 0.0
        %1946 = vmatmul.mubr.f32.gmra.mrb[0].mxu0 %v1752
        %v1947 = vpop.f32.mrb[0].mxu0
        %v1948 = vadd.f32 %v1703, %v1947
        %v1949 = vpop.f32.mrb[0].mxu0
        %1950 = vmatprep.mubr.f32.mxu0 0.0
        %1951 = vmatmul.mubr.f32.gmra.mrb[0].mxu0 %v1755
        %v1952 = vpop.f32.mrb[0].mxu0
        %v1953 = vadd.f32 %v1703, %v1952
        %v1954 = vpop.f32.mrb[0].mxu0
        %1955 = vmatprep.mubr.f32.mxu0 0.0
        %1956 = vmatmul.mubr.f32.gmra.mrb[0].mxu0 %v1758
        %v1957 = vpop.f32.mrb[0].mxu0
        %v1958 = vadd.f32 %v1703, %v1957
        %v1959 = vpop.f32.mrb[0].mxu0
        %1960 = vmatprep.mubr.f32.mxu0 0.0
        %1961 = vmatmul.mubr.f32.gmra.mrb[0].mxu0 %v1761
        %v1962 = vpop.f32.mrb[0].mxu0
        %v1963 = vadd.f32 %v1703, %v1962
        %v1964 = vpop.f32.mrb[0].mxu0
        %1965 = vmatprep.mubr.f32.mxu0 0.0
        %1966 = vmatmul.mubr.f32.gmra.mrb[0].mxu0 %v1764
        %v1967 = vpop.f32.mrb[0].mxu0
        %v1968 = vadd.f32 %v1703, %v1967
        %v1969 = vpop.f32.mrb[0].mxu0
        %1970 = vmatprep.mubr.f32.mxu0 0.0
        %1971 = vmatmul.mubr.f32.gmra.mrb[0].mxu0 %v1767
        %v1972 = vpop.f32.mrb[0].mxu0
        %v1973 = vadd.f32 %v1703, %v1972
        %v1974 = vpop.f32.mrb[0].mxu0
        %1975 = vmatprep.mubr.f32.mxu0 0.0
        %1976 = vmatmul.mubr.f32.gmra.mrb[0].mxu0 %v1770
        %v1977 = vpop.f32.mrb[0].mxu0
        %v1978 = vadd.f32 %v1703, %v1977
        %v1979 = vpop.f32.mrb[0].mxu0
        %1980 = vmatprep.mubr.f32.mxu0 0.0
        %1981 = vmatmul.mubr.f32.gmra.mrb[0].mxu0 %v1773
        %v1982 = vpop.f32.mrb[0].mxu0
        %v1983 = vadd.f32 %v1703, %v1982
        %v1984 = vpop.f32.mrb[0].mxu0
        %1985 = vmatprep.mubr.f32.mxu0 0.0
        %1986 = vmatmul.mubr.f32.gmra.mrb[0].mxu0 %v1776
        %v1987 = vpop.f32.mrb[0].mxu0
        %v1988 = vadd.f32 %v1703, %v1987
        %v1989 = vpop.f32.mrb[0].mxu0
        %1990 = vmatprep.mubr.f32.mxu0 0.0
        %1991 = vmatmul.mubr.f32.gmra.mrb[0].mxu0 %v1779
        %v1992 = vpop.f32.mrb[0].mxu0
        %v1993 = vadd.f32 %v1703, %v1992
        %v1994 = vpop.f32.mrb[0].mxu0
        %1995 = vmatprep.mubr.f32.mxu0 0.0
        %1996 = vmatmul.mubr.f32.gmra.mrb[0].mxu0 %v1782
        %v1997 = vpop.f32.mrb[0].mxu0
        %v1998 = vadd.f32 %v1703, %v1997
        %v1999 = vpop.f32.mrb[0].mxu0
        %2000 = vmatprep.mubr.f32.mxu0 0.0
        %2001 = vmatmul.mubr.f32.gmra.mrb[0].mxu0 %v1785
        %v2002 = vpop.f32.mrb[0].mxu0
        %v2003 = vadd.f32 %v1703, %v2002
        %v2004 = vpop.f32.mrb[0].mxu0
        %2005 = vmatprep.mubr.f32.mxu0 0.0
        %2006 = vmatmul.mubr.f32.gmra.mrb[0].mxu0 %v1788
        %v2007 = vpop.f32.mrb[0].mxu0
        %v2008 = vadd.f32 %v1703, %v2007
        %v2009 = vpop.f32.mrb[0].mxu0
        %2010 = vmatprep.mubr.f32.mxu0 0.0
        %2011 = vmatmul.mubr.f32.gmra.mrb[0].mxu0 %v1791
        %v2012 = vpop.f32.mrb[0].mxu0
        %v2013 = vadd.f32 %v1703, %v2012
        %v2014 = vpop.f32.mrb[0].mxu0
        %2015 = vmatprep.mubr.f32.mxu0 0.0
        %2016 = vmatmul.mubr.f32.gmra.mrb[0].mxu0 %v1794
        %v2017 = vpop.f32.mrb[0].mxu0
        %v2018 = vadd.f32 %v1703, %v2017
        %v2019 = vpop.f32.mrb[0].mxu0
        %2020 = vmatprep.mubr.f32.mxu0 0.0
        %2021 = vmatmul.mubr.f32.gmra.mrb[0].mxu0 %v1797
        %v2022 = vpop.f32.mrb[0].mxu0
        %v2023 = vadd.f32 %v1703, %v2022
        %v2024 = vpop.f32.mrb[0].mxu0
        %2025 = vmatprep.mubr.f32.mxu0 0.0
        %2026 = vmatmul.mubr.f32.gmra.mrb[0].mxu0 %v1800
        %v2027 = vpop.f32.mrb[0].mxu0
        %v2028 = vadd.f32 %v1703, %v2027
        %v2029 = vpop.f32.mrb[0].mxu0
        %2030 = vdwg.mxu0
        %v2031 = vmax.f32 %v1873, 0.0
        %v2032 = vmax.f32 %v1878, 0.0
        %v2033 = vmax.f32 %v1883, 0.0
        %v2034 = vmax.f32 %v1888, 0.0
        %v2035 = vmax.f32 %v1893, 0.0
        %v2036 = vmax.f32 %v1898, 0.0
        %v2037 = vmax.f32 %v1903, 0.0
        %v2038 = vmax.f32 %v1908, 0.0
        %v2039 = vmax.f32 %v1913, 0.0
        %v2040 = vmax.f32 %v1918, 0.0
        %v2041 = vmax.f32 %v1923, 0.0
        %v2042 = vmax.f32 %v1928, 0.0
        %v2043 = vmax.f32 %v1933, 0.0
        %v2044 = vmax.f32 %v1938, 0.0
        %v2045 = vmax.f32 %v1943, 0.0
        %v2046 = vmax.f32 %v1948, 0.0
        %v2047 = vmax.f32 %v1953, 0.0
        %v2048 = vmax.f32 %v1958, 0.0
        %v2049 = vmax.f32 %v1963, 0.0
        %v2050 = vmax.f32 %v1968, 0.0
        %v2051 = vmax.f32 %v1973, 0.0
        %v2052 = vmax.f32 %v1978, 0.0
        %v2053 = vmax.f32 %v1983, 0.0
        %v2054 = vmax.f32 %v1988, 0.0
        %v2055 = vmax.f32 %v1993, 0.0
        %v2056 = vmax.f32 %v1998, 0.0
        %v2057 = vmax.f32 %v2003, 0.0
        %v2058 = vmax.f32 %v2008, 0.0
        %v2059 = vmax.f32 %v2013, 0.0
        %v2060 = vmax.f32 %v2018, 0.0
        %v2061 = vmax.f32 %v2023, 0.0
        %v2062 = vmax.f32 %v2028, 0.0
        %2063 = vst.msk [vmem:[#allocation3] sm:$0xff] %vm1528, 0.0
        %2064 = vst.msk [vmem:[#allocation3 + $0x8] sm:$0xff] %vm1528, 0.0
        %vm2065 = vcmask 123904
        %2066 = vst.msk [vmem:[#allocation3 + $0x10] sm:$0x3] %vm2065, 0.0
        %2067 = vst.msk [vmem:[#allocation3 + $0x18] sm:$0xff] %vm1528, 0.0
        %2068 = vst.msk [vmem:[#allocation3 + $0x20] sm:$0xff] %vm1528, 0.0
        %2069 = vst.msk [vmem:[#allocation3 + $0x28] sm:$0x3] %vm2065, 0.0
        %2070 = vst.msk [vmem:[#allocation3 + $0x30] sm:$0xff] %vm1528, 0.0
        %2071 = vst.msk [vmem:[#allocation3 + $0x38] sm:$0xff] %vm1528, 0.0
        %2072 = vst.msk [vmem:[#allocation3 + $0x40] sm:$0x3] %vm2065, 0.0
        %2073 = vst.msk [vmem:[#allocation3 + $0x48] sm:$0xff] %vm1528, 0.0
        %2074 = vst.msk [vmem:[#allocation3 + $0x50] sm:$0xff] %vm1528, 0.0
        %2075 = vst.msk [vmem:[#allocation3 + $0x58] sm:$0x3] %vm2065, 0.0
        %2076 = vst.msk [vmem:[#allocation3 + $0x60] sm:$0xff] %vm1528, 0.0
        %2077 = vst.msk [vmem:[#allocation3 + $0x68] sm:$0xff] %vm1528, 0.0
        %2078 = vst.msk [vmem:[#allocation3 + $0x70] sm:$0x3] %vm2065, 0.0
        %2079 = vst.msk [vmem:[#allocation3 + $0x78] sm:$0xff] %vm1528, 0.0
        %2080 = vst.msk [vmem:[#allocation3 + $0x80] sm:$0xff] %vm1528, 0.0
        %2081 = vst.msk [vmem:[#allocation3 + $0x88] sm:$0x3] %vm2065, 0.0
        %2082 = vst.msk [vmem:[#allocation3 + $0x90] sm:$0xff] %vm1528, 0.0
        %2083 = vst.msk [vmem:[#allocation3 + $0x98] sm:$0xff] %vm1528, 0.0
        %2084 = vst.msk [vmem:[#allocation3 + $0xa0] sm:$0x3] %vm2065, 0.0
        %2085 = vst.msk [vmem:[#allocation3 + $0xa8] sm:$0xff] %vm1528, 0.0
        %2086 = vst.msk [vmem:[#allocation3 + $0xb0] sm:$0xff] %vm1528, 0.0
        %2087 = vst.msk [vmem:[#allocation3 + $0xb8] sm:$0x3] %vm2065, 0.0
        %2088 = vst.msk [vmem:[#allocation3 + $0xc0] sm:$0xff] %vm1528, 0.0
        %2089 = vst.msk [vmem:[#allocation3 + $0xc8] sm:$0xff] %vm1528, 0.0
        %2090 = vst.msk [vmem:[#allocation3 + $0xd0] sm:$0x3] %vm2065, 0.0
        %2091 = vst.msk [vmem:[#allocation3 + $0xd8] sm:$0xff] %vm1528, 0.0
        %2092 = vst.msk [vmem:[#allocation3 + $0xe0] sm:$0xff] %vm1528, 0.0
        %2093 = vst.msk [vmem:[#allocation3 + $0xe8] sm:$0x3] %vm2065, 0.0
        %2094 = vst.msk [vmem:[#allocation3 + $0xf0] sm:$0xff] %vm1528, 0.0
        %2095 = vst.msk [vmem:[#allocation3 + $0xf8] sm:$0xff] %vm1528, 0.0
        %2096 = vst.msk [vmem:[#allocation3 + $0x100] sm:$0x3] %vm2065, 0.0
        %2097 = vst.msk [vmem:[#allocation3 + $0x108] sm:$0xff] %vm1528, 0.0
        %2098 = vst.msk [vmem:[#allocation3 + $0x110] sm:$0xff] %vm1528, 0.0
        %2099 = vst.msk [vmem:[#allocation3 + $0x118] sm:$0x3] %vm2065, 0.0
        %2100 = vst.msk [vmem:[#allocation3 + $0x120] sm:$0xff] %vm1528, 0.0
        %2101 = vst.msk [vmem:[#allocation3 + $0x128] sm:$0xff] %vm1528, 0.0
        %2102 = vst.msk [vmem:[#allocation3 + $0x130] sm:$0x3] %vm2065, 0.0
        %2103 = vst.msk [vmem:[#allocation3 + $0x138] sm:$0xff] %vm1528, 0.0
        %2104 = vst.msk [vmem:[#allocation3 + $0x140] sm:$0xff] %vm1528, 0.0
        %2105 = vst.msk [vmem:[#allocation3 + $0x148] sm:$0x3] %vm2065, 0.0
        %2106 = vst.msk [vmem:[#allocation3 + $0x150] sm:$0xff] %vm1528, 0.0
        %2107 = vst.msk [vmem:[#allocation3 + $0x158] sm:$0xff] %vm1528, 0.0
        %2108 = vst.msk [vmem:[#allocation3 + $0x160] sm:$0x3] %vm2065, 0.0
        %2109 = vst.msk [vmem:[#allocation3 + $0x168] sm:$0xff] %vm1528, 0.0
        %2110 = vst.msk [vmem:[#allocation3 + $0x170] sm:$0xff] %vm1528, 0.0
        %2111 = vst.msk [vmem:[#allocation3 + $0x178] sm:$0x3] %vm2065, 0.0
        %2112 = vst.msk [vmem:[#allocation3 + $0x180] sm:$0xff] %vm1528, 0.0
        %2113 = vst.msk [vmem:[#allocation3 + $0x188] sm:$0xff] %vm1528, 0.0
        %2114 = vst.msk [vmem:[#allocation3 + $0x190] sm:$0x3] %vm2065, 0.0
        %2115 = vst.msk [vmem:[#allocation3 + $0x198] sm:$0xff] %vm1528, 0.0
        %2116 = vst.msk [vmem:[#allocation3 + $0x1a0] sm:$0xff] %vm1528, 0.0
        %2117 = vst.msk [vmem:[#allocation3 + $0x1a8] sm:$0x3] %vm2065, 0.0
        %s2118 = scalar_lea.vmem [#allocation3], 24
        %2119 = vst.msk [vmem:[%s2118 + $0x1] sm:$0xff] %vm1528, %v2031
        %2120 = vst.msk [vmem:[%s2118 + $0x9] sm:$0xff] %vm1528, %v2032
        %2121 = vst.msk [vmem:[%s2118 + $0x19] sm:$0xff] %vm1528, %v2033
        %2122 = vst.msk [vmem:[%s2118 + $0x21] sm:$0xff] %vm1528, %v2034
        %2123 = vst.msk [vmem:[%s2118 + $0x31] sm:$0xff] %vm1528, %v2035
        %2124 = vst.msk [vmem:[%s2118 + $0x39] sm:$0xff] %vm1528, %v2036
        %2125 = vst.msk [vmem:[%s2118 + $0x49] sm:$0xff] %vm1528, %v2037
        %2126 = vst.msk [vmem:[%s2118 + $0x51] sm:$0xff] %vm1528, %v2038
        %2127 = vst.msk [vmem:[%s2118 + $0x61] sm:$0xff] %vm1528, %v2039
        %2128 = vst.msk [vmem:[%s2118 + $0x69] sm:$0xff] %vm1528, %v2040
        %2129 = vst.msk [vmem:[%s2118 + $0x79] sm:$0xff] %vm1528, %v2041
        %2130 = vst.msk [vmem:[%s2118 + $0x81] sm:$0xff] %vm1528, %v2042
        %2131 = vst.msk [vmem:[%s2118 + $0x91] sm:$0xff] %vm1528, %v2043
        %2132 = vst.msk [vmem:[%s2118 + $0x99] sm:$0xff] %vm1528, %v2044
        %2133 = vst.msk [vmem:[%s2118 + $0xa9] sm:$0xff] %vm1528, %v2045
        %2134 = vst.msk [vmem:[%s2118 + $0xb1] sm:$0xff] %vm1528, %v2046
        %2135 = vst.msk [vmem:[%s2118 + $0xc1] sm:$0xff] %vm1528, %v2047
        %2136 = vst.msk [vmem:[%s2118 + $0xc9] sm:$0xff] %vm1528, %v2048
        %2137 = vst.msk [vmem:[%s2118 + $0xd9] sm:$0xff] %vm1528, %v2049
        %2138 = vst.msk [vmem:[%s2118 + $0xe1] sm:$0xff] %vm1528, %v2050
        %2139 = vst.msk [vmem:[%s2118 + $0xf1] sm:$0xff] %vm1528, %v2051
        %2140 = vst.msk [vmem:[%s2118 + $0xf9] sm:$0xff] %vm1528, %v2052
        %2141 = vst.msk [vmem:[%s2118 + $0x109] sm:$0xff] %vm1528, %v2053
        %2142 = vst.msk [vmem:[%s2118 + $0x111] sm:$0xff] %vm1528, %v2054
        %2143 = vst.msk [vmem:[%s2118 + $0x121] sm:$0xff] %vm1528, %v2055
        %2144 = vst.msk [vmem:[%s2118 + $0x129] sm:$0xff] %vm1528, %v2056
        %2145 = vst.msk [vmem:[%s2118 + $0x139] sm:$0xff] %vm1528, %v2057
        %2146 = vst.msk [vmem:[%s2118 + $0x141] sm:$0xff] %vm1528, %v2058
        %2147 = vst.msk [vmem:[%s2118 + $0x151] sm:$0xff] %vm1528, %v2059
        %2148 = vst.msk [vmem:[%s2118 + $0x159] sm:$0xff] %vm1528, %v2060
        %2149 = vst.msk [vmem:[%s2118 + $0x169] sm:$0xff] %vm1528, %v2061
        %2150 = vst.msk [vmem:[%s2118 + $0x171] sm:$0xff] %vm1528, %v2062
        %v2151 = vld [vmem:[#allocation3] sm:$0xff]
        %v2152 = vld [vmem:[#allocation3 + $0x8] sm:$0xff]
        %v2153 = vld [vmem:[#allocation3 + $0x10] sm:$0x3]
        %v2154 = vld [vmem:[#allocation3 + $0x18] sm:$0xff]
        %v2155 = vld [vmem:[#allocation3 + $0x20] sm:$0xff]
        %v2156 = vld [vmem:[#allocation3 + $0x28] sm:$0x3]
        %v2157 = vld [vmem:[#allocation3 + $0x30] sm:$0xff]
        %v2158 = vld [vmem:[#allocation3 + $0x38] sm:$0xff]
        %v2159 = vld [vmem:[#allocation3 + $0x40] sm:$0x3]
        %v2160 = vld [vmem:[#allocation3 + $0x48] sm:$0xff]
        %v2161 = vld [vmem:[#allocation3 + $0x50] sm:$0xff]
        %v2162 = vld [vmem:[#allocation3 + $0x58] sm:$0x3]
        %v2163 = vld [vmem:[#allocation3 + $0x60] sm:$0xff]
        %v2164 = vld [vmem:[#allocation3 + $0x68] sm:$0xff]
        %v2165 = vld [vmem:[#allocation3 + $0x70] sm:$0x3]
        %v2166 = vld [vmem:[#allocation3 + $0x78] sm:$0xff]
        %v2167 = vld [vmem:[#allocation3 + $0x80] sm:$0xff]
        %v2168 = vld [vmem:[#allocation3 + $0x88] sm:$0x3]
        %v2169 = vld [vmem:[#allocation3 + $0x90] sm:$0xff]
        %v2170 = vld [vmem:[#allocation3 + $0x98] sm:$0xff]
        %v2171 = vld [vmem:[#allocation3 + $0xa0] sm:$0x3]
        %v2172 = vld [vmem:[#allocation3 + $0xa8] sm:$0xff]
        %v2173 = vld [vmem:[#allocation3 + $0xb0] sm:$0xff]
        %v2174 = vld [vmem:[#allocation3 + $0xb8] sm:$0x3]
        %v2175 = vld [vmem:[#allocation3 + $0xc0] sm:$0xff]
        %v2176 = vld [vmem:[#allocation3 + $0xc8] sm:$0xff]
        %v2177 = vld [vmem:[#allocation3 + $0xd0] sm:$0x3]
        %v2178 = vld [vmem:[#allocation3 + $0xd8] sm:$0xff]
        %v2179 = vld [vmem:[#allocation3 + $0xe0] sm:$0xff]
        %v2180 = vld [vmem:[#allocation3 + $0xe8] sm:$0x3]
        %v2181 = vld [vmem:[#allocation3 + $0xf0] sm:$0xff]
        %v2182 = vld [vmem:[#allocation3 + $0xf8] sm:$0xff]
        %v2183 = vld [vmem:[#allocation3 + $0x100] sm:$0x3]
        %v2184 = vld [vmem:[#allocation3 + $0x108] sm:$0xff]
        %v2185 = vld [vmem:[#allocation3 + $0x110] sm:$0xff]
        %v2186 = vld [vmem:[#allocation3 + $0x118] sm:$0x3]
        %v2187 = vld [vmem:[#allocation3 + $0x120] sm:$0xff]
        %v2188 = vld [vmem:[#allocation3 + $0x128] sm:$0xff]
        %v2189 = vld [vmem:[#allocation3 + $0x130] sm:$0x3]
        %v2190 = vld [vmem:[#allocation3 + $0x138] sm:$0xff]
        %v2191 = vld [vmem:[#allocation3 + $0x140] sm:$0xff]
        %v2192 = vld [vmem:[#allocation3 + $0x148] sm:$0x3]
        %v2193 = vld [vmem:[#allocation3 + $0x150] sm:$0xff]
        %v2194 = vld [vmem:[#allocation3 + $0x158] sm:$0xff]
        %v2195 = vld [vmem:[#allocation3 + $0x160] sm:$0x3]
        %v2196 = vld [vmem:[#allocation3 + $0x168] sm:$0xff]
        %v2197 = vld [vmem:[#allocation3 + $0x170] sm:$0xff]
        %v2198 = vld [vmem:[#allocation3 + $0x178] sm:$0x3]
        %v2199 = vld [vmem:[#allocation3 + $0x180] sm:$0xff]
        %v2200 = vld [vmem:[#allocation3 + $0x188] sm:$0xff]
        %v2201 = vld [vmem:[#allocation3 + $0x190] sm:$0x3]
        %v2202 = vld [vmem:[#allocation3 + $0x198] sm:$0xff]
        %v2203 = vld [vmem:[#allocation3 + $0x1a0] sm:$0xff]
        %v2204 = vld [vmem:[#allocation3 + $0x1a8] sm:$0x3]
        %v2253 = vrot.slane %v2151, 1
        %v2254 = vrot.slane %v2152, 1
        %v2255 = vsel %vm474, %v2253, %v2254
        %v2256 = vrot.slane %v2153, 1
        %v2257 = vsel %vm474, %v2254, %v2256
        %v2258 = vrot.slane %v2154, 1
        %v2259 = vrot.slane %v2155, 1
        %v2260 = vsel %vm474, %v2258, %v2259
        %v2261 = vrot.slane %v2156, 1
        %v2262 = vsel %vm474, %v2259, %v2261
        %v2263 = vrot.slane %v2157, 1
        %v2264 = vrot.slane %v2158, 1
        %v2265 = vsel %vm474, %v2263, %v2264
        %v2266 = vrot.slane %v2159, 1
        %v2267 = vsel %vm474, %v2264, %v2266
        %v2268 = vrot.slane %v2160, 1
        %v2269 = vrot.slane %v2161, 1
        %v2270 = vsel %vm474, %v2268, %v2269
        %v2271 = vrot.slane %v2162, 1
        %v2272 = vsel %vm474, %v2269, %v2271
        %v2273 = vrot.slane %v2163, 1
        %v2274 = vrot.slane %v2164, 1
        %v2275 = vsel %vm474, %v2273, %v2274
        %v2276 = vrot.slane %v2165, 1
        %v2277 = vsel %vm474, %v2274, %v2276
        %v2278 = vrot.slane %v2166, 1
        %v2279 = vrot.slane %v2167, 1
        %v2280 = vsel %vm474, %v2278, %v2279
        %v2281 = vrot.slane %v2168, 1
        %v2282 = vsel %vm474, %v2279, %v2281
        %v2283 = vrot.slane %v2169, 1
        %v2284 = vrot.slane %v2170, 1
        %v2285 = vsel %vm474, %v2283, %v2284
        %v2286 = vrot.slane %v2171, 1
        %v2287 = vsel %vm474, %v2284, %v2286
        %v2288 = vrot.slane %v2172, 1
        %v2289 = vrot.slane %v2173, 1
        %v2290 = vsel %vm474, %v2288, %v2289
        %v2291 = vrot.slane %v2174, 1
        %v2292 = vsel %vm474, %v2289, %v2291
        %v2293 = vrot.slane %v2175, 1
        %v2294 = vrot.slane %v2176, 1
        %v2295 = vsel %vm474, %v2293, %v2294
        %v2296 = vrot.slane %v2177, 1
        %v2297 = vsel %vm474, %v2294, %v2296
        %v2298 = vrot.slane %v2178, 1
        %v2299 = vrot.slane %v2179, 1
        %v2300 = vsel %vm474, %v2298, %v2299
        %v2301 = vrot.slane %v2180, 1
        %v2302 = vsel %vm474, %v2299, %v2301
        %v2303 = vrot.slane %v2181, 1
        %v2304 = vrot.slane %v2182, 1
        %v2305 = vsel %vm474, %v2303, %v2304
        %v2306 = vrot.slane %v2183, 1
        %v2307 = vsel %vm474, %v2304, %v2306
        %v2308 = vrot.slane %v2184, 1
        %v2309 = vrot.slane %v2185, 1
        %v2310 = vsel %vm474, %v2308, %v2309
        %v2311 = vrot.slane %v2186, 1
        %v2312 = vsel %vm474, %v2309, %v2311
        %v2313 = vrot.slane %v2187, 1
        %v2314 = vrot.slane %v2188, 1
        %v2315 = vsel %vm474, %v2313, %v2314
        %v2316 = vrot.slane %v2189, 1
        %v2317 = vsel %vm474, %v2314, %v2316
        %v2318 = vrot.slane %v2190, 1
        %v2319 = vrot.slane %v2191, 1
        %v2320 = vsel %vm474, %v2318, %v2319
        %v2321 = vrot.slane %v2192, 1
        %v2322 = vsel %vm474, %v2319, %v2321
        %v2323 = vrot.slane %v2193, 1
        %v2324 = vrot.slane %v2194, 1
        %v2325 = vsel %vm474, %v2323, %v2324
        %v2326 = vrot.slane %v2195, 1
        %v2327 = vsel %vm474, %v2324, %v2326
        %v2328 = vrot.slane %v2196, 1
        %v2329 = vrot.slane %v2197, 1
        %v2330 = vsel %vm474, %v2328, %v2329
        %v2331 = vrot.slane %v2198, 1
        %v2332 = vsel %vm474, %v2329, %v2331
        %v2333 = vrot.slane %v2151, 2
        %v2334 = vrot.slane %v2152, 2
        %v2335 = vsel %vm555, %v2333, %v2334
        %v2336 = vrot.slane %v2153, 2
        %v2337 = vsel %vm555, %v2334, %v2336
        %v2338 = vrot.slane %v2154, 2
        %v2339 = vrot.slane %v2155, 2
        %v2340 = vsel %vm555, %v2338, %v2339
        %v2341 = vrot.slane %v2156, 2
        %v2342 = vsel %vm555, %v2339, %v2341
        %v2343 = vrot.slane %v2157, 2
        %v2344 = vrot.slane %v2158, 2
        %v2345 = vsel %vm555, %v2343, %v2344
        %v2346 = vrot.slane %v2159, 2
        %v2347 = vsel %vm555, %v2344, %v2346
        %v2348 = vrot.slane %v2160, 2
        %v2349 = vrot.slane %v2161, 2
        %v2350 = vsel %vm555, %v2348, %v2349
        %v2351 = vrot.slane %v2162, 2
        %v2352 = vsel %vm555, %v2349, %v2351
        %v2353 = vrot.slane %v2163, 2
        %v2354 = vrot.slane %v2164, 2
        %v2355 = vsel %vm555, %v2353, %v2354
        %v2356 = vrot.slane %v2165, 2
        %v2357 = vsel %vm555, %v2354, %v2356
        %v2358 = vrot.slane %v2166, 2
        %v2359 = vrot.slane %v2167, 2
        %v2360 = vsel %vm555, %v2358, %v2359
        %v2361 = vrot.slane %v2168, 2
        %v2362 = vsel %vm555, %v2359, %v2361
        %v2363 = vrot.slane %v2169, 2
        %v2364 = vrot.slane %v2170, 2
        %v2365 = vsel %vm555, %v2363, %v2364
        %v2366 = vrot.slane %v2171, 2
        %v2367 = vsel %vm555, %v2364, %v2366
        %v2368 = vrot.slane %v2172, 2
        %v2369 = vrot.slane %v2173, 2
        %v2370 = vsel %vm555, %v2368, %v2369
        %v2371 = vrot.slane %v2174, 2
        %v2372 = vsel %vm555, %v2369, %v2371
        %v2373 = vrot.slane %v2175, 2
        %v2374 = vrot.slane %v2176, 2
        %v2375 = vsel %vm555, %v2373, %v2374
        %v2376 = vrot.slane %v2177, 2
        %v2377 = vsel %vm555, %v2374, %v2376
        %v2378 = vrot.slane %v2178, 2
        %v2379 = vrot.slane %v2179, 2
        %v2380 = vsel %vm555, %v2378, %v2379
        %v2381 = vrot.slane %v2180, 2
        %v2382 = vsel %vm555, %v2379, %v2381
        %v2383 = vrot.slane %v2181, 2
        %v2384 = vrot.slane %v2182, 2
        %v2385 = vsel %vm555, %v2383, %v2384
        %v2386 = vrot.slane %v2183, 2
        %v2387 = vsel %vm555, %v2384, %v2386
        %v2388 = vrot.slane %v2184, 2
        %v2389 = vrot.slane %v2185, 2
        %v2390 = vsel %vm555, %v2388, %v2389
        %v2391 = vrot.slane %v2186, 2
        %v2392 = vsel %vm555, %v2389, %v2391
        %v2393 = vrot.slane %v2187, 2
        %v2394 = vrot.slane %v2188, 2
        %v2395 = vsel %vm555, %v2393, %v2394
        %v2396 = vrot.slane %v2189, 2
        %v2397 = vsel %vm555, %v2394, %v2396
        %v2398 = vrot.slane %v2190, 2
        %v2399 = vrot.slane %v2191, 2
        %v2400 = vsel %vm555, %v2398, %v2399
        %v2401 = vrot.slane %v2192, 2
        %v2402 = vsel %vm555, %v2399, %v2401
        %v2403 = vrot.slane %v2193, 2
        %v2404 = vrot.slane %v2194, 2
        %v2405 = vsel %vm555, %v2403, %v2404
        %v2406 = vrot.slane %v2195, 2
        %v2407 = vsel %vm555, %v2404, %v2406
        %v2408 = vrot.slane %v2196, 2
        %v2409 = vrot.slane %v2197, 2
        %v2410 = vsel %vm555, %v2408, %v2409
        %v2411 = vrot.slane %v2198, 2
        %v2412 = vsel %vm555, %v2409, %v2411
        %v2416 = vrot.slane %v2199, 1
        %v2417 = vrot.slane %v2200, 1
        %v2418 = vsel %vm474, %v2416, %v2417
        %v2419 = vrot.slane %v2201, 1
        %v2420 = vsel %vm474, %v2417, %v2419
        %v2421 = vrot.slane %v2199, 2
        %v2422 = vrot.slane %v2200, 2
        %v2423 = vsel %vm555, %v2421, %v2422
        %v2424 = vrot.slane %v2201, 2
        %v2425 = vsel %vm555, %v2422, %v2424
        %v2429 = vrot.slane %v2202, 1
        %v2430 = vrot.slane %v2203, 1
        %v2431 = vsel %vm474, %v2429, %v2430
        %v2432 = vrot.slane %v2204, 1
        %v2433 = vsel %vm474, %v2430, %v2432
        %v2434 = vrot.slane %v2202, 2
        %v2435 = vrot.slane %v2203, 2
        %v2436 = vsel %vm555, %v2434, %v2435
        %v2437 = vrot.slane %v2204, 2
        %v2438 = vsel %vm555, %v2435, %v2437
        %2439 = vrot.lane.b32.xlu0 %v2255, 16
        %v2440 = vpop.permute.xlu0 %2439
        %2441 = vrot.lane.b32.xlu0 %v2257, 16
        %v2442 = vpop.permute.xlu0 %2441
        %2443 = vrot.lane.b32.xlu0 %v2260, 16
        %v2444 = vpop.permute.xlu0 %2443
        %2445 = vrot.lane.b32.xlu0 %v2262, 16
        %v2446 = vpop.permute.xlu0 %2445
        %2447 = vrot.lane.b32.xlu0 %v2265, 16
        %v2448 = vpop.permute.xlu0 %2447
        %2449 = vrot.lane.b32.xlu0 %v2267, 16
        %v2450 = vpop.permute.xlu0 %2449
        %2451 = vrot.lane.b32.xlu0 %v2270, 16
        %v2452 = vpop.permute.xlu0 %2451
        %2453 = vrot.lane.b32.xlu0 %v2272, 16
        %v2454 = vpop.permute.xlu0 %2453
        %2455 = vrot.lane.b32.xlu0 %v2275, 16
        %v2456 = vpop.permute.xlu0 %2455
        %2457 = vrot.lane.b32.xlu0 %v2277, 16
        %v2458 = vpop.permute.xlu0 %2457
        %2459 = vrot.lane.b32.xlu0 %v2280, 16
        %v2460 = vpop.permute.xlu0 %2459
        %2461 = vrot.lane.b32.xlu0 %v2282, 16
        %v2462 = vpop.permute.xlu0 %2461
        %2463 = vrot.lane.b32.xlu0 %v2285, 16
        %v2464 = vpop.permute.xlu0 %2463
        %2465 = vrot.lane.b32.xlu0 %v2287, 16
        %v2466 = vpop.permute.xlu0 %2465
        %2467 = vrot.lane.b32.xlu0 %v2290, 16
        %v2468 = vpop.permute.xlu0 %2467
        %2469 = vrot.lane.b32.xlu0 %v2292, 16
        %v2470 = vpop.permute.xlu0 %2469
        %2471 = vrot.lane.b32.xlu0 %v2295, 16
        %v2472 = vpop.permute.xlu0 %2471
        %2473 = vrot.lane.b32.xlu0 %v2297, 16
        %v2474 = vpop.permute.xlu0 %2473
        %2475 = vrot.lane.b32.xlu0 %v2300, 16
        %v2476 = vpop.permute.xlu0 %2475
        %2477 = vrot.lane.b32.xlu0 %v2302, 16
        %v2478 = vpop.permute.xlu0 %2477
        %2479 = vrot.lane.b32.xlu0 %v2305, 16
        %v2480 = vpop.permute.xlu0 %2479
        %2481 = vrot.lane.b32.xlu0 %v2307, 16
        %v2482 = vpop.permute.xlu0 %2481
        %2483 = vrot.lane.b32.xlu0 %v2310, 16
        %v2484 = vpop.permute.xlu0 %2483
        %2485 = vrot.lane.b32.xlu0 %v2312, 16
        %v2486 = vpop.permute.xlu0 %2485
        %2487 = vrot.lane.b32.xlu0 %v2315, 16
        %v2488 = vpop.permute.xlu0 %2487
        %2489 = vrot.lane.b32.xlu0 %v2317, 16
        %v2490 = vpop.permute.xlu0 %2489
        %2491 = vrot.lane.b32.xlu0 %v2320, 16
        %v2492 = vpop.permute.xlu0 %2491
        %2493 = vrot.lane.b32.xlu0 %v2322, 16
        %v2494 = vpop.permute.xlu0 %2493
        %2495 = vrot.lane.b32.xlu0 %v2325, 16
        %v2496 = vpop.permute.xlu0 %2495
        %2497 = vrot.lane.b32.xlu0 %v2327, 16
        %v2498 = vpop.permute.xlu0 %2497
        %2499 = vrot.lane.b32.xlu0 %v2330, 16
        %v2500 = vpop.permute.xlu0 %2499
        %2501 = vrot.lane.b32.xlu0 %v2332, 16
        %v2502 = vpop.permute.xlu0 %2501
        %2535 = vrot.lane.b32.xlu0 %v2335, 32
        %v2536 = vpop.permute.xlu0 %2535
        %2537 = vrot.lane.b32.xlu0 %v2337, 32
        %v2538 = vpop.permute.xlu0 %2537
        %2539 = vrot.lane.b32.xlu0 %v2340, 32
        %v2540 = vpop.permute.xlu0 %2539
        %2541 = vrot.lane.b32.xlu0 %v2342, 32
        %v2542 = vpop.permute.xlu0 %2541
        %2543 = vrot.lane.b32.xlu0 %v2345, 32
        %v2544 = vpop.permute.xlu0 %2543
        %2545 = vrot.lane.b32.xlu0 %v2347, 32
        %v2546 = vpop.permute.xlu0 %2545
        %2547 = vrot.lane.b32.xlu0 %v2350, 32
        %v2548 = vpop.permute.xlu0 %2547
        %2549 = vrot.lane.b32.xlu0 %v2352, 32
        %v2550 = vpop.permute.xlu0 %2549
        %2551 = vrot.lane.b32.xlu0 %v2355, 32
        %v2552 = vpop.permute.xlu0 %2551
        %2553 = vrot.lane.b32.xlu0 %v2357, 32
        %v2554 = vpop.permute.xlu0 %2553
        %2555 = vrot.lane.b32.xlu0 %v2360, 32
        %v2556 = vpop.permute.xlu0 %2555
        %2557 = vrot.lane.b32.xlu0 %v2362, 32
        %v2558 = vpop.permute.xlu0 %2557
        %2559 = vrot.lane.b32.xlu0 %v2365, 32
        %v2560 = vpop.permute.xlu0 %2559
        %2561 = vrot.lane.b32.xlu0 %v2367, 32
        %v2562 = vpop.permute.xlu0 %2561
        %2563 = vrot.lane.b32.xlu0 %v2370, 32
        %v2564 = vpop.permute.xlu0 %2563
        %2565 = vrot.lane.b32.xlu0 %v2372, 32
        %v2566 = vpop.permute.xlu0 %2565
        %2567 = vrot.lane.b32.xlu0 %v2375, 32
        %v2568 = vpop.permute.xlu0 %2567
        %2569 = vrot.lane.b32.xlu0 %v2377, 32
        %v2570 = vpop.permute.xlu0 %2569
        %2571 = vrot.lane.b32.xlu0 %v2380, 32
        %v2572 = vpop.permute.xlu0 %2571
        %2573 = vrot.lane.b32.xlu0 %v2382, 32
        %v2574 = vpop.permute.xlu0 %2573
        %2575 = vrot.lane.b32.xlu0 %v2385, 32
        %v2576 = vpop.permute.xlu0 %2575
        %2577 = vrot.lane.b32.xlu0 %v2387, 32
        %v2578 = vpop.permute.xlu0 %2577
        %2579 = vrot.lane.b32.xlu0 %v2390, 32
        %v2580 = vpop.permute.xlu0 %2579
        %2581 = vrot.lane.b32.xlu0 %v2392, 32
        %v2582 = vpop.permute.xlu0 %2581
        %2583 = vrot.lane.b32.xlu0 %v2395, 32
        %v2584 = vpop.permute.xlu0 %2583
        %2585 = vrot.lane.b32.xlu0 %v2397, 32
        %v2586 = vpop.permute.xlu0 %2585
        %2587 = vrot.lane.b32.xlu0 %v2400, 32
        %v2588 = vpop.permute.xlu0 %2587
        %2589 = vrot.lane.b32.xlu0 %v2402, 32
        %v2590 = vpop.permute.xlu0 %2589
        %2591 = vrot.lane.b32.xlu0 %v2405, 32
        %v2592 = vpop.permute.xlu0 %2591
        %2593 = vrot.lane.b32.xlu0 %v2407, 32
        %v2594 = vpop.permute.xlu0 %2593
        %2595 = vrot.lane.b32.xlu0 %v2410, 32
        %v2596 = vpop.permute.xlu0 %2595
        %2597 = vrot.lane.b32.xlu0 %v2412, 32
        %v2598 = vpop.permute.xlu0 %2597
        %2631 = vrot.lane.b32.xlu0 %v2154, 48
        %v2632 = vpop.permute.xlu0 %2631
        %2633 = vrot.lane.b32.xlu0 %v2155, 48
        %v2634 = vpop.permute.xlu0 %2633
        %2635 = vrot.lane.b32.xlu0 %v2157, 48
        %v2636 = vpop.permute.xlu0 %2635
        %2637 = vrot.lane.b32.xlu0 %v2158, 48
        %v2638 = vpop.permute.xlu0 %2637
        %2639 = vrot.lane.b32.xlu0 %v2160, 48
        %v2640 = vpop.permute.xlu0 %2639
        %2641 = vrot.lane.b32.xlu0 %v2161, 48
        %v2642 = vpop.permute.xlu0 %2641
        %2643 = vrot.lane.b32.xlu0 %v2163, 48
        %v2644 = vpop.permute.xlu0 %2643
        %2645 = vrot.lane.b32.xlu0 %v2164, 48
        %v2646 = vpop.permute.xlu0 %2645
        %2647 = vrot.lane.b32.xlu0 %v2166, 48
        %v2648 = vpop.permute.xlu0 %2647
        %2649 = vrot.lane.b32.xlu0 %v2167, 48
        %v2650 = vpop.permute.xlu0 %2649
        %2651 = vrot.lane.b32.xlu0 %v2169, 48
        %v2652 = vpop.permute.xlu0 %2651
        %2653 = vrot.lane.b32.xlu0 %v2170, 48
        %v2654 = vpop.permute.xlu0 %2653
        %2655 = vrot.lane.b32.xlu0 %v2172, 48
        %v2656 = vpop.permute.xlu0 %2655
        %2657 = vrot.lane.b32.xlu0 %v2173, 48
        %v2658 = vpop.permute.xlu0 %2657
        %2659 = vrot.lane.b32.xlu0 %v2175, 48
        %v2660 = vpop.permute.xlu0 %2659
        %2661 = vrot.lane.b32.xlu0 %v2176, 48
        %v2662 = vpop.permute.xlu0 %2661
        %2663 = vrot.lane.b32.xlu0 %v2178, 48
        %v2664 = vpop.permute.xlu0 %2663
        %2665 = vrot.lane.b32.xlu0 %v2179, 48
        %v2666 = vpop.permute.xlu0 %2665
        %2667 = vrot.lane.b32.xlu0 %v2181, 48
        %v2668 = vpop.permute.xlu0 %2667
        %2669 = vrot.lane.b32.xlu0 %v2182, 48
        %v2670 = vpop.permute.xlu0 %2669
        %2671 = vrot.lane.b32.xlu0 %v2184, 48
        %v2672 = vpop.permute.xlu0 %2671
        %2673 = vrot.lane.b32.xlu0 %v2185, 48
        %v2674 = vpop.permute.xlu0 %2673
        %2675 = vrot.lane.b32.xlu0 %v2187, 48
        %v2676 = vpop.permute.xlu0 %2675
        %2677 = vrot.lane.b32.xlu0 %v2188, 48
        %v2678 = vpop.permute.xlu0 %2677
        %2679 = vrot.lane.b32.xlu0 %v2190, 48
        %v2680 = vpop.permute.xlu0 %2679
        %2681 = vrot.lane.b32.xlu0 %v2191, 48
        %v2682 = vpop.permute.xlu0 %2681
        %2683 = vrot.lane.b32.xlu0 %v2193, 48
        %v2684 = vpop.permute.xlu0 %2683
        %2685 = vrot.lane.b32.xlu0 %v2194, 48
        %v2686 = vpop.permute.xlu0 %2685
        %2687 = vrot.lane.b32.xlu0 %v2196, 48
        %v2688 = vpop.permute.xlu0 %2687
        %2689 = vrot.lane.b32.xlu0 %v2197, 48
        %v2690 = vpop.permute.xlu0 %2689
        %2691 = vrot.lane.b32.xlu0 %v2199, 48
        %v2692 = vpop.permute.xlu0 %2691
        %2693 = vrot.lane.b32.xlu0 %v2200, 48
        %v2694 = vpop.permute.xlu0 %2693
        %2727 = vrot.lane.b32.xlu0 %v2260, 64
        %v2728 = vpop.permute.xlu0 %2727
        %2729 = vrot.lane.b32.xlu0 %v2262, 64
        %v2730 = vpop.permute.xlu0 %2729
        %2731 = vrot.lane.b32.xlu0 %v2265, 64
        %v2732 = vpop.permute.xlu0 %2731
        %2733 = vrot.lane.b32.xlu0 %v2267, 64
        %v2734 = vpop.permute.xlu0 %2733
        %2735 = vrot.lane.b32.xlu0 %v2270, 64
        %v2736 = vpop.permute.xlu0 %2735
        %2737 = vrot.lane.b32.xlu0 %v2272, 64
        %v2738 = vpop.permute.xlu0 %2737
        %2739 = vrot.lane.b32.xlu0 %v2275, 64
        %v2740 = vpop.permute.xlu0 %2739
        %2741 = vrot.lane.b32.xlu0 %v2277, 64
        %v2742 = vpop.permute.xlu0 %2741
        %2743 = vrot.lane.b32.xlu0 %v2280, 64
        %v2744 = vpop.permute.xlu0 %2743
        %2745 = vrot.lane.b32.xlu0 %v2282, 64
        %v2746 = vpop.permute.xlu0 %2745
        %2747 = vrot.lane.b32.xlu0 %v2285, 64
        %v2748 = vpop.permute.xlu0 %2747
        %2749 = vrot.lane.b32.xlu0 %v2287, 64
        %v2750 = vpop.permute.xlu0 %2749
        %2751 = vrot.lane.b32.xlu0 %v2290, 64
        %v2752 = vpop.permute.xlu0 %2751
        %2753 = vrot.lane.b32.xlu0 %v2292, 64
        %v2754 = vpop.permute.xlu0 %2753
        %2755 = vrot.lane.b32.xlu0 %v2295, 64
        %v2756 = vpop.permute.xlu0 %2755
        %2757 = vrot.lane.b32.xlu0 %v2297, 64
        %v2758 = vpop.permute.xlu0 %2757
        %2759 = vrot.lane.b32.xlu0 %v2300, 64
        %v2760 = vpop.permute.xlu0 %2759
        %2761 = vrot.lane.b32.xlu0 %v2302, 64
        %v2762 = vpop.permute.xlu0 %2761
        %2763 = vrot.lane.b32.xlu0 %v2305, 64
        %v2764 = vpop.permute.xlu0 %2763
        %2765 = vrot.lane.b32.xlu0 %v2307, 64
        %v2766 = vpop.permute.xlu0 %2765
        %2767 = vrot.lane.b32.xlu0 %v2310, 64
        %v2768 = vpop.permute.xlu0 %2767
        %2769 = vrot.lane.b32.xlu0 %v2312, 64
        %v2770 = vpop.permute.xlu0 %2769
        %2771 = vrot.lane.b32.xlu0 %v2315, 64
        %v2772 = vpop.permute.xlu0 %2771
        %2773 = vrot.lane.b32.xlu0 %v2317, 64
        %v2774 = vpop.permute.xlu0 %2773
        %2775 = vrot.lane.b32.xlu0 %v2320, 64
        %v2776 = vpop.permute.xlu0 %2775
        %2777 = vrot.lane.b32.xlu0 %v2322, 64
        %v2778 = vpop.permute.xlu0 %2777
        %2779 = vrot.lane.b32.xlu0 %v2325, 64
        %v2780 = vpop.permute.xlu0 %2779
        %2781 = vrot.lane.b32.xlu0 %v2327, 64
        %v2782 = vpop.permute.xlu0 %2781
        %2783 = vrot.lane.b32.xlu0 %v2330, 64
        %v2784 = vpop.permute.xlu0 %2783
        %2785 = vrot.lane.b32.xlu0 %v2332, 64
        %v2786 = vpop.permute.xlu0 %2785
        %2787 = vrot.lane.b32.xlu0 %v2418, 64
        %v2788 = vpop.permute.xlu0 %2787
        %2789 = vrot.lane.b32.xlu0 %v2420, 64
        %v2790 = vpop.permute.xlu0 %2789
        %2823 = vrot.lane.b32.xlu0 %v2340, 80
        %v2824 = vpop.permute.xlu0 %2823
        %2825 = vrot.lane.b32.xlu0 %v2342, 80
        %v2826 = vpop.permute.xlu0 %2825
        %2827 = vrot.lane.b32.xlu0 %v2345, 80
        %v2828 = vpop.permute.xlu0 %2827
        %2829 = vrot.lane.b32.xlu0 %v2347, 80
        %v2830 = vpop.permute.xlu0 %2829
        %2831 = vrot.lane.b32.xlu0 %v2350, 80
        %v2832 = vpop.permute.xlu0 %2831
        %2833 = vrot.lane.b32.xlu0 %v2352, 80
        %v2834 = vpop.permute.xlu0 %2833
        %2835 = vrot.lane.b32.xlu0 %v2355, 80
        %v2836 = vpop.permute.xlu0 %2835
        %2837 = vrot.lane.b32.xlu0 %v2357, 80
        %v2838 = vpop.permute.xlu0 %2837
        %2839 = vrot.lane.b32.xlu0 %v2360, 80
        %v2840 = vpop.permute.xlu0 %2839
        %2841 = vrot.lane.b32.xlu0 %v2362, 80
        %v2842 = vpop.permute.xlu0 %2841
        %2843 = vrot.lane.b32.xlu0 %v2365, 80
        %v2844 = vpop.permute.xlu0 %2843
        %2845 = vrot.lane.b32.xlu0 %v2367, 80
        %v2846 = vpop.permute.xlu0 %2845
        %2847 = vrot.lane.b32.xlu0 %v2370, 80
        %v2848 = vpop.permute.xlu0 %2847
        %2849 = vrot.lane.b32.xlu0 %v2372, 80
        %v2850 = vpop.permute.xlu0 %2849
        %2851 = vrot.lane.b32.xlu0 %v2375, 80
        %v2852 = vpop.permute.xlu0 %2851
        %2853 = vrot.lane.b32.xlu0 %v2377, 80
        %v2854 = vpop.permute.xlu0 %2853
        %2855 = vrot.lane.b32.xlu0 %v2380, 80
        %v2856 = vpop.permute.xlu0 %2855
        %2857 = vrot.lane.b32.xlu0 %v2382, 80
        %v2858 = vpop.permute.xlu0 %2857
        %2859 = vrot.lane.b32.xlu0 %v2385, 80
        %v2860 = vpop.permute.xlu0 %2859
        %2861 = vrot.lane.b32.xlu0 %v2387, 80
        %v2862 = vpop.permute.xlu0 %2861
        %2863 = vrot.lane.b32.xlu0 %v2390, 80
        %v2864 = vpop.permute.xlu0 %2863
        %2865 = vrot.lane.b32.xlu0 %v2392, 80
        %v2866 = vpop.permute.xlu0 %2865
        %2867 = vrot.lane.b32.xlu0 %v2395, 80
        %v2868 = vpop.permute.xlu0 %2867
        %2869 = vrot.lane.b32.xlu0 %v2397, 80
        %v2870 = vpop.permute.xlu0 %2869
        %2871 = vrot.lane.b32.xlu0 %v2400, 80
        %v2872 = vpop.permute.xlu0 %2871
        %2873 = vrot.lane.b32.xlu0 %v2402, 80
        %v2874 = vpop.permute.xlu0 %2873
        %2875 = vrot.lane.b32.xlu0 %v2405, 80
        %v2876 = vpop.permute.xlu0 %2875
        %2877 = vrot.lane.b32.xlu0 %v2407, 80
        %v2878 = vpop.permute.xlu0 %2877
        %2879 = vrot.lane.b32.xlu0 %v2410, 80
        %v2880 = vpop.permute.xlu0 %2879
        %2881 = vrot.lane.b32.xlu0 %v2412, 80
        %v2882 = vpop.permute.xlu0 %2881
        %2883 = vrot.lane.b32.xlu0 %v2423, 80
        %v2884 = vpop.permute.xlu0 %2883
        %2885 = vrot.lane.b32.xlu0 %v2425, 80
        %v2886 = vpop.permute.xlu0 %2885
        %2919 = vrot.lane.b32.xlu0 %v2157, 96
        %v2920 = vpop.permute.xlu0 %2919
        %2921 = vrot.lane.b32.xlu0 %v2158, 96
        %v2922 = vpop.permute.xlu0 %2921
        %2923 = vrot.lane.b32.xlu0 %v2160, 96
        %v2924 = vpop.permute.xlu0 %2923
        %2925 = vrot.lane.b32.xlu0 %v2161, 96
        %v2926 = vpop.permute.xlu0 %2925
        %2927 = vrot.lane.b32.xlu0 %v2163, 96
        %v2928 = vpop.permute.xlu0 %2927
        %2929 = vrot.lane.b32.xlu0 %v2164, 96
        %v2930 = vpop.permute.xlu0 %2929
        %2931 = vrot.lane.b32.xlu0 %v2166, 96
        %v2932 = vpop.permute.xlu0 %2931
        %2933 = vrot.lane.b32.xlu0 %v2167, 96
        %v2934 = vpop.permute.xlu0 %2933
        %2935 = vrot.lane.b32.xlu0 %v2169, 96
        %v2936 = vpop.permute.xlu0 %2935
        %2937 = vrot.lane.b32.xlu0 %v2170, 96
        %v2938 = vpop.permute.xlu0 %2937
        %2939 = vrot.lane.b32.xlu0 %v2172, 96
        %v2940 = vpop.permute.xlu0 %2939
        %2941 = vrot.lane.b32.xlu0 %v2173, 96
        %v2942 = vpop.permute.xlu0 %2941
        %2943 = vrot.lane.b32.xlu0 %v2175, 96
        %v2944 = vpop.permute.xlu0 %2943
        %2945 = vrot.lane.b32.xlu0 %v2176, 96
        %v2946 = vpop.permute.xlu0 %2945
        %2947 = vrot.lane.b32.xlu0 %v2178, 96
        %v2948 = vpop.permute.xlu0 %2947
        %2949 = vrot.lane.b32.xlu0 %v2179, 96
        %v2950 = vpop.permute.xlu0 %2949
        %2951 = vrot.lane.b32.xlu0 %v2181, 96
        %v2952 = vpop.permute.xlu0 %2951
        %2953 = vrot.lane.b32.xlu0 %v2182, 96
        %v2954 = vpop.permute.xlu0 %2953
        %2955 = vrot.lane.b32.xlu0 %v2184, 96
        %v2956 = vpop.permute.xlu0 %2955
        %2957 = vrot.lane.b32.xlu0 %v2185, 96
        %v2958 = vpop.permute.xlu0 %2957
        %2959 = vrot.lane.b32.xlu0 %v2187, 96
        %v2960 = vpop.permute.xlu0 %2959
        %2961 = vrot.lane.b32.xlu0 %v2188, 96
        %v2962 = vpop.permute.xlu0 %2961
        %2963 = vrot.lane.b32.xlu0 %v2190, 96
        %v2964 = vpop.permute.xlu0 %2963
        %2965 = vrot.lane.b32.xlu0 %v2191, 96
        %v2966 = vpop.permute.xlu0 %2965
        %2967 = vrot.lane.b32.xlu0 %v2193, 96
        %v2968 = vpop.permute.xlu0 %2967
        %2969 = vrot.lane.b32.xlu0 %v2194, 96
        %v2970 = vpop.permute.xlu0 %2969
        %2971 = vrot.lane.b32.xlu0 %v2196, 96
        %v2972 = vpop.permute.xlu0 %2971
        %2973 = vrot.lane.b32.xlu0 %v2197, 96
        %v2974 = vpop.permute.xlu0 %2973
        %2975 = vrot.lane.b32.xlu0 %v2199, 96
        %v2976 = vpop.permute.xlu0 %2975
        %2977 = vrot.lane.b32.xlu0 %v2200, 96
        %v2978 = vpop.permute.xlu0 %2977
        %2979 = vrot.lane.b32.xlu0 %v2202, 96
        %v2980 = vpop.permute.xlu0 %2979
        %2981 = vrot.lane.b32.xlu0 %v2203, 96
        %v2982 = vpop.permute.xlu0 %2981
        %3015 = vrot.lane.b32.xlu0 %v2265, 112
        %v3016 = vpop.permute.xlu0 %3015
        %3017 = vrot.lane.b32.xlu0 %v2267, 112
        %v3018 = vpop.permute.xlu0 %3017
        %3019 = vrot.lane.b32.xlu0 %v2270, 112
        %v3020 = vpop.permute.xlu0 %3019
        %3021 = vrot.lane.b32.xlu0 %v2272, 112
        %v3022 = vpop.permute.xlu0 %3021
        %3023 = vrot.lane.b32.xlu0 %v2275, 112
        %v3024 = vpop.permute.xlu0 %3023
        %3025 = vrot.lane.b32.xlu0 %v2277, 112
        %v3026 = vpop.permute.xlu0 %3025
        %3027 = vrot.lane.b32.xlu0 %v2280, 112
        %v3028 = vpop.permute.xlu0 %3027
        %3029 = vrot.lane.b32.xlu0 %v2282, 112
        %v3030 = vpop.permute.xlu0 %3029
        %3031 = vrot.lane.b32.xlu0 %v2285, 112
        %v3032 = vpop.permute.xlu0 %3031
        %3033 = vrot.lane.b32.xlu0 %v2287, 112
        %v3034 = vpop.permute.xlu0 %3033
        %3035 = vrot.lane.b32.xlu0 %v2290, 112
        %v3036 = vpop.permute.xlu0 %3035
        %3037 = vrot.lane.b32.xlu0 %v2292, 112
        %v3038 = vpop.permute.xlu0 %3037
        %3039 = vrot.lane.b32.xlu0 %v2295, 112
        %v3040 = vpop.permute.xlu0 %3039
        %3041 = vrot.lane.b32.xlu0 %v2297, 112
        %v3042 = vpop.permute.xlu0 %3041
        %3043 = vrot.lane.b32.xlu0 %v2300, 112
        %v3044 = vpop.permute.xlu0 %3043
        %3045 = vrot.lane.b32.xlu0 %v2302, 112
        %v3046 = vpop.permute.xlu0 %3045
        %3047 = vrot.lane.b32.xlu0 %v2305, 112
        %v3048 = vpop.permute.xlu0 %3047
        %3049 = vrot.lane.b32.xlu0 %v2307, 112
        %v3050 = vpop.permute.xlu0 %3049
        %3051 = vrot.lane.b32.xlu0 %v2310, 112
        %v3052 = vpop.permute.xlu0 %3051
        %3053 = vrot.lane.b32.xlu0 %v2312, 112
        %v3054 = vpop.permute.xlu0 %3053
        %3055 = vrot.lane.b32.xlu0 %v2315, 112
        %v3056 = vpop.permute.xlu0 %3055
        %3057 = vrot.lane.b32.xlu0 %v2317, 112
        %v3058 = vpop.permute.xlu0 %3057
        %3059 = vrot.lane.b32.xlu0 %v2320, 112
        %v3060 = vpop.permute.xlu0 %3059
        %3061 = vrot.lane.b32.xlu0 %v2322, 112
        %v3062 = vpop.permute.xlu0 %3061
        %3063 = vrot.lane.b32.xlu0 %v2325, 112
        %v3064 = vpop.permute.xlu0 %3063
        %3065 = vrot.lane.b32.xlu0 %v2327, 112
        %v3066 = vpop.permute.xlu0 %3065
        %3067 = vrot.lane.b32.xlu0 %v2330, 112
        %v3068 = vpop.permute.xlu0 %3067
        %3069 = vrot.lane.b32.xlu0 %v2332, 112
        %v3070 = vpop.permute.xlu0 %3069
        %3071 = vrot.lane.b32.xlu0 %v2418, 112
        %v3072 = vpop.permute.xlu0 %3071
        %3073 = vrot.lane.b32.xlu0 %v2420, 112
        %v3074 = vpop.permute.xlu0 %3073
        %3075 = vrot.lane.b32.xlu0 %v2431, 112
        %v3076 = vpop.permute.xlu0 %3075
        %3077 = vrot.lane.b32.xlu0 %v2433, 112
        %v3078 = vpop.permute.xlu0 %3077
        %v3111 = vsel %vm1528, %v2151, %v2440
        %v3112 = vsel %vm1528, %v2152, %v2442
        %v3113 = vsel %vm1528, %v2154, %v2444
        %v3114 = vsel %vm1528, %v2155, %v2446
        %v3115 = vsel %vm1528, %v2157, %v2448
        %v3116 = vsel %vm1528, %v2158, %v2450
        %v3117 = vsel %vm1528, %v2160, %v2452
        %v3118 = vsel %vm1528, %v2161, %v2454
        %v3119 = vsel %vm1528, %v2163, %v2456
        %v3120 = vsel %vm1528, %v2164, %v2458
        %v3121 = vsel %vm1528, %v2166, %v2460
        %v3122 = vsel %vm1528, %v2167, %v2462
        %v3123 = vsel %vm1528, %v2169, %v2464
        %v3124 = vsel %vm1528, %v2170, %v2466
        %v3125 = vsel %vm1528, %v2172, %v2468
        %v3126 = vsel %vm1528, %v2173, %v2470
        %v3127 = vsel %vm1528, %v2175, %v2472
        %v3128 = vsel %vm1528, %v2176, %v2474
        %v3129 = vsel %vm1528, %v2178, %v2476
        %v3130 = vsel %vm1528, %v2179, %v2478
        %v3131 = vsel %vm1528, %v2181, %v2480
        %v3132 = vsel %vm1528, %v2182, %v2482
        %v3133 = vsel %vm1528, %v2184, %v2484
        %v3134 = vsel %vm1528, %v2185, %v2486
        %v3135 = vsel %vm1528, %v2187, %v2488
        %v3136 = vsel %vm1528, %v2188, %v2490
        %v3137 = vsel %vm1528, %v2190, %v2492
        %v3138 = vsel %vm1528, %v2191, %v2494
        %v3139 = vsel %vm1528, %v2193, %v2496
        %v3140 = vsel %vm1528, %v2194, %v2498
        %v3141 = vsel %vm1528, %v2196, %v2500
        %v3142 = vsel %vm1528, %v2197, %v2502
        %v3143 = vsel %vm1660, %v3111, %v2536
        %v3144 = vsel %vm1660, %v3112, %v2538
        %v3145 = vsel %vm1660, %v3113, %v2540
        %v3146 = vsel %vm1660, %v3114, %v2542
        %v3147 = vsel %vm1660, %v3115, %v2544
        %v3148 = vsel %vm1660, %v3116, %v2546
        %v3149 = vsel %vm1660, %v3117, %v2548
        %v3150 = vsel %vm1660, %v3118, %v2550
        %v3151 = vsel %vm1660, %v3119, %v2552
        %v3152 = vsel %vm1660, %v3120, %v2554
        %v3153 = vsel %vm1660, %v3121, %v2556
        %v3154 = vsel %vm1660, %v3122, %v2558
        %v3155 = vsel %vm1660, %v3123, %v2560
        %v3156 = vsel %vm1660, %v3124, %v2562
        %v3157 = vsel %vm1660, %v3125, %v2564
        %v3158 = vsel %vm1660, %v3126, %v2566
        %v3159 = vsel %vm1660, %v3127, %v2568
        %v3160 = vsel %vm1660, %v3128, %v2570
        %v3161 = vsel %vm1660, %v3129, %v2572
        %v3162 = vsel %vm1660, %v3130, %v2574
        %v3163 = vsel %vm1660, %v3131, %v2576
        %v3164 = vsel %vm1660, %v3132, %v2578
        %v3165 = vsel %vm1660, %v3133, %v2580
        %v3166 = vsel %vm1660, %v3134, %v2582
        %v3167 = vsel %vm1660, %v3135, %v2584
        %v3168 = vsel %vm1660, %v3136, %v2586
        %v3169 = vsel %vm1660, %v3137, %v2588
        %v3170 = vsel %vm1660, %v3138, %v2590
        %v3171 = vsel %vm1660, %v3139, %v2592
        %v3172 = vsel %vm1660, %v3140, %v2594
        %v3173 = vsel %vm1660, %v3141, %v2596
        %v3174 = vsel %vm1660, %v3142, %v2598
        %vm3175 = vcmask 392192
        %v3176 = vsel %vm3175, %v3143, %v2632
        %v3177 = vsel %vm3175, %v3144, %v2634
        %v3178 = vsel %vm3175, %v3145, %v2636
        %v3179 = vsel %vm3175, %v3146, %v2638
        %v3180 = vsel %vm3175, %v3147, %v2640
        %v3181 = vsel %vm3175, %v3148, %v2642
        %v3182 = vsel %vm3175, %v3149, %v2644
        %v3183 = vsel %vm3175, %v3150, %v2646
        %v3184 = vsel %vm3175, %v3151, %v2648
        %v3185 = vsel %vm3175, %v3152, %v2650
        %v3186 = vsel %vm3175, %v3153, %v2652
        %v3187 = vsel %vm3175, %v3154, %v2654
        %v3188 = vsel %vm3175, %v3155, %v2656
        %v3189 = vsel %vm3175, %v3156, %v2658
        %v3190 = vsel %vm3175, %v3157, %v2660
        %v3191 = vsel %vm3175, %v3158, %v2662
        %v3192 = vsel %vm3175, %v3159, %v2664
        %v3193 = vsel %vm3175, %v3160, %v2666
        %v3194 = vsel %vm3175, %v3161, %v2668
        %v3195 = vsel %vm3175, %v3162, %v2670
        %v3196 = vsel %vm3175, %v3163, %v2672
        %v3197 = vsel %vm3175, %v3164, %v2674
        %v3198 = vsel %vm3175, %v3165, %v2676
        %v3199 = vsel %vm3175, %v3166, %v2678
        %v3200 = vsel %vm3175, %v3167, %v2680
        %v3201 = vsel %vm3175, %v3168, %v2682
        %v3202 = vsel %vm3175, %v3169, %v2684
        %v3203 = vsel %vm3175, %v3170, %v2686
        %v3204 = vsel %vm3175, %v3171, %v2688
        %v3205 = vsel %vm3175, %v3172, %v2690
        %v3206 = vsel %vm3175, %v3173, %v2692
        %v3207 = vsel %vm3175, %v3174, %v2694
        %vm3208 = vcmask 523264
        %v3209 = vsel %vm3208, %v3176, %v2728
        %v3210 = vsel %vm3208, %v3177, %v2730
        %v3211 = vsel %vm3208, %v3178, %v2732
        %v3212 = vsel %vm3208, %v3179, %v2734
        %v3213 = vsel %vm3208, %v3180, %v2736
        %v3214 = vsel %vm3208, %v3181, %v2738
        %v3215 = vsel %vm3208, %v3182, %v2740
        %v3216 = vsel %vm3208, %v3183, %v2742
        %v3217 = vsel %vm3208, %v3184, %v2744
        %v3218 = vsel %vm3208, %v3185, %v2746
        %v3219 = vsel %vm3208, %v3186, %v2748
        %v3220 = vsel %vm3208, %v3187, %v2750
        %v3221 = vsel %vm3208, %v3188, %v2752
        %v3222 = vsel %vm3208, %v3189, %v2754
        %v3223 = vsel %vm3208, %v3190, %v2756
        %v3224 = vsel %vm3208, %v3191, %v2758
        %v3225 = vsel %vm3208, %v3192, %v2760
        %v3226 = vsel %vm3208, %v3193, %v2762
        %v3227 = vsel %vm3208, %v3194, %v2764
        %v3228 = vsel %vm3208, %v3195, %v2766
        %v3229 = vsel %vm3208, %v3196, %v2768
        %v3230 = vsel %vm3208, %v3197, %v2770
        %v3231 = vsel %vm3208, %v3198, %v2772
        %v3232 = vsel %vm3208, %v3199, %v2774
        %v3233 = vsel %vm3208, %v3200, %v2776
        %v3234 = vsel %vm3208, %v3201, %v2778
        %v3235 = vsel %vm3208, %v3202, %v2780
        %v3236 = vsel %vm3208, %v3203, %v2782
        %v3237 = vsel %vm3208, %v3204, %v2784
        %v3238 = vsel %vm3208, %v3205, %v2786
        %v3239 = vsel %vm3208, %v3206, %v2788
        %v3240 = vsel %vm3208, %v3207, %v2790
        %vm3241 = vcmask 654336
        %v3242 = vsel %vm3241, %v3209, %v2824
        %v3243 = vsel %vm3241, %v3210, %v2826
        %v3244 = vsel %vm3241, %v3211, %v2828
        %v3245 = vsel %vm3241, %v3212, %v2830
        %v3246 = vsel %vm3241, %v3213, %v2832
        %v3247 = vsel %vm3241, %v3214, %v2834
        %v3248 = vsel %vm3241, %v3215, %v2836
        %v3249 = vsel %vm3241, %v3216, %v2838
        %v3250 = vsel %vm3241, %v3217, %v2840
        %v3251 = vsel %vm3241, %v3218, %v2842
        %v3252 = vsel %vm3241, %v3219, %v2844
        %v3253 = vsel %vm3241, %v3220, %v2846
        %v3254 = vsel %vm3241, %v3221, %v2848
        %v3255 = vsel %vm3241, %v3222, %v2850
        %v3256 = vsel %vm3241, %v3223, %v2852
        %v3257 = vsel %vm3241, %v3224, %v2854
        %v3258 = vsel %vm3241, %v3225, %v2856
        %v3259 = vsel %vm3241, %v3226, %v2858
        %v3260 = vsel %vm3241, %v3227, %v2860
        %v3261 = vsel %vm3241, %v3228, %v2862
        %v3262 = vsel %vm3241, %v3229, %v2864
        %v3263 = vsel %vm3241, %v3230, %v2866
        %v3264 = vsel %vm3241, %v3231, %v2868
        %v3265 = vsel %vm3241, %v3232, %v2870
        %v3266 = vsel %vm3241, %v3233, %v2872
        %v3267 = vsel %vm3241, %v3234, %v2874
        %v3268 = vsel %vm3241, %v3235, %v2876
        %v3269 = vsel %vm3241, %v3236, %v2878
        %v3270 = vsel %vm3241, %v3237, %v2880
        %v3271 = vsel %vm3241, %v3238, %v2882
        %v3272 = vsel %vm3241, %v3239, %v2884
        %v3273 = vsel %vm3241, %v3240, %v2886
        %vm3274 = vcmask 785408
        %v3275 = vsel %vm3274, %v3242, %v2920
        %v3276 = vsel %vm3274, %v3243, %v2922
        %v3277 = vsel %vm3274, %v3244, %v2924
        %v3278 = vsel %vm3274, %v3245, %v2926
        %v3279 = vsel %vm3274, %v3246, %v2928
        %v3280 = vsel %vm3274, %v3247, %v2930
        %v3281 = vsel %vm3274, %v3248, %v2932
        %v3282 = vsel %vm3274, %v3249, %v2934
        %v3283 = vsel %vm3274, %v3250, %v2936
        %v3284 = vsel %vm3274, %v3251, %v2938
        %v3285 = vsel %vm3274, %v3252, %v2940
        %v3286 = vsel %vm3274, %v3253, %v2942
        %v3287 = vsel %vm3274, %v3254, %v2944
        %v3288 = vsel %vm3274, %v3255, %v2946
        %v3289 = vsel %vm3274, %v3256, %v2948
        %v3290 = vsel %vm3274, %v3257, %v2950
        %v3291 = vsel %vm3274, %v3258, %v2952
        %v3292 = vsel %vm3274, %v3259, %v2954
        %v3293 = vsel %vm3274, %v3260, %v2956
        %v3294 = vsel %vm3274, %v3261, %v2958
        %v3295 = vsel %vm3274, %v3262, %v2960
        %v3296 = vsel %vm3274, %v3263, %v2962
        %v3297 = vsel %vm3274, %v3264, %v2964
        %v3298 = vsel %vm3274, %v3265, %v2966
        %v3299 = vsel %vm3274, %v3266, %v2968
        %v3300 = vsel %vm3274, %v3267, %v2970
        %v3301 = vsel %vm3274, %v3268, %v2972
        %v3302 = vsel %vm3274, %v3269, %v2974
        %v3303 = vsel %vm3274, %v3270, %v2976
        %v3304 = vsel %vm3274, %v3271, %v2978
        %v3305 = vsel %vm3274, %v3272, %v2980
        %v3306 = vsel %vm3274, %v3273, %v2982
        %vm3307 = vcmask 916480
        %v3308 = vsel %vm3307, %v3275, %v3016
        %v3309 = vsel %vm3307, %v3276, %v3018
        %v3310 = vsel %vm3307, %v3277, %v3020
        %v3311 = vsel %vm3307, %v3278, %v3022
        %v3312 = vsel %vm3307, %v3279, %v3024
        %v3313 = vsel %vm3307, %v3280, %v3026
        %v3314 = vsel %vm3307, %v3281, %v3028
        %v3315 = vsel %vm3307, %v3282, %v3030
        %v3316 = vsel %vm3307, %v3283, %v3032
        %v3317 = vsel %vm3307, %v3284, %v3034
        %v3318 = vsel %vm3307, %v3285, %v3036
        %v3319 = vsel %vm3307, %v3286, %v3038
        %v3320 = vsel %vm3307, %v3287, %v3040
        %v3321 = vsel %vm3307, %v3288, %v3042
        %v3322 = vsel %vm3307, %v3289, %v3044
        %v3323 = vsel %vm3307, %v3290, %v3046
        %v3324 = vsel %vm3307, %v3291, %v3048
        %v3325 = vsel %vm3307, %v3292, %v3050
        %v3326 = vsel %vm3307, %v3293, %v3052
        %v3327 = vsel %vm3307, %v3294, %v3054
        %v3328 = vsel %vm3307, %v3295, %v3056
        %v3329 = vsel %vm3307, %v3296, %v3058
        %v3330 = vsel %vm3307, %v3297, %v3060
        %v3331 = vsel %vm3307, %v3298, %v3062
        %v3332 = vsel %vm3307, %v3299, %v3064
        %v3333 = vsel %vm3307, %v3300, %v3066
        %v3334 = vsel %vm3307, %v3301, %v3068
        %v3335 = vsel %vm3307, %v3302, %v3070
        %v3336 = vsel %vm3307, %v3303, %v3072
        %v3337 = vsel %vm3307, %v3304, %v3074
        %v3338 = vsel %vm3307, %v3305, %v3076
        %v3339 = vsel %vm3307, %v3306, %v3078
        %v3340 = vld [vmem:[%s3] sm:$0xff]
        %v3341 = vld [vmem:[%s3 + $0x8] sm:$0xff]
        %v3342 = vld [vmem:[%s3 + $0x10] sm:$0xff]
        %v3343 = vld [vmem:[%s3 + $0x18] sm:$0xff]
        %v3344 = vld [vmem:[%s3 + $0x20] sm:$0xff]
        %v3345 = vld [vmem:[%s3 + $0x28] sm:$0xff]
        %v3346 = vld [vmem:[%s3 + $0x30] sm:$0xff]
        %v3347 = vld [vmem:[%s3 + $0x38] sm:$0xff]
        %v3348 = vld [vmem:[%s3 + $0x40] sm:$0xff]
        %v3349 = vld [vmem:[%s3 + $0x48] sm:$0xff]
        %v3350 = vld [vmem:[%s3 + $0x50] sm:$0xff]
        %v3351 = vld [vmem:[%s3 + $0x58] sm:$0xff]
        %v3352 = vld [vmem:[%s3 + $0x60] sm:$0xff]
        %v3353 = vld [vmem:[%s3 + $0x68] sm:$0xff]
        %v3354 = vld [vmem:[%s3 + $0x70] sm:$0xff]
        %v3355 = vld [vmem:[%s3 + $0x78] sm:$0xff]
        %v3356 = vld [vmem:[%s3 + $0x80] sm:$0xff]
        %v3357 = vld [vmem:[%s3 + $0x88] sm:$0xff]
        %v3358 = vld [vmem:[#allocation6] sm:$0x1]
        %v3360 = vlaneseq
        %v3361 = vshrl.u32 %v3360, 7
        %v3362 = vsub.s32 0, %v3361
        %v3363 = vrot.slane %v3358, %v3362
        %v3365 = vsel %vm1528, %v2345, 0
        %v3367 = vsel %vm1528, %v2347, 0
        %v3369 = vsel %vm1528, %v2350, 0
        %v3371 = vsel %vm1528, %v2352, 0
        %v3373 = vsel %vm1528, %v2355, 0
        %v3375 = vsel %vm1528, %v2357, 0
        %v3377 = vsel %vm1528, %v2360, 0
        %v3379 = vsel %vm1528, %v2362, 0
        %v3381 = vsel %vm1528, %v2365, 0
        %v3383 = vsel %vm1528, %v2367, 0
        %v3385 = vsel %vm1528, %v2370, 0
        %v3387 = vsel %vm1528, %v2372, 0
        %v3389 = vsel %vm1528, %v2375, 0
        %v3391 = vsel %vm1528, %v2377, 0
        %v3393 = vsel %vm1528, %v2380, 0
        %v3395 = vsel %vm1528, %v2382, 0
        %v3397 = vsel %vm1528, %v2385, 0
        %v3399 = vsel %vm1528, %v2387, 0
        %v3401 = vsel %vm1528, %v2390, 0
        %v3403 = vsel %vm1528, %v2392, 0
        %v3405 = vsel %vm1528, %v2395, 0
        %v3407 = vsel %vm1528, %v2397, 0
        %v3409 = vsel %vm1528, %v2400, 0
        %v3411 = vsel %vm1528, %v2402, 0
        %v3413 = vsel %vm1528, %v2405, 0
        %v3415 = vsel %vm1528, %v2407, 0
        %v3417 = vsel %vm1528, %v2410, 0
        %v3419 = vsel %vm1528, %v2412, 0
        %v3421 = vsel %vm1528, %v2423, 0
        %v3423 = vsel %vm1528, %v2425, 0
        %v3425 = vsel %vm1528, %v2436, 0
        %v3427 = vsel %vm1528, %v2438, 0
        %3429 = vmatprep.subr.mxu0 0.0
        %3430 = vmatpush1.msra.mxu0 %v3340
        %3431 = vmatprep.subr.mxu0 0.0
        %3432 = vmatpush1.msra.mxu0 %v3341
        %3433 = vmatprep.subr.mxu0 0.0
        %3434 = vmatpush1.msra.mxu0 %v3342
        %3435 = vmatprep.subr.mxu0 0.0
        %3436 = vmatpush1.msra.mxu0 %v3343
        %3437 = vmatprep.subr.mxu0 0.0
        %3438 = vmatpush1.msra.mxu0 %v3344
        %3439 = vmatprep.subr.mxu0 0.0
        %3440 = vmatpush1.msra.mxu0 %v3345
        %3441 = vmatprep.subr.mxu0 0.0
        %3442 = vmatpush1.msra.mxu0 %v3346
        %3443 = vmatprep.subr.mxu0 0.0
        %3444 = vmatpush1.msra.mxu0 %v3347
        %3445 = vmatprep.subr.mxu0 0.0
        %3446 = vmatpush1.msra.mxu0 %v3348
        %3447 = vmatprep.subr.mxu0 0.0
        %3448 = vmatpush1.msra.mxu0 %v3349
        %3449 = vmatprep.subr.mxu0 0.0
        %3450 = vmatpush1.msra.mxu0 %v3350
        %3451 = vmatprep.subr.mxu0 0.0
        %3452 = vmatpush1.msra.mxu0 %v3351
        %3453 = vmatprep.subr.mxu0 0.0
        %3454 = vmatpush1.msra.mxu0 %v3352
        %3455 = vmatprep.subr.mxu0 0.0
        %3456 = vmatpush1.msra.mxu0 %v3353
        %3457 = vmatprep.subr.mxu0 0.0
        %3458 = vmatpush1.msra.mxu0 %v3354
        %3459 = vmatprep.subr.mxu0 0.0
        %3460 = vmatpush1.msra.mxu0 %v3355
        %3461 = vmatprep.subr.mxu0 0.0
        %3462 = vmatpush1.msra.mxu0 %v3356
        %3463 = vmatprep.subr.mxu0 0.0
        %3464 = vmatpush1.msra.mxu0 %v3357
        %3465 = vmatprep.subr.mxu0 0.0
        %3466 = vmatpush1.msra.mxu0 0.0
        %3467 = vmatprep.subr.mxu0 0.0
        %3468 = vmatpush1.msra.mxu0 0.0
        %3469 = vmatprep.subr.mxu0 0.0
        %3470 = vmatpush1.msra.mxu0 0.0
        %3471 = vmatprep.subr.mxu0 0.0
        %3472 = vmatpush1.msra.mxu0 0.0
        %3473 = vmatprep.subr.mxu0 0.0
        %3474 = vmatpush1.msra.mxu0 0.0
        %3475 = vmatprep.subr.mxu0 0.0
        %3476 = vmatpush1.msra.mxu0 0.0
        %3477 = vmatprep.subr.mxu0 0.0
        %3478 = vmatpush1.msra.mxu0 0.0
        %3479 = vmatprep.subr.mxu0 0.0
        %3480 = vmatpush1.msra.mxu0 0.0
        %3481 = vmatprep.subr.mxu0 0.0
        %3482 = vmatpush1.msra.mxu0 0.0
        %3483 = vmatprep.subr.mxu0 0.0
        %3484 = vmatpush1.msra.mxu0 0.0
        %3485 = vmatprep.subr.mxu0 0.0
        %3486 = vmatpush1.msra.mxu0 0.0
        %3487 = vmatprep.subr.mxu0 0.0
        %3488 = vmatpush1.msra.mxu0 0.0
        %3489 = vmatprep.subr.mxu0 0.0
        %3490 = vmatpush1.msra.mxu0 0.0
        %3491 = vmatprep.subr.mxu0 0.0
        %3492 = vmatpush1.msra.mxu0 0.0
        %3493 = vmatprep.mubr.f32.mxu0 %v3365
        %3494 = vmatmul.mubr.f32.gmra.mrb[0].mxu0 %v3308
        %v3495 = vpop.f32.mrb[0].mxu0
        %v3496 = vadd.f32 %v3363, %v3495
        %v3497 = vpop.f32.mrb[0].mxu0
        %3498 = vmatprep.mubr.f32.mxu0 %v3367
        %3499 = vmatmul.mubr.f32.gmra.mrb[0].mxu0 %v3309
        %v3500 = vpop.f32.mrb[0].mxu0
        %v3501 = vadd.f32 %v3363, %v3500
        %v3502 = vpop.f32.mrb[0].mxu0
        %3503 = vmatprep.mubr.f32.mxu0 %v3369
        %3504 = vmatmul.mubr.f32.gmra.mrb[0].mxu0 %v3310
        %v3505 = vpop.f32.mrb[0].mxu0
        %v3506 = vadd.f32 %v3363, %v3505
        %v3507 = vpop.f32.mrb[0].mxu0
        %3508 = vmatprep.mubr.f32.mxu0 %v3371
        %3509 = vmatmul.mubr.f32.gmra.mrb[0].mxu0 %v3311
        %v3510 = vpop.f32.mrb[0].mxu0
        %v3511 = vadd.f32 %v3363, %v3510
        %v3512 = vpop.f32.mrb[0].mxu0
        %3513 = vmatprep.mubr.f32.mxu0 %v3373
        %3514 = vmatmul.mubr.f32.gmra.mrb[0].mxu0 %v3312
        %v3515 = vpop.f32.mrb[0].mxu0
        %v3516 = vadd.f32 %v3363, %v3515
        %v3517 = vpop.f32.mrb[0].mxu0
        %3518 = vmatprep.mubr.f32.mxu0 %v3375
        %3519 = vmatmul.mubr.f32.gmra.mrb[0].mxu0 %v3313
        %v3520 = vpop.f32.mrb[0].mxu0
        %v3521 = vadd.f32 %v3363, %v3520
        %v3522 = vpop.f32.mrb[0].mxu0
        %3523 = vmatprep.mubr.f32.mxu0 %v3377
        %3524 = vmatmul.mubr.f32.gmra.mrb[0].mxu0 %v3314
        %v3525 = vpop.f32.mrb[0].mxu0
        %v3526 = vadd.f32 %v3363, %v3525
        %v3527 = vpop.f32.mrb[0].mxu0
        %3528 = vmatprep.mubr.f32.mxu0 %v3379
        %3529 = vmatmul.mubr.f32.gmra.mrb[0].mxu0 %v3315
        %v3530 = vpop.f32.mrb[0].mxu0
        %v3531 = vadd.f32 %v3363, %v3530
        %v3532 = vpop.f32.mrb[0].mxu0
        %3533 = vmatprep.mubr.f32.mxu0 %v3381
        %3534 = vmatmul.mubr.f32.gmra.mrb[0].mxu0 %v3316
        %v3535 = vpop.f32.mrb[0].mxu0
        %v3536 = vadd.f32 %v3363, %v3535
        %v3537 = vpop.f32.mrb[0].mxu0
        %3538 = vmatprep.mubr.f32.mxu0 %v3383
        %3539 = vmatmul.mubr.f32.gmra.mrb[0].mxu0 %v3317
        %v3540 = vpop.f32.mrb[0].mxu0
        %v3541 = vadd.f32 %v3363, %v3540
        %v3542 = vpop.f32.mrb[0].mxu0
        %3543 = vmatprep.mubr.f32.mxu0 %v3385
        %3544 = vmatmul.mubr.f32.gmra.mrb[0].mxu0 %v3318
        %v3545 = vpop.f32.mrb[0].mxu0
        %v3546 = vadd.f32 %v3363, %v3545
        %v3547 = vpop.f32.mrb[0].mxu0
        %3548 = vmatprep.mubr.f32.mxu0 %v3387
        %3549 = vmatmul.mubr.f32.gmra.mrb[0].mxu0 %v3319
        %v3550 = vpop.f32.mrb[0].mxu0
        %v3551 = vadd.f32 %v3363, %v3550
        %v3552 = vpop.f32.mrb[0].mxu0
        %3553 = vmatprep.mubr.f32.mxu0 %v3389
        %3554 = vmatmul.mubr.f32.gmra.mrb[0].mxu0 %v3320
        %v3555 = vpop.f32.mrb[0].mxu0
        %v3556 = vadd.f32 %v3363, %v3555
        %v3557 = vpop.f32.mrb[0].mxu0
        %3558 = vmatprep.mubr.f32.mxu0 %v3391
        %3559 = vmatmul.mubr.f32.gmra.mrb[0].mxu0 %v3321
        %v3560 = vpop.f32.mrb[0].mxu0
        %v3561 = vadd.f32 %v3363, %v3560
        %v3562 = vpop.f32.mrb[0].mxu0
        %3563 = vmatprep.mubr.f32.mxu0 %v3393
        %3564 = vmatmul.mubr.f32.gmra.mrb[0].mxu0 %v3322
        %v3565 = vpop.f32.mrb[0].mxu0
        %v3566 = vadd.f32 %v3363, %v3565
        %v3567 = vpop.f32.mrb[0].mxu0
        %3568 = vmatprep.mubr.f32.mxu0 %v3395
        %3569 = vmatmul.mubr.f32.gmra.mrb[0].mxu0 %v3323
        %v3570 = vpop.f32.mrb[0].mxu0
        %v3571 = vadd.f32 %v3363, %v3570
        %v3572 = vpop.f32.mrb[0].mxu0
        %3573 = vmatprep.mubr.f32.mxu0 %v3397
        %3574 = vmatmul.mubr.f32.gmra.mrb[0].mxu0 %v3324
        %v3575 = vpop.f32.mrb[0].mxu0
        %v3576 = vadd.f32 %v3363, %v3575
        %v3577 = vpop.f32.mrb[0].mxu0
        %3578 = vmatprep.mubr.f32.mxu0 %v3399
        %3579 = vmatmul.mubr.f32.gmra.mrb[0].mxu0 %v3325
        %v3580 = vpop.f32.mrb[0].mxu0
        %v3581 = vadd.f32 %v3363, %v3580
        %v3582 = vpop.f32.mrb[0].mxu0
        %3583 = vmatprep.mubr.f32.mxu0 %v3401
        %3584 = vmatmul.mubr.f32.gmra.mrb[0].mxu0 %v3326
        %v3585 = vpop.f32.mrb[0].mxu0
        %v3586 = vadd.f32 %v3363, %v3585
        %v3587 = vpop.f32.mrb[0].mxu0
        %3588 = vmatprep.mubr.f32.mxu0 %v3403
        %3589 = vmatmul.mubr.f32.gmra.mrb[0].mxu0 %v3327
        %v3590 = vpop.f32.mrb[0].mxu0
        %v3591 = vadd.f32 %v3363, %v3590
        %v3592 = vpop.f32.mrb[0].mxu0
        %3593 = vmatprep.mubr.f32.mxu0 %v3405
        %3594 = vmatmul.mubr.f32.gmra.mrb[0].mxu0 %v3328
        %v3595 = vpop.f32.mrb[0].mxu0
        %v3596 = vadd.f32 %v3363, %v3595
        %v3597 = vpop.f32.mrb[0].mxu0
        %3598 = vmatprep.mubr.f32.mxu0 %v3407
        %3599 = vmatmul.mubr.f32.gmra.mrb[0].mxu0 %v3329
        %v3600 = vpop.f32.mrb[0].mxu0
        %v3601 = vadd.f32 %v3363, %v3600
        %v3602 = vpop.f32.mrb[0].mxu0
        %3603 = vmatprep.mubr.f32.mxu0 %v3409
        %3604 = vmatmul.mubr.f32.gmra.mrb[0].mxu0 %v3330
        %v3605 = vpop.f32.mrb[0].mxu0
        %v3606 = vadd.f32 %v3363, %v3605
        %v3607 = vpop.f32.mrb[0].mxu0
        %3608 = vmatprep.mubr.f32.mxu0 %v3411
        %3609 = vmatmul.mubr.f32.gmra.mrb[0].mxu0 %v3331
        %v3610 = vpop.f32.mrb[0].mxu0
        %v3611 = vadd.f32 %v3363, %v3610
        %v3612 = vpop.f32.mrb[0].mxu0
        %3613 = vmatprep.mubr.f32.mxu0 %v3413
        %3614 = vmatmul.mubr.f32.gmra.mrb[0].mxu0 %v3332
        %v3615 = vpop.f32.mrb[0].mxu0
        %v3616 = vadd.f32 %v3363, %v3615
        %v3617 = vpop.f32.mrb[0].mxu0
        %3618 = vmatprep.mubr.f32.mxu0 %v3415
        %3619 = vmatmul.mubr.f32.gmra.mrb[0].mxu0 %v3333
        %v3620 = vpop.f32.mrb[0].mxu0
        %v3621 = vadd.f32 %v3363, %v3620
        %v3622 = vpop.f32.mrb[0].mxu0
        %3623 = vmatprep.mubr.f32.mxu0 %v3417
        %3624 = vmatmul.mubr.f32.gmra.mrb[0].mxu0 %v3334
        %v3625 = vpop.f32.mrb[0].mxu0
        %v3626 = vadd.f32 %v3363, %v3625
        %v3627 = vpop.f32.mrb[0].mxu0
        %3628 = vmatprep.mubr.f32.mxu0 %v3419
        %3629 = vmatmul.mubr.f32.gmra.mrb[0].mxu0 %v3335
        %v3630 = vpop.f32.mrb[0].mxu0
        %v3631 = vadd.f32 %v3363, %v3630
        %v3632 = vpop.f32.mrb[0].mxu0
        %3633 = vmatprep.mubr.f32.mxu0 %v3421
        %3634 = vmatmul.mubr.f32.gmra.mrb[0].mxu0 %v3336
        %v3635 = vpop.f32.mrb[0].mxu0
        %v3636 = vadd.f32 %v3363, %v3635
        %v3637 = vpop.f32.mrb[0].mxu0
        %3638 = vmatprep.mubr.f32.mxu0 %v3423
        %3639 = vmatmul.mubr.f32.gmra.mrb[0].mxu0 %v3337
        %v3640 = vpop.f32.mrb[0].mxu0
        %v3641 = vadd.f32 %v3363, %v3640
        %v3642 = vpop.f32.mrb[0].mxu0
        %3643 = vmatprep.mubr.f32.mxu0 %v3425
        %3644 = vmatmul.mubr.f32.gmra.mrb[0].mxu0 %v3338
        %v3645 = vpop.f32.mrb[0].mxu0
        %v3646 = vadd.f32 %v3363, %v3645
        %v3647 = vpop.f32.mrb[0].mxu0
        %3648 = vmatprep.mubr.f32.mxu0 %v3427
        %3649 = vmatmul.mubr.f32.gmra.mrb[0].mxu0 %v3339
        %v3650 = vpop.f32.mrb[0].mxu0
        %v3651 = vadd.f32 %v3363, %v3650
        %v3652 = vpop.f32.mrb[0].mxu0
        %3653 = vdwg.mxu0
        %v3654 = vmax.f32 %v3496, 0.0
        %v3655 = vmax.f32 %v3501, 0.0
        %v3656 = vmax.f32 %v3506, 0.0
        %v3657 = vmax.f32 %v3511, 0.0
        %v3658 = vmax.f32 %v3516, 0.0
        %v3659 = vmax.f32 %v3521, 0.0
        %v3660 = vmax.f32 %v3526, 0.0
        %v3661 = vmax.f32 %v3531, 0.0
        %v3662 = vmax.f32 %v3536, 0.0
        %v3663 = vmax.f32 %v3541, 0.0
        %v3664 = vmax.f32 %v3546, 0.0
        %v3665 = vmax.f32 %v3551, 0.0
        %v3666 = vmax.f32 %v3556, 0.0
        %v3667 = vmax.f32 %v3561, 0.0
        %v3668 = vmax.f32 %v3566, 0.0
        %v3669 = vmax.f32 %v3571, 0.0
        %v3670 = vmax.f32 %v3576, 0.0
        %v3671 = vmax.f32 %v3581, 0.0
        %v3672 = vmax.f32 %v3586, 0.0
        %v3673 = vmax.f32 %v3591, 0.0
        %v3674 = vmax.f32 %v3596, 0.0
        %v3675 = vmax.f32 %v3601, 0.0
        %v3676 = vmax.f32 %v3606, 0.0
        %v3677 = vmax.f32 %v3611, 0.0
        %v3678 = vmax.f32 %v3616, 0.0
        %v3679 = vmax.f32 %v3621, 0.0
        %v3680 = vmax.f32 %v3626, 0.0
        %v3681 = vmax.f32 %v3631, 0.0
        %v3682 = vmax.f32 %v3636, 0.0
        %v3683 = vmax.f32 %v3641, 0.0
        %v3684 = vmax.f32 %v3646, 0.0
        %v3685 = vmax.f32 %v3651, 0.0
        %3686 = vxpose.xlu0.b32.start [1/16] %v3654, 128
        %3687 = vxpose.xlu0.b32.cont [2/16] %v3655, 128
        %3688 = vxpose.xlu0.b32.cont [3/16] %v3656, 128
        %3689 = vxpose.xlu0.b32.cont [4/16] %v3657, 128
        %3690 = vxpose.xlu0.b32.cont [5/16] %v3658, 128
        %3691 = vxpose.xlu0.b32.cont [6/16] %v3659, 128
        %3692 = vxpose.xlu0.b32.cont [7/16] %v3660, 128
        %3693 = vxpose.xlu0.b32.cont [8/16] %v3661, 128
        %3694 = vxpose.xlu0.b32.cont [9/16] %v3662, 128
        %3695 = vxpose.xlu0.b32.cont [10/16] %v3663, 128
        %3696 = vxpose.xlu0.b32.cont [11/16] %v3664, 128
        %3697 = vxpose.xlu0.b32.cont [12/16] %v3665, 128
        %3698 = vxpose.xlu0.b32.cont [13/16] %v3666, 128
        %3699 = vxpose.xlu0.b32.cont [14/16] %v3667, 128
        %3700 = vxpose.xlu0.b32.cont [15/16] %v3668, 128
        %3701 = vxpose.xlu0.b32.end [16/16] %v3669, 128
        %v3702 = vpop.trf.xlu0
        %v3703 = vpop.trf.xlu0
        %v3704 = vpop.trf.xlu0
        %v3705 = vpop.trf.xlu0
        %v3706 = vpop.trf.xlu0
        %v3707 = vpop.trf.xlu0
        %v3708 = vpop.trf.xlu0
        %v3709 = vpop.trf.xlu0
        %v3710 = vpop.trf.xlu0
        %v3711 = vpop.trf.xlu0
        %v3712 = vpop.trf.xlu0
        %v3713 = vpop.trf.xlu0
        %v3714 = vpop.trf.xlu0
        %v3715 = vpop.trf.xlu0
        %v3716 = vpop.trf.xlu0
        %v3717 = vpop.trf.xlu0
        %3718 = vxpose.xlu0.b32.start [1/16] %v3670, 128
        %3719 = vxpose.xlu0.b32.cont [2/16] %v3671, 128
        %3720 = vxpose.xlu0.b32.cont [3/16] %v3672, 128
        %3721 = vxpose.xlu0.b32.cont [4/16] %v3673, 128
        %3722 = vxpose.xlu0.b32.cont [5/16] %v3674, 128
        %3723 = vxpose.xlu0.b32.cont [6/16] %v3675, 128
        %3724 = vxpose.xlu0.b32.cont [7/16] %v3676, 128
        %3725 = vxpose.xlu0.b32.cont [8/16] %v3677, 128
        %3726 = vxpose.xlu0.b32.cont [9/16] %v3678, 128
        %3727 = vxpose.xlu0.b32.cont [10/16] %v3679, 128
        %3728 = vxpose.xlu0.b32.cont [11/16] %v3680, 128
        %3729 = vxpose.xlu0.b32.cont [12/16] %v3681, 128
        %3730 = vxpose.xlu0.b32.cont [13/16] %v3682, 128
        %3731 = vxpose.xlu0.b32.cont [14/16] %v3683, 128
        %3732 = vxpose.xlu0.b32.cont [15/16] %v3684, 128
        %3733 = vxpose.xlu0.b32.end [16/16] %v3685, 128
        %v3734 = vpop.trf.xlu0
        %v3735 = vpop.trf.xlu0
        %v3736 = vpop.trf.xlu0
        %v3737 = vpop.trf.xlu0
        %v3738 = vpop.trf.xlu0
        %v3739 = vpop.trf.xlu0
        %v3740 = vpop.trf.xlu0
        %v3741 = vpop.trf.xlu0
        %v3742 = vpop.trf.xlu0
        %v3743 = vpop.trf.xlu0
        %v3744 = vpop.trf.xlu0
        %v3745 = vpop.trf.xlu0
        %v3746 = vpop.trf.xlu0
        %v3747 = vpop.trf.xlu0
        %v3748 = vpop.trf.xlu0
        %v3749 = vpop.trf.xlu0
        %v3750 = vpack.c.bf16 %v3703, %v3702
        %v3751 = vpack.c.bf16 %v3735, %v3734
        %v3752 = vpack.c.bf16 %v3705, %v3704
        %v3753 = vpack.c.bf16 %v3737, %v3736
        %v3758 = vunpack.c.l.b16 %v3750
        %v3759 = vunpack.c.l.b16 %v3751
        %v3760 = vunpack.c.h.b16 %v3750
        %v3761 = vunpack.c.h.b16 %v3751
        %v3762 = vunpack.c.l.b16 %v3752
        %v3763 = vunpack.c.l.b16 %v3753
        %v3764 = vunpack.c.h.b16 %v3752
        %v3765 = vunpack.c.h.b16 %v3753
        %v3766 = vpack.c.b16 %v3759, %v3758
        %v3767 = vpack.c.b16 %v3761, %v3760
        %v3768 = vpack.c.b16 %v3763, %v3762
        %v3769 = vpack.c.b16 %v3765, %v3764
        %3774 = vst [vmem:[%s250] sm:$0xff] %v3766
        %3775 = vst [vmem:[%s250 + $0x8] sm:$0xff] %v3767
        %3776 = vst [vmem:[%s250 + $0x10] sm:$0xff] %v3768
        %3777 = vst [vmem:[%s250 + $0x18] sm:$0xff] %v3769
        %p3778 = scmp.lt.s32.totalorder %s18, 1
        %s3779 = scalar_select %p3778, %s18, 1
        %s3780 = smul.addr %s3779, 8
        %s3781 = smul.addr %s3780, 4
        %s3782 = scalar_lea.vmem %s5, %s3781
        // Predicated region
        $region49: #{_forward.2} parent=39 // pred_check
          %p3783 = pneg %p146
        $region50: #{_forward.2} parent=39 // pred_check_branch
          %3785 = sbr.rel (%p3783) target = $region52
        $region51: #{_forward.2} parent=39 // pred_region
          _
        $region52: #{_forward.2} parent=39 // pred_fallthru
          _
      $region40: #{_forward.2} parent=5 // pred_fallthru
        _
      %p3786 = scmp.le.s32.totalorder 2, %s13
      // Predicated region
      $region53: #{_forward.2} parent=5 // pred_check
        %p3787 = pneg %p3786
      $region54: #{_forward.2} parent=5 // pred_check_branch
        %3789 = sbr.rel (%p3787) target = $region56
      $region55: #{_forward.2} parent=5 // pred_region
        %s3790 = ssub.s32 %s13, 2
        // Predicated region
        $region57: #{_forward.2} parent=55 // pred_check
          %p3791 = pneg %p152
        $region58: #{_forward.2} parent=55 // pred_check_branch
          %3793 = sbr.rel (%p3791) target = $region60
        $region59: #{_forward.2} parent=55 // pred_region
          %p3794 = scmp.lt.s32.totalorder %s19, 1
          %s3795 = scalar_select %p3794, %s19, 1
          %s3796 = smul.addr %s3795, 8
          %s3797 = smul.addr %s3796, 4
          %s3798 = scalar_lea.vmem %s5, %s3797
        $region60: #{_forward.2} parent=55 // pred_fallthru
          _
      $region56: #{_forward.2} parent=5 // pred_fallthru
        _
    $region6: #{_forward.2} parent=1 // loop_footer
      %s17 = sadd.s32 1, %s13
    $region7: #{_forward.2} parent=1 // loop_footer_branch
      %12 = sbr.rel target = $region3
    $region8: #{_forward.2} parent=1 // loop_exit
      _
    %3799 = vsyncpa [#allocation5], 1
    %s3800 = scalar_lea.sflag [#allocation5], 1
    %3801 = vsyncpa %s3800, 1
    %3802 = vsyncpa [#allocation7], 1

</llo_original>
